<compile_context>
chip_gen: v7x
topology: tpu7x:2x2x1
jax: 0.10.0
libtpu: 0.0.40
codegen_flags: <defaults>
</compile_context>

<pallas_src>
import jax
import jax.numpy as jnp
from jax import lax
from jax.experimental import pallas as pl
from jax.experimental.pallas import tpu as pltpu


# ------------------------------ Pallas kernel ------------------------------ #
def _generator_kernel(z_ref, w1_ref, sc1_ref, sh1_ref,
                      w2_ref, sc2_ref, sh2_ref,
                      w3_ref, sc3_ref, sh3_ref,
                      w4_ref,
                      o_ref,
                      xp2_ref, xp3_ref, xp4_ref):
    """Full generator for ONE sample (the grid runs over the batch)."""
    f32 = jnp.float32

    # Re-zero the pad rings every step (scratch persists across grid steps and
    # across megacore cores; the interiors are fully overwritten below).
    xp2_ref[...] = jnp.zeros_like(xp2_ref)
    xp3_ref[...] = jnp.zeros_like(xp3_ref)
    xp4_ref[...] = jnp.zeros_like(xp4_ref)

    # --- Layer 1: ConvTranspose2d(nz, C1, 4, 1, 0) on a 1x1 input -----------
    # out[co, ky, kx] = sum_ci z[ci] * w1[ci, co, ky, kx]; rows of w1m are
    # ordered (ky, kx, co) so each (ky, kx) chunk is a (C1, 1) column store
    # into the padded layer-2 input scratch.
    C1 = xp2_ref.shape[1]
    y1 = jnp.dot(w1_ref[...].astype(f32), z_ref[...],
                 preferred_element_type=f32)                    # (16*C1, 1)
    y1 = y1 * sc1_ref[...] + sh1_ref[...]                       # BN (f32)
    y1 = jnp.maximum(y1, 0.2 * y1)                              # LeakyReLU(0.2)
    for ky in range(4):
        for kx in range(4):
            s = (ky * 4 + kx) * C1
            xp2_ref[1 + ky, :, 1 + kx:2 + kx] = y1[s:s + C1, :]

    # --- Generic ConvTranspose2d(C_in, C_out, 4, 2, 1) over a padded scratch
    def deconv_s2(xin_ref, w_ref, emit):
        hp, _, wp = xin_ref.shape
        h, w = hp - 2, wp - 2
        # Even/odd column scatter matrices for the sub-pixel interleave.
        ri = lax.broadcasted_iota(jnp.int32, (w, 2 * w), 0)
        ci = lax.broadcasted_iota(jnp.int32, (w, 2 * w), 1)
        e_even = (ci == 2 * ri).astype(f32)
        e_odd = (ci == 2 * ri + 1).astype(f32)

        def body(m, carry):
            # (9*C_in, w) patch block; shared by both output-row parities
            # (inactive (dy,dx) taps carry zero weights).
            rows9 = jnp.concatenate(
                [xin_ref[m + dy, :, dx:dx + w]
                 for dy in range(3) for dx in range(3)], axis=0)
            for py in range(2):
                ph_even = jnp.dot(w_ref[py, 0].astype(f32), rows9,
                                  preferred_element_type=f32)    # (C_out, w)
                ph_odd = jnp.dot(w_ref[py, 1].astype(f32), rows9,
                                 preferred_element_type=f32)
                row = (jnp.dot(ph_even, e_even, preferred_element_type=f32) +
                       jnp.dot(ph_odd, e_odd, preferred_element_type=f32))
                emit(2 * m + py, row)                            # (C_out, 2w)
            return carry

        lax.fori_loop(0, h, body, 0)

    # --- Layer 2: C1 -> C2, 4x4 -> 8x8 ---------------------------------------
    sc2, sh2 = sc2_ref[...], sh2_ref[...]

    def emit2(r, row):
        y = row * sc2 + sh2
        y = jnp.maximum(y, 0.2 * y)
        xp3_ref[1 + r, :, 1:1 + row.shape[1]] = y

    deconv_s2(xp2_ref, w2_ref, emit2)

    # --- Layer 3: C2 -> C3, 8x8 -> 16x16 -------------------------------------
    sc3, sh3 = sc3_ref[...], sh3_ref[...]

    def emit3(r, row):
        y = row * sc3 + sh3
        y = jnp.maximum(y, 0.2 * y)
        xp4_ref[1 + r, :, 1:1 + row.shape[1]] = y

    deconv_s2(xp3_ref, w3_ref, emit3)

    # --- Layer 4: C3 -> nc, 16x16 -> 32x32, Tanh ------------------------------
    def emit4(r, row):
        o_ref[r, :, :] = jnp.tanh(row)

    deconv_s2(xp4_ref, w4_ref, emit4)


# ------------------------- one-time weight packing ------------------------- #
def _phase_weight(w):
    """ConvTranspose2d(4,2,1) weight (C_in,C_out,4,4) -> (2,2,C_out,9*C_in).

    Output element (2m+py, 2n+px) reads padded-input element (m+dy, n+dx)
    through kernel tap (ky, kx) = (py+3-2dy, px+3-2dx); taps outside [0,4)
    are zero.  Columns are ordered (dy, dx, ci) to match the kernel's patch
    concatenation order."""
    c_in, c_out = w.shape[0], w.shape[1]
    wph = jnp.zeros((2, 2, c_out, 3, 3, c_in), jnp.float32)
    for py in range(2):
        for dy in range(3):
            ky = py + 3 - 2 * dy
            if not 0 <= ky < 4:
                continue
            for px in range(2):
                for dx in range(3):
                    kx = px + 3 - 2 * dx
                    if not 0 <= kx < 4:
                        continue
                    wph = wph.at[py, px, :, dy, dx, :].set(w[:, :, ky, kx].T)
    return wph.reshape(2, 2, c_out, 9 * c_in).astype(jnp.bfloat16)


def fold_bn(gamma, beta, running_mean, running_var, eps=1e-5):
    scale = gamma / jnp.sqrt(running_var + eps)
    shift = beta - running_mean * scale
    return scale, shift


def prepare_generator(p):
    """One-time packing of weights into kernel layout (hoisted out of forward)."""
    nz, c1 = p["w1"].shape[0], p["w1"].shape[1]
    w1m = p["w1"].transpose(2, 3, 1, 0).reshape(16 * c1, nz)   # rows (ky,kx,co)
    return {
        "w1": w1m.astype(jnp.bfloat16),
        "sc1": jnp.tile(p["s1"], 16).reshape(16 * c1, 1).astype(jnp.float32),
        "sh1": jnp.tile(p["sh1"], 16).reshape(16 * c1, 1).astype(jnp.float32),
        "w2": _phase_weight(p["w2"]),
        "sc2": p["s2"].reshape(-1, 1).astype(jnp.float32),
        "sh2": p["sh2"].reshape(-1, 1).astype(jnp.float32),
        "w3": _phase_weight(p["w3"]),
        "sc3": p["s3"].reshape(-1, 1).astype(jnp.float32),
        "sh3": p["sh3"].reshape(-1, 1).astype(jnp.float32),
        "w4": _phase_weight(p["w4"]),
    }


# --------------------------------- forward --------------------------------- #
def generator_forward(z, kp):
    """z: (B, nz, 1, 1) NCHW latent -> (B, nc, 32, 32) image."""
    B, nz = z.shape[0], z.shape[1]
    c1 = kp["sc1"].shape[0] // 16
    c2 = kp["sc2"].shape[0]
    c3 = kp["sc3"].shape[0]
    nc = kp["w4"].shape[2]

    z3 = z.reshape(B, nz, 1).astype(jnp.float32)

    macs = (nz * c1 * 16 + c1 * c2 * 16 * 16 + c2 * c3 * 16 * 64
            + c3 * nc * 16 * 256)
    bytes_accessed = int(
        z3.size * 4
        + (kp["w1"].size + kp["w2"].size + kp["w3"].size + kp["w4"].size) * 2
        + (kp["sc1"].size + kp["sh1"].size + kp["sc2"].size + kp["sh2"].size
           + kp["sc3"].size + kp["sh3"].size) * 4
        + B * nc * 32 * 32 * 4)

    out = pl.pallas_call(
        _generator_kernel,
        out_shape=jax.ShapeDtypeStruct((B, 32, nc, 32), jnp.float32),
        grid=(B,),
        in_specs=[
            pl.BlockSpec((None, nz, 1), lambda b: (b, 0, 0)),          # z
            pl.BlockSpec((16 * c1, nz), lambda b: (0, 0)),             # w1
            pl.BlockSpec((16 * c1, 1), lambda b: (0, 0)),              # sc1
            pl.BlockSpec((16 * c1, 1), lambda b: (0, 0)),              # sh1
            pl.BlockSpec((2, 2, c2, 9 * c1), lambda b: (0, 0, 0, 0)),  # w2
            pl.BlockSpec((c2, 1), lambda b: (0, 0)),                   # sc2
            pl.BlockSpec((c2, 1), lambda b: (0, 0)),                   # sh2
            pl.BlockSpec((2, 2, c3, 9 * c2), lambda b: (0, 0, 0, 0)),  # w3
            pl.BlockSpec((c3, 1), lambda b: (0, 0)),                   # sc3
            pl.BlockSpec((c3, 1), lambda b: (0, 0)),                   # sh3
            pl.BlockSpec((2, 2, nc, 9 * c3), lambda b: (0, 0, 0, 0)),  # w4
        ],
        out_specs=pl.BlockSpec((None, 32, nc, 32), lambda b: (b, 0, 0, 0)),
        scratch_shapes=[
            pltpu.VMEM((6, c1, 6), jnp.float32),     # padded layer-2 input
            pltpu.VMEM((10, c2, 10), jnp.float32),   # padded layer-3 input
            pltpu.VMEM((18, c3, 18), jnp.float32),   # padded layer-4 input
        ],
        compiler_params=pltpu.CompilerParams(
            dimension_semantics=("parallel",)),
        cost_estimate=pl.CostEstimate(
            flops=2 * B * macs,
            transcendentals=B * nc * 32 * 32,
            bytes_accessed=bytes_accessed),
    )(z3, kp["w1"], kp["sc1"], kp["sh1"],
      kp["w2"], kp["sc2"], kp["sh2"],
      kp["w3"], kp["sc3"], kp["sh3"], kp["w4"])

    return out.transpose(0, 2, 1, 3)       # (B, 32, nc, 32) -> NCHW


# ------------------------------ parameter init ----------------------------- #
def make_generator_params(key, nz, ngf, nc):
    ks = jax.random.split(key, 8)
    std = 0.02  # DCGAN-style init
    p = {
        "w1": std * jax.random.normal(ks[0], (nz,      ngf * 4, 4, 4), jnp.float32),
        "w2": std * jax.random.normal(ks[1], (ngf * 4, ngf * 2, 4, 4), jnp.float32),
        "w3": std * jax.random.normal(ks[2], (ngf * 2, ngf,     4, 4), jnp.float32),
        "w4": std * jax.random.normal(ks[3], (ngf,     nc,      4, 4), jnp.float32),
    }
    for i, c in zip((1, 2, 3), (ngf * 4, ngf * 2, ngf)):
        gamma = 1.0 + std * jax.random.normal(ks[3 + i], (c,), jnp.float32)
        beta = jnp.zeros((c,), jnp.float32)
        rmean = jnp.zeros((c,), jnp.float32)
        rvar = jnp.ones((c,), jnp.float32)
        p[f"s{i}"], p[f"sh{i}"] = fold_bn(gamma, beta, rmean, rvar)
    return p


# --------------------------- pure-JAX reference ----------------------------- #
def _convT_ref(x, w, stride, pad):
    B, Ci, H, W = x.shape
    _, Co, k, _ = w.shape
    Hf = (H - 1) * stride + k
    Wf = (W - 1) * stride + k
    full = jnp.zeros((B, Co, Hf, Wf), jnp.float32)
    prod = jnp.einsum("bihw,iojk->bojkhw", x.astype(jnp.float32), w)
    for ky in range(k):
        for kx in range(k):
            full = full.at[:, :, ky:ky + (H - 1) * stride + 1:stride,
                           kx:kx + (W - 1) * stride + 1:stride].add(prod[:, :, ky, kx])
    return full[:, :, pad:Hf - pad, pad:Wf - pad]


def generator_reference(z, p):
    def bn_leaky(x, s, sh):
        y = x * s[None, :, None, None] + sh[None, :, None, None]
        return jnp.where(y >= 0.0, y, 0.2 * y)
    x = bn_leaky(_convT_ref(z, p["w1"], 1, 0), p["s1"], p["sh1"])
    x = bn_leaky(_convT_ref(x, p["w2"], 2, 1), p["s2"], p["sh2"])
    x = bn_leaky(_convT_ref(x, p["w3"], 2, 1), p["s3"], p["sh3"])
    return jnp.tanh(_convT_ref(x, p["w4"], 2, 1))


if __name__ == "__main__":
    key = jax.random.PRNGKey(0)
    kz, kparam = jax.random.split(key)

    B, nz, ngf, nc = 2, 16, 8, 1          # small shapes consistent with the module
    z = jax.random.normal(kz, (B, nz, 1, 1), jnp.float32)
    params = make_generator_params(kparam, nz, ngf, nc)
    kparams = prepare_generator(params)   # hoisted one-time weight packing

    fwd = jax.jit(generator_forward)
    out = jax.block_until_ready(fwd(z, kparams))

    assert out.shape == (B, nc, 32, 32), out.shape
    assert out.dtype == jnp.float32
    assert bool(jnp.all(jnp.isfinite(out)))
    assert bool(jnp.all(jnp.abs(out) <= 1.0))          # tanh output range

    ref = generator_reference(z, params)
    max_err = float(jnp.max(jnp.abs(out - ref)))
    assert max_err < 5e-2, f"max |pallas - ref| = {max_err}"

    print("KERNEL_OK")
</pallas_src>

<mosaic_0001>
module attributes {stable_mosaic.version = 11 : i64} {
  func.func @_generator_kernel(%arg0: i32, %arg1: memref<1x16x1xf32, #tpu.memory_space<vmem>>, %arg2: memref<512x16xbf16, #tpu.memory_space<vmem>>, %arg3: memref<512x1xf32, #tpu.memory_space<vmem>>, %arg4: memref<512x1xf32, #tpu.memory_space<vmem>>, %arg5: memref<2x2x16x288xbf16, #tpu.memory_space<vmem>>, %arg6: memref<16x1xf32, #tpu.memory_space<vmem>>, %arg7: memref<16x1xf32, #tpu.memory_space<vmem>>, %arg8: memref<2x2x8x144xbf16, #tpu.memory_space<vmem>>, %arg9: memref<8x1xf32, #tpu.memory_space<vmem>>, %arg10: memref<8x1xf32, #tpu.memory_space<vmem>>, %arg11: memref<2x2x1x72xbf16, #tpu.memory_space<vmem>>, %arg12: memref<1x32x1x32xf32, #tpu.memory_space<vmem>>, %arg13: memref<6x32x6xf32, #tpu.memory_space<vmem>>, %arg14: memref<10x16x10xf32, #tpu.memory_space<vmem>>, %arg15: memref<18x8x18xf32, #tpu.memory_space<vmem>>) attributes {dimension_semantics = [#tpu.dimension_semantics<parallel>], iteration_bounds = array<i64: 2>, scalar_prefetch = 0 : i64, scratch_operands = 3 : i64, tpu.core_type = #tpu.core_type<tc>, window_params = [{transform_indices = @transform_0, window_bounds = array<i64: 1, 16, 1>}, {pipeline_mode = #tpu.pipeline_mode<synchronous>, transform_indices = @transform_1, window_bounds = array<i64: 512, 16>}, {pipeline_mode = #tpu.pipeline_mode<synchronous>, transform_indices = @transform_2, window_bounds = array<i64: 512, 1>}, {pipeline_mode = #tpu.pipeline_mode<synchronous>, transform_indices = @transform_3, window_bounds = array<i64: 512, 1>}, {pipeline_mode = #tpu.pipeline_mode<synchronous>, transform_indices = @transform_4, window_bounds = array<i64: 2, 2, 16, 288>}, {pipeline_mode = #tpu.pipeline_mode<synchronous>, transform_indices = @transform_5, window_bounds = array<i64: 16, 1>}, {pipeline_mode = #tpu.pipeline_mode<synchronous>, transform_indices = @transform_6, window_bounds = array<i64: 16, 1>}, {pipeline_mode = #tpu.pipeline_mode<synchronous>, transform_indices = @transform_7, window_bounds = array<i64: 2, 2, 8, 144>}, {pipeline_mode = #tpu.pipeline_mode<synchronous>, transform_indices = @transform_8, window_bounds = array<i64: 8, 1>}, {pipeline_mode = #tpu.pipeline_mode<synchronous>, transform_indices = @transform_9, window_bounds = array<i64: 8, 1>}, {pipeline_mode = #tpu.pipeline_mode<synchronous>, transform_indices = @transform_10, window_bounds = array<i64: 2, 2, 1, 72>}, {transform_indices = @transform_11, window_bounds = array<i64: 1, 32, 1, 32>}]} {
    %cst = arith.constant 0.000000e+00 : f32
    %0 = vector.broadcast %cst : f32 to vector<6x32x6xf32>
    %c0 = arith.constant 0 : index
    %c0_0 = arith.constant 0 : index
    %c0_1 = arith.constant 0 : index
    %1 = vector.load %arg13[%c0, %c0_0, %c0_1] : memref<6x32x6xf32, #tpu.memory_space<vmem>>, vector<6x32x6xf32>
    tpu.vector_store %arg13[%c0, %c0_0, %c0_1], %0 {strides = array<i32>} : memref<6x32x6xf32, #tpu.memory_space<vmem>>, vector<6x32x6xf32>,
    %cst_2 = arith.constant 0.000000e+00 : f32
    %2 = vector.broadcast %cst_2 : f32 to vector<10x16x10xf32>
    %c0_3 = arith.constant 0 : index
    %c0_4 = arith.constant 0 : index
    %c0_5 = arith.constant 0 : index
    %3 = vector.load %arg14[%c0_3, %c0_4, %c0_5] : memref<10x16x10xf32, #tpu.memory_space<vmem>>, vector<10x16x10xf32>
    tpu.vector_store %arg14[%c0_3, %c0_4, %c0_5], %2 {strides = array<i32>} : memref<10x16x10xf32, #tpu.memory_space<vmem>>, vector<10x16x10xf32>,
    %cst_6 = arith.constant 0.000000e+00 : f32
    %4 = vector.broadcast %cst_6 : f32 to vector<18x8x18xf32>
    %c0_7 = arith.constant 0 : index
    %c0_8 = arith.constant 0 : index
    %c0_9 = arith.constant 0 : index
    %5 = vector.load %arg15[%c0_7, %c0_8, %c0_9] : memref<18x8x18xf32, #tpu.memory_space<vmem>>, vector<18x8x18xf32>
    tpu.vector_store %arg15[%c0_7, %c0_8, %c0_9], %4 {strides = array<i32>} : memref<18x8x18xf32, #tpu.memory_space<vmem>>, vector<18x8x18xf32>,
    %c0_10 = arith.constant 0 : index
    %c0_11 = arith.constant 0 : index
    %6 = vector.load %arg2[%c0_10, %c0_11] : memref<512x16xbf16, #tpu.memory_space<vmem>>, vector<512x16xbf16>
    %7 = arith.extf %6 : vector<512x16xbf16> to vector<512x16xf32>
    %c0_12 = arith.constant 0 : index
    %c0_13 = arith.constant 0 : index
    %c0_14 = arith.constant 0 : index
    %8 = vector.load %arg1[%c0_12, %c0_13, %c0_14] : memref<1x16x1xf32, #tpu.memory_space<vmem>>, vector<1x16x1xf32>
    %9 = vector.shape_cast %8 : vector<1x16x1xf32> to vector<16x1xf32>
    %cst_15 = arith.constant dense<0.000000e+00> : vector<512x1xf32>
    %10 = tpu.matmul %7, %9, %cst_15 {dimension_numbers = #tpu.dot_dimension_numbers<[1], [0], [0], [1], [0, 0, 1, 1], [], []>} : vector<512x16xf32>, vector<16x1xf32>, vector<512x1xf32> -> vector<512x1xf32>
    %c0_16 = arith.constant 0 : index
    %c0_17 = arith.constant 0 : index
    %11 = vector.load %arg3[%c0_16, %c0_17] : memref<512x1xf32, #tpu.memory_space<vmem>>, vector<512x1xf32>
    %12 = arith.mulf %10, %11 : vector<512x1xf32>
    %c0_18 = arith.constant 0 : index
    %c0_19 = arith.constant 0 : index
    %13 = vector.load %arg4[%c0_18, %c0_19] : memref<512x1xf32, #tpu.memory_space<vmem>>, vector<512x1xf32>
    %14 = arith.addf %12, %13 : vector<512x1xf32>
    %cst_20 = arith.constant 2.000000e-01 : f32
    %15 = vector.broadcast %cst_20 : f32 to vector<512x1xf32>
    %16 = arith.mulf %15, %14 : vector<512x1xf32>
    %17 = arith.maximumf %14, %16 : vector<512x1xf32>
    %18 = vector.extract_strided_slice %17 {offsets = [0, 0], sizes = [32, 1], strides = [1, 1]} : vector<512x1xf32> to vector<32x1xf32>
    %c1 = arith.constant 1 : index
    %c0_21 = arith.constant 0 : index
    %c1_22 = arith.constant 1 : index
    %19 = vector.load %arg13[%c1, %c0_21, %c1_22] : memref<6x32x6xf32, #tpu.memory_space<vmem>>, vector<1x32x1xf32>
    %20 = vector.shape_cast %19 : vector<1x32x1xf32> to vector<32x1xf32>
    %21 = vector.shape_cast %18 : vector<32x1xf32> to vector<1x32x1xf32>
    tpu.vector_store %arg13[%c1, %c0_21, %c1_22], %21 {strides = array<i32>} : memref<6x32x6xf32, #tpu.memory_space<vmem>>, vector<1x32x1xf32>,
    %22 = vector.extract_strided_slice %17 {offsets = [32, 0], sizes = [32, 1], strides = [1, 1]} : vector<512x1xf32> to vector<32x1xf32>
    %c1_23 = arith.constant 1 : index
    %c0_24 = arith.constant 0 : index
    %c2 = arith.constant 2 : index
    %23 = vector.load %arg13[%c1_23, %c0_24, %c2] : memref<6x32x6xf32, #tpu.memory_space<vmem>>, vector<1x32x1xf32>
    %24 = vector.shape_cast %23 : vector<1x32x1xf32> to vector<32x1xf32>
    %25 = vector.shape_cast %22 : vector<32x1xf32> to vector<1x32x1xf32>
    tpu.vector_store %arg13[%c1_23, %c0_24, %c2], %25 {strides = array<i32>} : memref<6x32x6xf32, #tpu.memory_space<vmem>>, vector<1x32x1xf32>,
    %26 = vector.extract_strided_slice %17 {offsets = [64, 0], sizes = [32, 1], strides = [1, 1]} : vector<512x1xf32> to vector<32x1xf32>
    %c1_25 = arith.constant 1 : index
    %c0_26 = arith.constant 0 : index
    %c3 = arith.constant 3 : index
    %27 = vector.load %arg13[%c1_25, %c0_26, %c3] : memref<6x32x6xf32, #tpu.memory_space<vmem>>, vector<1x32x1xf32>
    %28 = vector.shape_cast %27 : vector<1x32x1xf32> to vector<32x1xf32>
    %29 = vector.shape_cast %26 : vector<32x1xf32> to vector<1x32x1xf32>
    tpu.vector_store %arg13[%c1_25, %c0_26, %c3], %29 {strides = array<i32>} : memref<6x32x6xf32, #tpu.memory_space<vmem>>, vector<1x32x1xf32>,
    %30 = vector.extract_strided_slice %17 {offsets = [96, 0], sizes = [32, 1], strides = [1, 1]} : vector<512x1xf32> to vector<32x1xf32>
    %c1_27 = arith.constant 1 : index
    %c0_28 = arith.constant 0 : index
    %c4 = arith.constant 4 : index
    %31 = vector.load %arg13[%c1_27, %c0_28, %c4] : memref<6x32x6xf32, #tpu.memory_space<vmem>>, vector<1x32x1xf32>
    %32 = vector.shape_cast %31 : vector<1x32x1xf32> to vector<32x1xf32>
    %33 = vector.shape_cast %30 : vector<32x1xf32> to vector<1x32x1xf32>
    tpu.vector_store %arg13[%c1_27, %c0_28, %c4], %33 {strides = array<i32>} : memref<6x32x6xf32, #tpu.memory_space<vmem>>, vector<1x32x1xf32>,
    %34 = vector.extract_strided_slice %17 {offsets = [128, 0], sizes = [32, 1], strides = [1, 1]} : vector<512x1xf32> to vector<32x1xf32>
    %c2_29 = arith.constant 2 : index
    %c0_30 = arith.constant 0 : index
    %c1_31 = arith.constant 1 : index
    %35 = vector.load %arg13[%c2_29, %c0_30, %c1_31] : memref<6x32x6xf32, #tpu.memory_space<vmem>>, vector<1x32x1xf32>
    %36 = vector.shape_cast %35 : vector<1x32x1xf32> to vector<32x1xf32>
    %37 = vector.shape_cast %34 : vector<32x1xf32> to vector<1x32x1xf32>
    tpu.vector_store %arg13[%c2_29, %c0_30, %c1_31], %37 {strides = array<i32>} : memref<6x32x6xf32, #tpu.memory_space<vmem>>, vector<1x32x1xf32>,
    %38 = vector.extract_strided_slice %17 {offsets = [160, 0], sizes = [32, 1], strides = [1, 1]} : vector<512x1xf32> to vector<32x1xf32>
    %c2_32 = arith.constant 2 : index
    %c0_33 = arith.constant 0 : index
    %c2_34 = arith.constant 2 : index
    %39 = vector.load %arg13[%c2_32, %c0_33, %c2_34] : memref<6x32x6xf32, #tpu.memory_space<vmem>>, vector<1x32x1xf32>
    %40 = vector.shape_cast %39 : vector<1x32x1xf32> to vector<32x1xf32>
    %41 = vector.shape_cast %38 : vector<32x1xf32> to vector<1x32x1xf32>
    tpu.vector_store %arg13[%c2_32, %c0_33, %c2_34], %41 {strides = array<i32>} : memref<6x32x6xf32, #tpu.memory_space<vmem>>, vector<1x32x1xf32>,
    %42 = vector.extract_strided_slice %17 {offsets = [192, 0], sizes = [32, 1], strides = [1, 1]} : vector<512x1xf32> to vector<32x1xf32>
    %c2_35 = arith.constant 2 : index
    %c0_36 = arith.constant 0 : index
    %c3_37 = arith.constant 3 : index
    %43 = vector.load %arg13[%c2_35, %c0_36, %c3_37] : memref<6x32x6xf32, #tpu.memory_space<vmem>>, vector<1x32x1xf32>
    %44 = vector.shape_cast %43 : vector<1x32x1xf32> to vector<32x1xf32>
    %45 = vector.shape_cast %42 : vector<32x1xf32> to vector<1x32x1xf32>
    tpu.vector_store %arg13[%c2_35, %c0_36, %c3_37], %45 {strides = array<i32>} : memref<6x32x6xf32, #tpu.memory_space<vmem>>, vector<1x32x1xf32>,
    %46 = vector.extract_strided_slice %17 {offsets = [224, 0], sizes = [32, 1], strides = [1, 1]} : vector<512x1xf32> to vector<32x1xf32>
    %c2_38 = arith.constant 2 : index
    %c0_39 = arith.constant 0 : index
    %c4_40 = arith.constant 4 : index
    %47 = vector.load %arg13[%c2_38, %c0_39, %c4_40] : memref<6x32x6xf32, #tpu.memory_space<vmem>>, vector<1x32x1xf32>
    %48 = vector.shape_cast %47 : vector<1x32x1xf32> to vector<32x1xf32>
    %49 = vector.shape_cast %46 : vector<32x1xf32> to vector<1x32x1xf32>
    tpu.vector_store %arg13[%c2_38, %c0_39, %c4_40], %49 {strides = array<i32>} : memref<6x32x6xf32, #tpu.memory_space<vmem>>, vector<1x32x1xf32>,
    %50 = vector.extract_strided_slice %17 {offsets = [256, 0], sizes = [32, 1], strides = [1, 1]} : vector<512x1xf32> to vector<32x1xf32>
    %c3_41 = arith.constant 3 : index
    %c0_42 = arith.constant 0 : index
    %c1_43 = arith.constant 1 : index
    %51 = vector.load %arg13[%c3_41, %c0_42, %c1_43] : memref<6x32x6xf32, #tpu.memory_space<vmem>>, vector<1x32x1xf32>
    %52 = vector.shape_cast %51 : vector<1x32x1xf32> to vector<32x1xf32>
    %53 = vector.shape_cast %50 : vector<32x1xf32> to vector<1x32x1xf32>
    tpu.vector_store %arg13[%c3_41, %c0_42, %c1_43], %53 {strides = array<i32>} : memref<6x32x6xf32, #tpu.memory_space<vmem>>, vector<1x32x1xf32>,
    %54 = vector.extract_strided_slice %17 {offsets = [288, 0], sizes = [32, 1], strides = [1, 1]} : vector<512x1xf32> to vector<32x1xf32>
    %c3_44 = arith.constant 3 : index
    %c0_45 = arith.constant 0 : index
    %c2_46 = arith.constant 2 : index
    %55 = vector.load %arg13[%c3_44, %c0_45, %c2_46] : memref<6x32x6xf32, #tpu.memory_space<vmem>>, vector<1x32x1xf32>
    %56 = vector.shape_cast %55 : vector<1x32x1xf32> to vector<32x1xf32>
    %57 = vector.shape_cast %54 : vector<32x1xf32> to vector<1x32x1xf32>
    tpu.vector_store %arg13[%c3_44, %c0_45, %c2_46], %57 {strides = array<i32>} : memref<6x32x6xf32, #tpu.memory_space<vmem>>, vector<1x32x1xf32>,
    %58 = vector.extract_strided_slice %17 {offsets = [320, 0], sizes = [32, 1], strides = [1, 1]} : vector<512x1xf32> to vector<32x1xf32>
    %c3_47 = arith.constant 3 : index
    %c0_48 = arith.constant 0 : index
    %c3_49 = arith.constant 3 : index
    %59 = vector.load %arg13[%c3_47, %c0_48, %c3_49] : memref<6x32x6xf32, #tpu.memory_space<vmem>>, vector<1x32x1xf32>
    %60 = vector.shape_cast %59 : vector<1x32x1xf32> to vector<32x1xf32>
    %61 = vector.shape_cast %58 : vector<32x1xf32> to vector<1x32x1xf32>
    tpu.vector_store %arg13[%c3_47, %c0_48, %c3_49], %61 {strides = array<i32>} : memref<6x32x6xf32, #tpu.memory_space<vmem>>, vector<1x32x1xf32>,
    %62 = vector.extract_strided_slice %17 {offsets = [352, 0], sizes = [32, 1], strides = [1, 1]} : vector<512x1xf32> to vector<32x1xf32>
    %c3_50 = arith.constant 3 : index
    %c0_51 = arith.constant 0 : index
    %c4_52 = arith.constant 4 : index
    %63 = vector.load %arg13[%c3_50, %c0_51, %c4_52] : memref<6x32x6xf32, #tpu.memory_space<vmem>>, vector<1x32x1xf32>
    %64 = vector.shape_cast %63 : vector<1x32x1xf32> to vector<32x1xf32>
    %65 = vector.shape_cast %62 : vector<32x1xf32> to vector<1x32x1xf32>
    tpu.vector_store %arg13[%c3_50, %c0_51, %c4_52], %65 {strides = array<i32>} : memref<6x32x6xf32, #tpu.memory_space<vmem>>, vector<1x32x1xf32>,
    %66 = vector.extract_strided_slice %17 {offsets = [384, 0], sizes = [32, 1], strides = [1, 1]} : vector<512x1xf32> to vector<32x1xf32>
    %c4_53 = arith.constant 4 : index
    %c0_54 = arith.constant 0 : index
    %c1_55 = arith.constant 1 : index
    %67 = vector.load %arg13[%c4_53, %c0_54, %c1_55] : memref<6x32x6xf32, #tpu.memory_space<vmem>>, vector<1x32x1xf32>
    %68 = vector.shape_cast %67 : vector<1x32x1xf32> to vector<32x1xf32>
    %69 = vector.shape_cast %66 : vector<32x1xf32> to vector<1x32x1xf32>
    tpu.vector_store %arg13[%c4_53, %c0_54, %c1_55], %69 {strides = array<i32>} : memref<6x32x6xf32, #tpu.memory_space<vmem>>, vector<1x32x1xf32>,
    %70 = vector.extract_strided_slice %17 {offsets = [416, 0], sizes = [32, 1], strides = [1, 1]} : vector<512x1xf32> to vector<32x1xf32>
    %c4_56 = arith.constant 4 : index
    %c0_57 = arith.constant 0 : index
    %c2_58 = arith.constant 2 : index
    %71 = vector.load %arg13[%c4_56, %c0_57, %c2_58] : memref<6x32x6xf32, #tpu.memory_space<vmem>>, vector<1x32x1xf32>
    %72 = vector.shape_cast %71 : vector<1x32x1xf32> to vector<32x1xf32>
    %73 = vector.shape_cast %70 : vector<32x1xf32> to vector<1x32x1xf32>
    tpu.vector_store %arg13[%c4_56, %c0_57, %c2_58], %73 {strides = array<i32>} : memref<6x32x6xf32, #tpu.memory_space<vmem>>, vector<1x32x1xf32>,
    %74 = vector.extract_strided_slice %17 {offsets = [448, 0], sizes = [32, 1], strides = [1, 1]} : vector<512x1xf32> to vector<32x1xf32>
    %c4_59 = arith.constant 4 : index
    %c0_60 = arith.constant 0 : index
    %c3_61 = arith.constant 3 : index
    %75 = vector.load %arg13[%c4_59, %c0_60, %c3_61] : memref<6x32x6xf32, #tpu.memory_space<vmem>>, vector<1x32x1xf32>
    %76 = vector.shape_cast %75 : vector<1x32x1xf32> to vector<32x1xf32>
    %77 = vector.shape_cast %74 : vector<32x1xf32> to vector<1x32x1xf32>
    tpu.vector_store %arg13[%c4_59, %c0_60, %c3_61], %77 {strides = array<i32>} : memref<6x32x6xf32, #tpu.memory_space<vmem>>, vector<1x32x1xf32>,
    %78 = vector.extract_strided_slice %17 {offsets = [480, 0], sizes = [32, 1], strides = [1, 1]} : vector<512x1xf32> to vector<32x1xf32>
    %c4_62 = arith.constant 4 : index
    %c0_63 = arith.constant 0 : index
    %c4_64 = arith.constant 4 : index
    %79 = vector.load %arg13[%c4_62, %c0_63, %c4_64] : memref<6x32x6xf32, #tpu.memory_space<vmem>>, vector<1x32x1xf32>
    %80 = vector.shape_cast %79 : vector<1x32x1xf32> to vector<32x1xf32>
    %81 = vector.shape_cast %78 : vector<32x1xf32> to vector<1x32x1xf32>
    tpu.vector_store %arg13[%c4_62, %c0_63, %c4_64], %81 {strides = array<i32>} : memref<6x32x6xf32, #tpu.memory_space<vmem>>, vector<1x32x1xf32>,
    %c0_65 = arith.constant 0 : index
    %c0_66 = arith.constant 0 : index
    %82 = vector.load %arg6[%c0_65, %c0_66] : memref<16x1xf32, #tpu.memory_space<vmem>>, vector<16x1xf32>
    %c0_67 = arith.constant 0 : index
    %c0_68 = arith.constant 0 : index
    %83 = vector.load %arg7[%c0_67, %c0_68] : memref<16x1xf32, #tpu.memory_space<vmem>>, vector<16x1xf32>
    %84 = tpu.iota {dimensions = array<i32: 0>} : vector<4x8xi32>
    %85 = tpu.iota {dimensions = array<i32: 1>} : vector<4x8xi32>
    %c2_i32 = arith.constant 2 : i32
    %86 = vector.broadcast %c2_i32 : i32 to vector<4x8xi32>
    %87 = arith.muli %86, %84 : vector<4x8xi32>
    %88 = arith.cmpi eq, %85, %87 : vector<4x8xi32>
    %89 = arith.extui %88 : vector<4x8xi1> to vector<4x8xi32>
    %90 = arith.sitofp %89 : vector<4x8xi32> to vector<4x8xf32>
    %c2_i32_69 = arith.constant 2 : i32
    %91 = vector.broadcast %c2_i32_69 : i32 to vector<4x8xi32>
    %92 = arith.muli %91, %84 : vector<4x8xi32>
    %c1_i32 = arith.constant 1 : i32
    %93 = vector.broadcast %c1_i32 : i32 to vector<4x8xi32>
    %94 = arith.addi %92, %93 : vector<4x8xi32>
    %95 = arith.cmpi eq, %85, %94 : vector<4x8xi32>
    %96 = arith.extui %95 : vector<4x8xi1> to vector<4x8xi32>
    %97 = arith.sitofp %96 : vector<4x8xi32> to vector<4x8xf32>
    %c0_i32 = arith.constant 0 : i32
    %c4_i32 = arith.constant 4 : i32
    %98 = arith.addi %c0_i32, %c4_i32 : i32
    %c1_i32_70 = arith.constant 1 : i32
    scf.for %arg16 = %c0_i32 to %98 step %c1_i32_70  : i32 {
      %c0_i32_88 = arith.constant 0 : i32
      %131 = arith.addi %arg16, %c0_i32_88 : i32
      %132 = arith.index_cast %131 : i32 to index
      %c0_89 = arith.constant 0 : index
      %c0_90 = arith.constant 0 : index
      %133 = vector.load %arg13[%132, %c0_89, %c0_90] : memref<6x32x6xf32, #tpu.memory_space<vmem>>, vector<1x32x4xf32>
      %134 = vector.shape_cast %133 : vector<1x32x4xf32> to vector<32x4xf32>
      %c0_i32_91 = arith.constant 0 : i32
      %135 = arith.addi %arg16, %c0_i32_91 : i32
      %136 = arith.index_cast %135 : i32 to index
      %c0_92 = arith.constant 0 : index
      %c1_93 = arith.constant 1 : index
      %137 = vector.load %arg13[%136, %c0_92, %c1_93] : memref<6x32x6xf32, #tpu.memory_space<vmem>>, vector<1x32x4xf32>
      %138 = vector.shape_cast %137 : vector<1x32x4xf32> to vector<32x4xf32>
      %c0_i32_94 = arith.constant 0 : i32
      %139 = arith.addi %arg16, %c0_i32_94 : i32
      %140 = arith.index_cast %139 : i32 to index
      %c0_95 = arith.constant 0 : index
      %c2_96 = arith.constant 2 : index
      %141 = vector.load %arg13[%140, %c0_95, %c2_96] : memref<6x32x6xf32, #tpu.memory_space<vmem>>, vector<1x32x4xf32>
      %142 = vector.shape_cast %141 : vector<1x32x4xf32> to vector<32x4xf32>
      %c1_i32_97 = arith.constant 1 : i32
      %143 = arith.addi %arg16, %c1_i32_97 : i32
      %144 = arith.index_cast %143 : i32 to index
      %c0_98 = arith.constant 0 : index
      %c0_99 = arith.constant 0 : index
      %145 = vector.load %arg13[%144, %c0_98, %c0_99] : memref<6x32x6xf32, #tpu.memory_space<vmem>>, vector<1x32x4xf32>
      %146 = vector.shape_cast %145 : vector<1x32x4xf32> to vector<32x4xf32>
      %c1_i32_100 = arith.constant 1 : i32
      %147 = arith.addi %arg16, %c1_i32_100 : i32
      %148 = arith.index_cast %147 : i32 to index
      %c0_101 = arith.constant 0 : index
      %c1_102 = arith.constant 1 : index
      %149 = vector.load %arg13[%148, %c0_101, %c1_102] : memref<6x32x6xf32, #tpu.memory_space<vmem>>, vector<1x32x4xf32>
      %150 = vector.shape_cast %149 : vector<1x32x4xf32> to vector<32x4xf32>
      %c1_i32_103 = arith.constant 1 : i32
      %151 = arith.addi %arg16, %c1_i32_103 : i32
      %152 = arith.index_cast %151 : i32 to index
      %c0_104 = arith.constant 0 : index
      %c2_105 = arith.constant 2 : index
      %153 = vector.load %arg13[%152, %c0_104, %c2_105] : memref<6x32x6xf32, #tpu.memory_space<vmem>>, vector<1x32x4xf32>
      %154 = vector.shape_cast %153 : vector<1x32x4xf32> to vector<32x4xf32>
      %c2_i32_106 = arith.constant 2 : i32
      %155 = arith.addi %arg16, %c2_i32_106 : i32
      %156 = arith.index_cast %155 : i32 to index
      %c0_107 = arith.constant 0 : index
      %c0_108 = arith.constant 0 : index
      %157 = vector.load %arg13[%156, %c0_107, %c0_108] : memref<6x32x6xf32, #tpu.memory_space<vmem>>, vector<1x32x4xf32>
      %158 = vector.shape_cast %157 : vector<1x32x4xf32> to vector<32x4xf32>
      %c2_i32_109 = arith.constant 2 : i32
      %159 = arith.addi %arg16, %c2_i32_109 : i32
      %160 = arith.index_cast %159 : i32 to index
      %c0_110 = arith.constant 0 : index
      %c1_111 = arith.constant 1 : index
      %161 = vector.load %arg13[%160, %c0_110, %c1_111] : memref<6x32x6xf32, #tpu.memory_space<vmem>>, vector<1x32x4xf32>
      %162 = vector.shape_cast %161 : vector<1x32x4xf32> to vector<32x4xf32>
      %c2_i32_112 = arith.constant 2 : i32
      %163 = arith.addi %arg16, %c2_i32_112 : i32
      %164 = arith.index_cast %163 : i32 to index
      %c0_113 = arith.constant 0 : index
      %c2_114 = arith.constant 2 : index
      %165 = vector.load %arg13[%164, %c0_113, %c2_114] : memref<6x32x6xf32, #tpu.memory_space<vmem>>, vector<1x32x4xf32>
      %166 = vector.shape_cast %165 : vector<1x32x4xf32> to vector<32x4xf32>
      %167 = tpu.concatenate %134, %138, %142, %146, %150, %154, %158, %162, %166 in 0 : vector<32x4xf32>, vector<32x4xf32>, vector<32x4xf32>, vector<32x4xf32>, vector<32x4xf32>, vector<32x4xf32>, vector<32x4xf32>, vector<32x4xf32>, vector<32x4xf32> -> vector<288x4xf32>
      %c0_115 = arith.constant 0 : index
      %c0_116 = arith.constant 0 : index
      %c0_117 = arith.constant 0 : index
      %c0_118 = arith.constant 0 : index
      %168 = vector.load %arg5[%c0_115, %c0_116, %c0_117, %c0_118] : memref<2x2x16x288xbf16, #tpu.memory_space<vmem>>, vector<1x1x16x288xbf16>
      %169 = vector.shape_cast %168 : vector<1x1x16x288xbf16> to vector<16x288xbf16>
      %170 = arith.extf %169 : vector<16x288xbf16> to vector<16x288xf32>
      %cst_119 = arith.constant dense<0.000000e+00> : vector<16x4xf32>
      %171 = tpu.matmul %170, %167, %cst_119 {dimension_numbers = #tpu.dot_dimension_numbers<[1], [0], [0], [1], [0, 0, 1, 1], [], []>} : vector<16x288xf32>, vector<288x4xf32>, vector<16x4xf32> -> vector<16x4xf32>
      %c0_120 = arith.constant 0 : index
      %c1_121 = arith.constant 1 : index
      %c0_122 = arith.constant 0 : index
      %c0_123 = arith.constant 0 : index
      %172 = vector.load %arg5[%c0_120, %c1_121, %c0_122, %c0_123] : memref<2x2x16x288xbf16, #tpu.memory_space<vmem>>, vector<1x1x16x288xbf16>
      %173 = vector.shape_cast %172 : vector<1x1x16x288xbf16> to vector<16x288xbf16>
      %174 = arith.extf %173 : vector<16x288xbf16> to vector<16x288xf32>
      %cst_124 = arith.constant dense<0.000000e+00> : vector<16x4xf32>
      %175 = tpu.matmul %174, %167, %cst_124 {dimension_numbers = #tpu.dot_dimension_numbers<[1], [0], [0], [1], [0, 0, 1, 1], [], []>} : vector<16x288xf32>, vector<288x4xf32>, vector<16x4xf32> -> vector<16x4xf32>
      %cst_125 = arith.constant dense<0.000000e+00> : vector<16x8xf32>
      %176 = tpu.matmul %171, %90, %cst_125 {dimension_numbers = #tpu.dot_dimension_numbers<[1], [0], [0], [1], [0, 0, 1, 1], [], []>} : vector<16x4xf32>, vector<4x8xf32>, vector<16x8xf32> -> vector<16x8xf32>
      %cst_126 = arith.constant dense<0.000000e+00> : vector<16x8xf32>
      %177 = tpu.matmul %175, %97, %cst_126 {dimension_numbers = #tpu.dot_dimension_numbers<[1], [0], [0], [1], [0, 0, 1, 1], [], []>} : vector<16x4xf32>, vector<4x8xf32>, vector<16x8xf32> -> vector<16x8xf32>
      %178 = arith.addf %176, %177 : vector<16x8xf32>
      %c2_i32_127 = arith.constant 2 : i32
      %179 = arith.muli %c2_i32_127, %arg16 : i32
      %c0_i32_128 = arith.constant 0 : i32
      %180 = arith.addi %179, %c0_i32_128 : i32
      %181 = vector.broadcast %82 : vector<16x1xf32> to vector<16x8xf32>
      %182 = arith.mulf %178, %181 : vector<16x8xf32>
      %183 = vector.broadcast %83 : vector<16x1xf32> to vector<16x8xf32>
      %184 = arith.addf %182, %183 : vector<16x8xf32>
      %cst_129 = arith.constant 2.000000e-01 : f32
      %185 = vector.broadcast %cst_129 : f32 to vector<16x8xf32>
      %186 = arith.mulf %185, %184 : vector<16x8xf32>
      %187 = arith.maximumf %184, %186 : vector<16x8xf32>
      %c1_i32_130 = arith.constant 1 : i32
      %188 = arith.addi %c1_i32_130, %180 : i32
      %189 = arith.index_cast %188 : i32 to index
      %c0_131 = arith.constant 0 : index
      %c1_132 = arith.constant 1 : index
      %190 = vector.load %arg14[%189, %c0_131, %c1_132] : memref<10x16x10xf32, #tpu.memory_space<vmem>>, vector<1x16x8xf32>
      %191 = vector.shape_cast %190 : vector<1x16x8xf32> to vector<16x8xf32>
      %192 = vector.shape_cast %187 : vector<16x8xf32> to vector<1x16x8xf32>
      tpu.vector_store %arg14[%189, %c0_131, %c1_132], %192 {strides = array<i32>} : memref<10x16x10xf32, #tpu.memory_space<vmem>>, vector<1x16x8xf32>,
      %c1_133 = arith.constant 1 : index
      %c0_134 = arith.constant 0 : index
      %c0_135 = arith.constant 0 : index
      %c0_136 = arith.constant 0 : index
      %193 = vector.load %arg5[%c1_133, %c0_134, %c0_135, %c0_136] : memref<2x2x16x288xbf16, #tpu.memory_space<vmem>>, vector<1x1x16x288xbf16>
      %194 = vector.shape_cast %193 : vector<1x1x16x288xbf16> to vector<16x288xbf16>
      %195 = arith.extf %194 : vector<16x288xbf16> to vector<16x288xf32>
      %cst_137 = arith.constant dense<0.000000e+00> : vector<16x4xf32>
      %196 = tpu.matmul %195, %167, %cst_137 {dimension_numbers = #tpu.dot_dimension_numbers<[1], [0], [0], [1], [0, 0, 1, 1], [], []>} : vector<16x288xf32>, vector<288x4xf32>, vector<16x4xf32> -> vector<16x4xf32>
      %c1_138 = arith.constant 1 : index
      %c1_139 = arith.constant 1 : index
      %c0_140 = arith.constant 0 : index
      %c0_141 = arith.constant 0 : index
      %197 = vector.load %arg5[%c1_138, %c1_139, %c0_140, %c0_141] : memref<2x2x16x288xbf16, #tpu.memory_space<vmem>>, vector<1x1x16x288xbf16>
      %198 = vector.shape_cast %197 : vector<1x1x16x288xbf16> to vector<16x288xbf16>
      %199 = arith.extf %198 : vector<16x288xbf16> to vector<16x288xf32>
      %cst_142 = arith.constant dense<0.000000e+00> : vector<16x4xf32>
      %200 = tpu.matmul %199, %167, %cst_142 {dimension_numbers = #tpu.dot_dimension_numbers<[1], [0], [0], [1], [0, 0, 1, 1], [], []>} : vector<16x288xf32>, vector<288x4xf32>, vector<16x4xf32> -> vector<16x4xf32>
      %cst_143 = arith.constant dense<0.000000e+00> : vector<16x8xf32>
      %201 = tpu.matmul %196, %90, %cst_143 {dimension_numbers = #tpu.dot_dimension_numbers<[1], [0], [0], [1], [0, 0, 1, 1], [], []>} : vector<16x4xf32>, vector<4x8xf32>, vector<16x8xf32> -> vector<16x8xf32>
      %cst_144 = arith.constant dense<0.000000e+00> : vector<16x8xf32>
      %202 = tpu.matmul %200, %97, %cst_144 {dimension_numbers = #tpu.dot_dimension_numbers<[1], [0], [0], [1], [0, 0, 1, 1], [], []>} : vector<16x4xf32>, vector<4x8xf32>, vector<16x8xf32> -> vector<16x8xf32>
      %203 = arith.addf %201, %202 : vector<16x8xf32>
      %c2_i32_145 = arith.constant 2 : i32
      %204 = arith.muli %c2_i32_145, %arg16 : i32
      %c1_i32_146 = arith.constant 1 : i32
      %205 = arith.addi %204, %c1_i32_146 : i32
      %206 = vector.broadcast %82 : vector<16x1xf32> to vector<16x8xf32>
      %207 = arith.mulf %203, %206 : vector<16x8xf32>
      %208 = vector.broadcast %83 : vector<16x1xf32> to vector<16x8xf32>
      %209 = arith.addf %207, %208 : vector<16x8xf32>
      %cst_147 = arith.constant 2.000000e-01 : f32
      %210 = vector.broadcast %cst_147 : f32 to vector<16x8xf32>
      %211 = arith.mulf %210, %209 : vector<16x8xf32>
      %212 = arith.maximumf %209, %211 : vector<16x8xf32>
      %c1_i32_148 = arith.constant 1 : i32
      %213 = arith.addi %c1_i32_148, %205 : i32
      %214 = arith.index_cast %213 : i32 to index
      %c0_149 = arith.constant 0 : index
      %c1_150 = arith.constant 1 : index
      %215 = vector.load %arg14[%214, %c0_149, %c1_150] : memref<10x16x10xf32, #tpu.memory_space<vmem>>, vector<1x16x8xf32>
      %216 = vector.shape_cast %215 : vector<1x16x8xf32> to vector<16x8xf32>
      %217 = vector.shape_cast %212 : vector<16x8xf32> to vector<1x16x8xf32>
      tpu.vector_store %arg14[%214, %c0_149, %c1_150], %217 {strides = array<i32>} : memref<10x16x10xf32, #tpu.memory_space<vmem>>, vector<1x16x8xf32>,
    }
    %c4_i32_71 = arith.constant 4 : i32
    %c0_72 = arith.constant 0 : index
    %c0_73 = arith.constant 0 : index
    %99 = vector.load %arg9[%c0_72, %c0_73] : memref<8x1xf32, #tpu.memory_space<vmem>>, vector<8x1xf32>
    %c0_74 = arith.constant 0 : index
    %c0_75 = arith.constant 0 : index
    %100 = vector.load %arg10[%c0_74, %c0_75] : memref<8x1xf32, #tpu.memory_space<vmem>>, vector<8x1xf32>
    %101 = tpu.iota {dimensions = array<i32: 0>} : vector<8x16xi32>
    %102 = tpu.iota {dimensions = array<i32: 1>} : vector<8x16xi32>
    %c2_i32_76 = arith.constant 2 : i32
    %103 = vector.broadcast %c2_i32_76 : i32 to vector<8x16xi32>
    %104 = arith.muli %103, %101 : vector<8x16xi32>
    %105 = arith.cmpi eq, %102, %104 : vector<8x16xi32>
    %106 = arith.extui %105 : vector<8x16xi1> to vector<8x16xi32>
    %107 = arith.sitofp %106 : vector<8x16xi32> to vector<8x16xf32>
    %c2_i32_77 = arith.constant 2 : i32
    %108 = vector.broadcast %c2_i32_77 : i32 to vector<8x16xi32>
    %109 = arith.muli %108, %101 : vector<8x16xi32>
    %c1_i32_78 = arith.constant 1 : i32
    %110 = vector.broadcast %c1_i32_78 : i32 to vector<8x16xi32>
    %111 = arith.addi %109, %110 : vector<8x16xi32>
    %112 = arith.cmpi eq, %102, %111 : vector<8x16xi32>
    %113 = arith.extui %112 : vector<8x16xi1> to vector<8x16xi32>
    %114 = arith.sitofp %113 : vector<8x16xi32> to vector<8x16xf32>
    %c0_i32_79 = arith.constant 0 : i32
    %c8_i32 = arith.constant 8 : i32
    %115 = arith.addi %c0_i32_79, %c8_i32 : i32
    %c1_i32_80 = arith.constant 1 : i32
    scf.for %arg16 = %c0_i32_79 to %115 step %c1_i32_80  : i32 {
      %c0_i32_88 = arith.constant 0 : i32
      %131 = arith.addi %arg16, %c0_i32_88 : i32
      %132 = arith.index_cast %131 : i32 to index
      %c0_89 = arith.constant 0 : index
      %c0_90 = arith.constant 0 : index
      %133 = vector.load %arg14[%132, %c0_89, %c0_90] : memref<10x16x10xf32, #tpu.memory_space<vmem>>, vector<1x16x8xf32>
      %134 = vector.shape_cast %133 : vector<1x16x8xf32> to vector<16x8xf32>
      %c0_i32_91 = arith.constant 0 : i32
      %135 = arith.addi %arg16, %c0_i32_91 : i32
      %136 = arith.index_cast %135 : i32 to index
      %c0_92 = arith.constant 0 : index
      %c1_93 = arith.constant 1 : index
      %137 = vector.load %arg14[%136, %c0_92, %c1_93] : memref<10x16x10xf32, #tpu.memory_space<vmem>>, vector<1x16x8xf32>
      %138 = vector.shape_cast %137 : vector<1x16x8xf32> to vector<16x8xf32>
      %c0_i32_94 = arith.constant 0 : i32
      %139 = arith.addi %arg16, %c0_i32_94 : i32
      %140 = arith.index_cast %139 : i32 to index
      %c0_95 = arith.constant 0 : index
      %c2_96 = arith.constant 2 : index
      %141 = vector.load %arg14[%140, %c0_95, %c2_96] : memref<10x16x10xf32, #tpu.memory_space<vmem>>, vector<1x16x8xf32>
      %142 = vector.shape_cast %141 : vector<1x16x8xf32> to vector<16x8xf32>
      %c1_i32_97 = arith.constant 1 : i32
      %143 = arith.addi %arg16, %c1_i32_97 : i32
      %144 = arith.index_cast %143 : i32 to index
      %c0_98 = arith.constant 0 : index
      %c0_99 = arith.constant 0 : index
      %145 = vector.load %arg14[%144, %c0_98, %c0_99] : memref<10x16x10xf32, #tpu.memory_space<vmem>>, vector<1x16x8xf32>
      %146 = vector.shape_cast %145 : vector<1x16x8xf32> to vector<16x8xf32>
      %c1_i32_100 = arith.constant 1 : i32
      %147 = arith.addi %arg16, %c1_i32_100 : i32
      %148 = arith.index_cast %147 : i32 to index
      %c0_101 = arith.constant 0 : index
      %c1_102 = arith.constant 1 : index
      %149 = vector.load %arg14[%148, %c0_101, %c1_102] : memref<10x16x10xf32, #tpu.memory_space<vmem>>, vector<1x16x8xf32>
      %150 = vector.shape_cast %149 : vector<1x16x8xf32> to vector<16x8xf32>
      %c1_i32_103 = arith.constant 1 : i32
      %151 = arith.addi %arg16, %c1_i32_103 : i32
      %152 = arith.index_cast %151 : i32 to index
      %c0_104 = arith.constant 0 : index
      %c2_105 = arith.constant 2 : index
      %153 = vector.load %arg14[%152, %c0_104, %c2_105] : memref<10x16x10xf32, #tpu.memory_space<vmem>>, vector<1x16x8xf32>
      %154 = vector.shape_cast %153 : vector<1x16x8xf32> to vector<16x8xf32>
      %c2_i32_106 = arith.constant 2 : i32
      %155 = arith.addi %arg16, %c2_i32_106 : i32
      %156 = arith.index_cast %155 : i32 to index
      %c0_107 = arith.constant 0 : index
      %c0_108 = arith.constant 0 : index
      %157 = vector.load %arg14[%156, %c0_107, %c0_108] : memref<10x16x10xf32, #tpu.memory_space<vmem>>, vector<1x16x8xf32>
      %158 = vector.shape_cast %157 : vector<1x16x8xf32> to vector<16x8xf32>
      %c2_i32_109 = arith.constant 2 : i32
      %159 = arith.addi %arg16, %c2_i32_109 : i32
      %160 = arith.index_cast %159 : i32 to index
      %c0_110 = arith.constant 0 : index
      %c1_111 = arith.constant 1 : index
      %161 = vector.load %arg14[%160, %c0_110, %c1_111] : memref<10x16x10xf32, #tpu.memory_space<vmem>>, vector<1x16x8xf32>
      %162 = vector.shape_cast %161 : vector<1x16x8xf32> to vector<16x8xf32>
      %c2_i32_112 = arith.constant 2 : i32
      %163 = arith.addi %arg16, %c2_i32_112 : i32
      %164 = arith.index_cast %163 : i32 to index
      %c0_113 = arith.constant 0 : index
      %c2_114 = arith.constant 2 : index
      %165 = vector.load %arg14[%164, %c0_113, %c2_114] : memref<10x16x10xf32, #tpu.memory_space<vmem>>, vector<1x16x8xf32>
      %166 = vector.shape_cast %165 : vector<1x16x8xf32> to vector<16x8xf32>
      %167 = tpu.concatenate %134, %138, %142, %146, %150, %154, %158, %162, %166 in 0 : vector<16x8xf32>, vector<16x8xf32>, vector<16x8xf32>, vector<16x8xf32>, vector<16x8xf32>, vector<16x8xf32>, vector<16x8xf32>, vector<16x8xf32>, vector<16x8xf32> -> vector<144x8xf32>
      %c0_115 = arith.constant 0 : index
      %c0_116 = arith.constant 0 : index
      %c0_117 = arith.constant 0 : index
      %c0_118 = arith.constant 0 : index
      %168 = vector.load %arg8[%c0_115, %c0_116, %c0_117, %c0_118] : memref<2x2x8x144xbf16, #tpu.memory_space<vmem>>, vector<1x1x8x144xbf16>
      %169 = vector.shape_cast %168 : vector<1x1x8x144xbf16> to vector<8x144xbf16>
      %170 = arith.extf %169 : vector<8x144xbf16> to vector<8x144xf32>
      %cst_119 = arith.constant dense<0.000000e+00> : vector<8x8xf32>
      %171 = tpu.matmul %170, %167, %cst_119 {dimension_numbers = #tpu.dot_dimension_numbers<[1], [0], [0], [1], [0, 0, 1, 1], [], []>} : vector<8x144xf32>, vector<144x8xf32>, vector<8x8xf32> -> vector<8x8xf32>
      %c0_120 = arith.constant 0 : index
      %c1_121 = arith.constant 1 : index
      %c0_122 = arith.constant 0 : index
      %c0_123 = arith.constant 0 : index
      %172 = vector.load %arg8[%c0_120, %c1_121, %c0_122, %c0_123] : memref<2x2x8x144xbf16, #tpu.memory_space<vmem>>, vector<1x1x8x144xbf16>
      %173 = vector.shape_cast %172 : vector<1x1x8x144xbf16> to vector<8x144xbf16>
      %174 = arith.extf %173 : vector<8x144xbf16> to vector<8x144xf32>
      %cst_124 = arith.constant dense<0.000000e+00> : vector<8x8xf32>
      %175 = tpu.matmul %174, %167, %cst_124 {dimension_numbers = #tpu.dot_dimension_numbers<[1], [0], [0], [1], [0, 0, 1, 1], [], []>} : vector<8x144xf32>, vector<144x8xf32>, vector<8x8xf32> -> vector<8x8xf32>
      %cst_125 = arith.constant dense<0.000000e+00> : vector<8x16xf32>
      %176 = tpu.matmul %171, %107, %cst_125 {dimension_numbers = #tpu.dot_dimension_numbers<[1], [0], [0], [1], [0, 0, 1, 1], [], []>} : vector<8x8xf32>, vector<8x16xf32>, vector<8x16xf32> -> vector<8x16xf32>
      %cst_126 = arith.constant dense<0.000000e+00> : vector<8x16xf32>
      %177 = tpu.matmul %175, %114, %cst_126 {dimension_numbers = #tpu.dot_dimension_numbers<[1], [0], [0], [1], [0, 0, 1, 1], [], []>} : vector<8x8xf32>, vector<8x16xf32>, vector<8x16xf32> -> vector<8x16xf32>
      %178 = arith.addf %176, %177 : vector<8x16xf32>
      %c2_i32_127 = arith.constant 2 : i32
      %179 = arith.muli %c2_i32_127, %arg16 : i32
      %c0_i32_128 = arith.constant 0 : i32
      %180 = arith.addi %179, %c0_i32_128 : i32
      %181 = vector.broadcast %99 : vector<8x1xf32> to vector<8x16xf32>
      %182 = arith.mulf %178, %181 : vector<8x16xf32>
      %183 = vector.broadcast %100 : vector<8x1xf32> to vector<8x16xf32>
      %184 = arith.addf %182, %183 : vector<8x16xf32>
      %cst_129 = arith.constant 2.000000e-01 : f32
      %185 = vector.broadcast %cst_129 : f32 to vector<8x16xf32>
      %186 = arith.mulf %185, %184 : vector<8x16xf32>
      %187 = arith.maximumf %184, %186 : vector<8x16xf32>
      %c1_i32_130 = arith.constant 1 : i32
      %188 = arith.addi %c1_i32_130, %180 : i32
      %189 = arith.index_cast %188 : i32 to index
      %c0_131 = arith.constant 0 : index
      %c1_132 = arith.constant 1 : index
      %190 = vector.load %arg15[%189, %c0_131, %c1_132] : memref<18x8x18xf32, #tpu.memory_space<vmem>>, vector<1x8x16xf32>
      %191 = vector.shape_cast %190 : vector<1x8x16xf32> to vector<8x16xf32>
      %192 = vector.shape_cast %187 : vector<8x16xf32> to vector<1x8x16xf32>
      tpu.vector_store %arg15[%189, %c0_131, %c1_132], %192 {strides = array<i32>} : memref<18x8x18xf32, #tpu.memory_space<vmem>>, vector<1x8x16xf32>,
      %c1_133 = arith.constant 1 : index
      %c0_134 = arith.constant 0 : index
      %c0_135 = arith.constant 0 : index
      %c0_136 = arith.constant 0 : index
      %193 = vector.load %arg8[%c1_133, %c0_134, %c0_135, %c0_136] : memref<2x2x8x144xbf16, #tpu.memory_space<vmem>>, vector<1x1x8x144xbf16>
      %194 = vector.shape_cast %193 : vector<1x1x8x144xbf16> to vector<8x144xbf16>
      %195 = arith.extf %194 : vector<8x144xbf16> to vector<8x144xf32>
      %cst_137 = arith.constant dense<0.000000e+00> : vector<8x8xf32>
      %196 = tpu.matmul %195, %167, %cst_137 {dimension_numbers = #tpu.dot_dimension_numbers<[1], [0], [0], [1], [0, 0, 1, 1], [], []>} : vector<8x144xf32>, vector<144x8xf32>, vector<8x8xf32> -> vector<8x8xf32>
      %c1_138 = arith.constant 1 : index
      %c1_139 = arith.constant 1 : index
      %c0_140 = arith.constant 0 : index
      %c0_141 = arith.constant 0 : index
      %197 = vector.load %arg8[%c1_138, %c1_139, %c0_140, %c0_141] : memref<2x2x8x144xbf16, #tpu.memory_space<vmem>>, vector<1x1x8x144xbf16>
      %198 = vector.shape_cast %197 : vector<1x1x8x144xbf16> to vector<8x144xbf16>
      %199 = arith.extf %198 : vector<8x144xbf16> to vector<8x144xf32>
      %cst_142 = arith.constant dense<0.000000e+00> : vector<8x8xf32>
      %200 = tpu.matmul %199, %167, %cst_142 {dimension_numbers = #tpu.dot_dimension_numbers<[1], [0], [0], [1], [0, 0, 1, 1], [], []>} : vector<8x144xf32>, vector<144x8xf32>, vector<8x8xf32> -> vector<8x8xf32>
      %cst_143 = arith.constant dense<0.000000e+00> : vector<8x16xf32>
      %201 = tpu.matmul %196, %107, %cst_143 {dimension_numbers = #tpu.dot_dimension_numbers<[1], [0], [0], [1], [0, 0, 1, 1], [], []>} : vector<8x8xf32>, vector<8x16xf32>, vector<8x16xf32> -> vector<8x16xf32>
      %cst_144 = arith.constant dense<0.000000e+00> : vector<8x16xf32>
      %202 = tpu.matmul %200, %114, %cst_144 {dimension_numbers = #tpu.dot_dimension_numbers<[1], [0], [0], [1], [0, 0, 1, 1], [], []>} : vector<8x8xf32>, vector<8x16xf32>, vector<8x16xf32> -> vector<8x16xf32>
      %203 = arith.addf %201, %202 : vector<8x16xf32>
      %c2_i32_145 = arith.constant 2 : i32
      %204 = arith.muli %c2_i32_145, %arg16 : i32
      %c1_i32_146 = arith.constant 1 : i32
      %205 = arith.addi %204, %c1_i32_146 : i32
      %206 = vector.broadcast %99 : vector<8x1xf32> to vector<8x16xf32>
      %207 = arith.mulf %203, %206 : vector<8x16xf32>
      %208 = vector.broadcast %100 : vector<8x1xf32> to vector<8x16xf32>
      %209 = arith.addf %207, %208 : vector<8x16xf32>
      %cst_147 = arith.constant 2.000000e-01 : f32
      %210 = vector.broadcast %cst_147 : f32 to vector<8x16xf32>
      %211 = arith.mulf %210, %209 : vector<8x16xf32>
      %212 = arith.maximumf %209, %211 : vector<8x16xf32>
      %c1_i32_148 = arith.constant 1 : i32
      %213 = arith.addi %c1_i32_148, %205 : i32
      %214 = arith.index_cast %213 : i32 to index
      %c0_149 = arith.constant 0 : index
      %c1_150 = arith.constant 1 : index
      %215 = vector.load %arg15[%214, %c0_149, %c1_150] : memref<18x8x18xf32, #tpu.memory_space<vmem>>, vector<1x8x16xf32>
      %216 = vector.shape_cast %215 : vector<1x8x16xf32> to vector<8x16xf32>
      %217 = vector.shape_cast %212 : vector<8x16xf32> to vector<1x8x16xf32>
      tpu.vector_store %arg15[%214, %c0_149, %c1_150], %217 {strides = array<i32>} : memref<18x8x18xf32, #tpu.memory_space<vmem>>, vector<1x8x16xf32>,
    }
    %c8_i32_81 = arith.constant 8 : i32
    %116 = tpu.iota {dimensions = array<i32: 0>} : vector<16x32xi32>
    %117 = tpu.iota {dimensions = array<i32: 1>} : vector<16x32xi32>
    %c2_i32_82 = arith.constant 2 : i32
    %118 = vector.broadcast %c2_i32_82 : i32 to vector<16x32xi32>
    %119 = arith.muli %118, %116 : vector<16x32xi32>
    %120 = arith.cmpi eq, %117, %119 : vector<16x32xi32>
    %121 = arith.extui %120 : vector<16x32xi1> to vector<16x32xi32>
    %122 = arith.sitofp %121 : vector<16x32xi32> to vector<16x32xf32>
    %c2_i32_83 = arith.constant 2 : i32
    %123 = vector.broadcast %c2_i32_83 : i32 to vector<16x32xi32>
    %124 = arith.muli %123, %116 : vector<16x32xi32>
    %c1_i32_84 = arith.constant 1 : i32
    %125 = vector.broadcast %c1_i32_84 : i32 to vector<16x32xi32>
    %126 = arith.addi %124, %125 : vector<16x32xi32>
    %127 = arith.cmpi eq, %117, %126 : vector<16x32xi32>
    %128 = arith.extui %127 : vector<16x32xi1> to vector<16x32xi32>
    %129 = arith.sitofp %128 : vector<16x32xi32> to vector<16x32xf32>
    %c0_i32_85 = arith.constant 0 : i32
    %c16_i32 = arith.constant 16 : i32
    %130 = arith.addi %c0_i32_85, %c16_i32 : i32
    %c1_i32_86 = arith.constant 1 : i32
    scf.for %arg16 = %c0_i32_85 to %130 step %c1_i32_86  : i32 {
      %c0_i32_88 = arith.constant 0 : i32
      %131 = arith.addi %arg16, %c0_i32_88 : i32
      %132 = arith.index_cast %131 : i32 to index
      %c0_89 = arith.constant 0 : index
      %c0_90 = arith.constant 0 : index
      %133 = vector.load %arg15[%132, %c0_89, %c0_90] : memref<18x8x18xf32, #tpu.memory_space<vmem>>, vector<1x8x16xf32>
      %134 = vector.shape_cast %133 : vector<1x8x16xf32> to vector<8x16xf32>
      %c0_i32_91 = arith.constant 0 : i32
      %135 = arith.addi %arg16, %c0_i32_91 : i32
      %136 = arith.index_cast %135 : i32 to index
      %c0_92 = arith.constant 0 : index
      %c1_93 = arith.constant 1 : index
      %137 = vector.load %arg15[%136, %c0_92, %c1_93] : memref<18x8x18xf32, #tpu.memory_space<vmem>>, vector<1x8x16xf32>
      %138 = vector.shape_cast %137 : vector<1x8x16xf32> to vector<8x16xf32>
      %c0_i32_94 = arith.constant 0 : i32
      %139 = arith.addi %arg16, %c0_i32_94 : i32
      %140 = arith.index_cast %139 : i32 to index
      %c0_95 = arith.constant 0 : index
      %c2_96 = arith.constant 2 : index
      %141 = vector.load %arg15[%140, %c0_95, %c2_96] : memref<18x8x18xf32, #tpu.memory_space<vmem>>, vector<1x8x16xf32>
      %142 = vector.shape_cast %141 : vector<1x8x16xf32> to vector<8x16xf32>
      %c1_i32_97 = arith.constant 1 : i32
      %143 = arith.addi %arg16, %c1_i32_97 : i32
      %144 = arith.index_cast %143 : i32 to index
      %c0_98 = arith.constant 0 : index
      %c0_99 = arith.constant 0 : index
      %145 = vector.load %arg15[%144, %c0_98, %c0_99] : memref<18x8x18xf32, #tpu.memory_space<vmem>>, vector<1x8x16xf32>
      %146 = vector.shape_cast %145 : vector<1x8x16xf32> to vector<8x16xf32>
      %c1_i32_100 = arith.constant 1 : i32
      %147 = arith.addi %arg16, %c1_i32_100 : i32
      %148 = arith.index_cast %147 : i32 to index
      %c0_101 = arith.constant 0 : index
      %c1_102 = arith.constant 1 : index
      %149 = vector.load %arg15[%148, %c0_101, %c1_102] : memref<18x8x18xf32, #tpu.memory_space<vmem>>, vector<1x8x16xf32>
      %150 = vector.shape_cast %149 : vector<1x8x16xf32> to vector<8x16xf32>
      %c1_i32_103 = arith.constant 1 : i32
      %151 = arith.addi %arg16, %c1_i32_103 : i32
      %152 = arith.index_cast %151 : i32 to index
      %c0_104 = arith.constant 0 : index
      %c2_105 = arith.constant 2 : index
      %153 = vector.load %arg15[%152, %c0_104, %c2_105] : memref<18x8x18xf32, #tpu.memory_space<vmem>>, vector<1x8x16xf32>
      %154 = vector.shape_cast %153 : vector<1x8x16xf32> to vector<8x16xf32>
      %c2_i32_106 = arith.constant 2 : i32
      %155 = arith.addi %arg16, %c2_i32_106 : i32
      %156 = arith.index_cast %155 : i32 to index
      %c0_107 = arith.constant 0 : index
      %c0_108 = arith.constant 0 : index
      %157 = vector.load %arg15[%156, %c0_107, %c0_108] : memref<18x8x18xf32, #tpu.memory_space<vmem>>, vector<1x8x16xf32>
      %158 = vector.shape_cast %157 : vector<1x8x16xf32> to vector<8x16xf32>
      %c2_i32_109 = arith.constant 2 : i32
      %159 = arith.addi %arg16, %c2_i32_109 : i32
      %160 = arith.index_cast %159 : i32 to index
      %c0_110 = arith.constant 0 : index
      %c1_111 = arith.constant 1 : index
      %161 = vector.load %arg15[%160, %c0_110, %c1_111] : memref<18x8x18xf32, #tpu.memory_space<vmem>>, vector<1x8x16xf32>
      %162 = vector.shape_cast %161 : vector<1x8x16xf32> to vector<8x16xf32>
      %c2_i32_112 = arith.constant 2 : i32
      %163 = arith.addi %arg16, %c2_i32_112 : i32
      %164 = arith.index_cast %163 : i32 to index
      %c0_113 = arith.constant 0 : index
      %c2_114 = arith.constant 2 : index
      %165 = vector.load %arg15[%164, %c0_113, %c2_114] : memref<18x8x18xf32, #tpu.memory_space<vmem>>, vector<1x8x16xf32>
      %166 = vector.shape_cast %165 : vector<1x8x16xf32> to vector<8x16xf32>
      %167 = tpu.concatenate %134, %138, %142, %146, %150, %154, %158, %162, %166 in 0 : vector<8x16xf32>, vector<8x16xf32>, vector<8x16xf32>, vector<8x16xf32>, vector<8x16xf32>, vector<8x16xf32>, vector<8x16xf32>, vector<8x16xf32>, vector<8x16xf32> -> vector<72x16xf32>
      %c0_115 = arith.constant 0 : index
      %c0_116 = arith.constant 0 : index
      %c0_117 = arith.constant 0 : index
      %c0_118 = arith.constant 0 : index
      %168 = vector.load %arg11[%c0_115, %c0_116, %c0_117, %c0_118] : memref<2x2x1x72xbf16, #tpu.memory_space<vmem>>, vector<1x1x1x72xbf16>
      %169 = vector.shape_cast %168 : vector<1x1x1x72xbf16> to vector<1x72xbf16>
      %170 = arith.extf %169 : vector<1x72xbf16> to vector<1x72xf32>
      %cst_119 = arith.constant dense<0.000000e+00> : vector<1x16xf32>
      %171 = tpu.matmul %170, %167, %cst_119 {dimension_numbers = #tpu.dot_dimension_numbers<[1], [0], [0], [1], [0, 0, 1, 1], [], []>} : vector<1x72xf32>, vector<72x16xf32>, vector<1x16xf32> -> vector<1x16xf32>
      %c0_120 = arith.constant 0 : index
      %c1_121 = arith.constant 1 : index
      %c0_122 = arith.constant 0 : index
      %c0_123 = arith.constant 0 : index
      %172 = vector.load %arg11[%c0_120, %c1_121, %c0_122, %c0_123] : memref<2x2x1x72xbf16, #tpu.memory_space<vmem>>, vector<1x1x1x72xbf16>
      %173 = vector.shape_cast %172 : vector<1x1x1x72xbf16> to vector<1x72xbf16>
      %174 = arith.extf %173 : vector<1x72xbf16> to vector<1x72xf32>
      %cst_124 = arith.constant dense<0.000000e+00> : vector<1x16xf32>
      %175 = tpu.matmul %174, %167, %cst_124 {dimension_numbers = #tpu.dot_dimension_numbers<[1], [0], [0], [1], [0, 0, 1, 1], [], []>} : vector<1x72xf32>, vector<72x16xf32>, vector<1x16xf32> -> vector<1x16xf32>
      %cst_125 = arith.constant dense<0.000000e+00> : vector<1x32xf32>
      %176 = tpu.matmul %171, %122, %cst_125 {dimension_numbers = #tpu.dot_dimension_numbers<[1], [0], [0], [1], [0, 0, 1, 1], [], []>} : vector<1x16xf32>, vector<16x32xf32>, vector<1x32xf32> -> vector<1x32xf32>
      %cst_126 = arith.constant dense<0.000000e+00> : vector<1x32xf32>
      %177 = tpu.matmul %175, %129, %cst_126 {dimension_numbers = #tpu.dot_dimension_numbers<[1], [0], [0], [1], [0, 0, 1, 1], [], []>} : vector<1x16xf32>, vector<16x32xf32>, vector<1x32xf32> -> vector<1x32xf32>
      %178 = arith.addf %176, %177 : vector<1x32xf32>
      %c2_i32_127 = arith.constant 2 : i32
      %179 = arith.muli %c2_i32_127, %arg16 : i32
      %c0_i32_128 = arith.constant 0 : i32
      %180 = arith.addi %179, %c0_i32_128 : i32
      %181 = math.tanh %178 : vector<1x32xf32>
      %c0_129 = arith.constant 0 : index
      %182 = arith.index_cast %180 : i32 to index
      %c0_130 = arith.constant 0 : index
      %c0_131 = arith.constant 0 : index
      %183 = vector.load %arg12[%c0_129, %182, %c0_130, %c0_131] : memref<1x32x1x32xf32, #tpu.memory_space<vmem>>, vector<1x1x1x32xf32>
      %184 = vector.shape_cast %183 : vector<1x1x1x32xf32> to vector<1x32xf32>
      %185 = vector.shape_cast %181 : vector<1x32xf32> to vector<1x1x1x32xf32>
      tpu.vector_store %arg12[%c0_129, %182, %c0_130, %c0_131], %185 {strides = array<i32>} : memref<1x32x1x32xf32, #tpu.memory_space<vmem>>, vector<1x1x1x32xf32>,
      %c1_132 = arith.constant 1 : index
      %c0_133 = arith.constant 0 : index
      %c0_134 = arith.constant 0 : index
      %c0_135 = arith.constant 0 : index
      %186 = vector.load %arg11[%c1_132, %c0_133, %c0_134, %c0_135] : memref<2x2x1x72xbf16, #tpu.memory_space<vmem>>, vector<1x1x1x72xbf16>
      %187 = vector.shape_cast %186 : vector<1x1x1x72xbf16> to vector<1x72xbf16>
      %188 = arith.extf %187 : vector<1x72xbf16> to vector<1x72xf32>
      %cst_136 = arith.constant dense<0.000000e+00> : vector<1x16xf32>
      %189 = tpu.matmul %188, %167, %cst_136 {dimension_numbers = #tpu.dot_dimension_numbers<[1], [0], [0], [1], [0, 0, 1, 1], [], []>} : vector<1x72xf32>, vector<72x16xf32>, vector<1x16xf32> -> vector<1x16xf32>
      %c1_137 = arith.constant 1 : index
      %c1_138 = arith.constant 1 : index
      %c0_139 = arith.constant 0 : index
      %c0_140 = arith.constant 0 : index
      %190 = vector.load %arg11[%c1_137, %c1_138, %c0_139, %c0_140] : memref<2x2x1x72xbf16, #tpu.memory_space<vmem>>, vector<1x1x1x72xbf16>
      %191 = vector.shape_cast %190 : vector<1x1x1x72xbf16> to vector<1x72xbf16>
      %192 = arith.extf %191 : vector<1x72xbf16> to vector<1x72xf32>
      %cst_141 = arith.constant dense<0.000000e+00> : vector<1x16xf32>
      %193 = tpu.matmul %192, %167, %cst_141 {dimension_numbers = #tpu.dot_dimension_numbers<[1], [0], [0], [1], [0, 0, 1, 1], [], []>} : vector<1x72xf32>, vector<72x16xf32>, vector<1x16xf32> -> vector<1x16xf32>
      %cst_142 = arith.constant dense<0.000000e+00> : vector<1x32xf32>
      %194 = tpu.matmul %189, %122, %cst_142 {dimension_numbers = #tpu.dot_dimension_numbers<[1], [0], [0], [1], [0, 0, 1, 1], [], []>} : vector<1x16xf32>, vector<16x32xf32>, vector<1x32xf32> -> vector<1x32xf32>
      %cst_143 = arith.constant dense<0.000000e+00> : vector<1x32xf32>
      %195 = tpu.matmul %193, %129, %cst_143 {dimension_numbers = #tpu.dot_dimension_numbers<[1], [0], [0], [1], [0, 0, 1, 1], [], []>} : vector<1x16xf32>, vector<16x32xf32>, vector<1x32xf32> -> vector<1x32xf32>
      %196 = arith.addf %194, %195 : vector<1x32xf32>
      %c2_i32_144 = arith.constant 2 : i32
      %197 = arith.muli %c2_i32_144, %arg16 : i32
      %c1_i32_145 = arith.constant 1 : i32
      %198 = arith.addi %197, %c1_i32_145 : i32
      %199 = math.tanh %196 : vector<1x32xf32>
      %c0_146 = arith.constant 0 : index
      %200 = arith.index_cast %198 : i32 to index
      %c0_147 = arith.constant 0 : index
      %c0_148 = arith.constant 0 : index
      %201 = vector.load %arg12[%c0_146, %200, %c0_147, %c0_148] : memref<1x32x1x32xf32, #tpu.memory_space<vmem>>, vector<1x1x1x32xf32>
      %202 = vector.shape_cast %201 : vector<1x1x1x32xf32> to vector<1x32xf32>
      %203 = vector.shape_cast %199 : vector<1x32xf32> to vector<1x1x1x32xf32>
      tpu.vector_store %arg12[%c0_146, %200, %c0_147, %c0_148], %203 {strides = array<i32>} : memref<1x32x1x32xf32, #tpu.memory_space<vmem>>, vector<1x1x1x32xf32>,
    }
    %c16_i32_87 = arith.constant 16 : i32
    return
  }
  func.func @transform_0(%arg0: i32) -> (i32, i32, i32) {
    %c0_i32 = arith.constant 0 : i32
    %c0_i32_0 = arith.constant 0 : i32
    %c0_i32_1 = arith.constant 0 : i32
    return %arg0, %c0_i32, %c0_i32_0 : i32, i32, i32
  }
  func.func @transform_1(%arg0: i32) -> (i32, i32) {
    %c0_i32 = arith.constant 0 : i32
    %c0_i32_0 = arith.constant 0 : i32
    %c0_i32_1 = arith.constant 0 : i32
    return %c0_i32, %c0_i32_0 : i32, i32
  }
  func.func @transform_2(%arg0: i32) -> (i32, i32) {
    %c0_i32 = arith.constant 0 : i32
    %c0_i32_0 = arith.constant 0 : i32
    %c0_i32_1 = arith.constant 0 : i32
    return %c0_i32, %c0_i32_0 : i32, i32
  }
  func.func @transform_3(%arg0: i32) -> (i32, i32) {
    %c0_i32 = arith.constant 0 : i32
    %c0_i32_0 = arith.constant 0 : i32
    %c0_i32_1 = arith.constant 0 : i32
    return %c0_i32, %c0_i32_0 : i32, i32
  }
  func.func @transform_4(%arg0: i32) -> (i32, i32, i32, i32) {
    %c0_i32 = arith.constant 0 : i32
    %c0_i32_0 = arith.constant 0 : i32
    %c0_i32_1 = arith.constant 0 : i32
    %c0_i32_2 = arith.constant 0 : i32
    %c0_i32_3 = arith.constant 0 : i32
    return %c0_i32, %c0_i32_0, %c0_i32_1, %c0_i32_2 : i32, i32, i32, i32
  }
  func.func @transform_5(%arg0: i32) -> (i32, i32) {
    %c0_i32 = arith.constant 0 : i32
    %c0_i32_0 = arith.constant 0 : i32
    %c0_i32_1 = arith.constant 0 : i32
    return %c0_i32, %c0_i32_0 : i32, i32
  }
  func.func @transform_6(%arg0: i32) -> (i32, i32) {
    %c0_i32 = arith.constant 0 : i32
    %c0_i32_0 = arith.constant 0 : i32
    %c0_i32_1 = arith.constant 0 : i32
    return %c0_i32, %c0_i32_0 : i32, i32
  }
  func.func @transform_7(%arg0: i32) -> (i32, i32, i32, i32) {
    %c0_i32 = arith.constant 0 : i32
    %c0_i32_0 = arith.constant 0 : i32
    %c0_i32_1 = arith.constant 0 : i32
    %c0_i32_2 = arith.constant 0 : i32
    %c0_i32_3 = arith.constant 0 : i32
    return %c0_i32, %c0_i32_0, %c0_i32_1, %c0_i32_2 : i32, i32, i32, i32
  }
  func.func @transform_8(%arg0: i32) -> (i32, i32) {
    %c0_i32 = arith.constant 0 : i32
    %c0_i32_0 = arith.constant 0 : i32
    %c0_i32_1 = arith.constant 0 : i32
    return %c0_i32, %c0_i32_0 : i32, i32
  }
  func.func @transform_9(%arg0: i32) -> (i32, i32) {
    %c0_i32 = arith.constant 0 : i32
    %c0_i32_0 = arith.constant 0 : i32
    %c0_i32_1 = arith.constant 0 : i32
    return %c0_i32, %c0_i32_0 : i32, i32
  }
  func.func @transform_10(%arg0: i32) -> (i32, i32, i32, i32) {
    %c0_i32 = arith.constant 0 : i32
    %c0_i32_0 = arith.constant 0 : i32
    %c0_i32_1 = arith.constant 0 : i32
    %c0_i32_2 = arith.constant 0 : i32
    %c0_i32_3 = arith.constant 0 : i32
    return %c0_i32, %c0_i32_0, %c0_i32_1, %c0_i32_2 : i32, i32, i32, i32
  }
  func.func @transform_11(%arg0: i32) -> (i32, i32, i32, i32) {
    %c0_i32 = arith.constant 0 : i32
    %c0_i32_0 = arith.constant 0 : i32
    %c0_i32_1 = arith.constant 0 : i32
    %c0_i32_2 = arith.constant 0 : i32
    return %arg0, %c0_i32, %c0_i32_0, %c0_i32_1 : i32, i32, i32, i32
  }
}

</mosaic_0001>

<llo_original>
// kernel: generator_forward.1
$region0: #{generator_forward.1}
  #allocation0 [shape = 'u32[]', space=smem, size = 0x4, offset = 0x4, fixed_abs, tag = 'smem constant byte address 0x4 - core index']
  #allocation1 [shape = 'u32[144,128]{1,0:T(1,128)}', space=vmem, size = 0x12000, scoped, tag = 'internal scratch']
  #allocation2 [shape = 'f32[6,32,6]{2,1,0:T(8,128)}', space=vmem, size = 0x18000, scoped, tag = 'scratch operand']
  #allocation3 [shape = 'f32[10,16,10]{2,1,0:T(8,128)}', space=vmem, size = 0x14000, scoped, tag = 'scratch operand']
  #allocation4 [shape = 'f32[18,8,18]{2,1,0:T(8,128)}', space=vmem, size = 0x12000, scoped, tag = 'scratch operand']
  %s0 = inlined_call_operand.vmem [shape: f32[2,16,1], index: 0, kind: input, shape index: {}]
  %s1 = inlined_call_operand.vmem [shape: bf16[512,16], index: 1, kind: input, shape index: {}]
  %s2 = inlined_call_operand.vmem [shape: f32[512,1], index: 2, kind: input, shape index: {}]
  %s3 = inlined_call_operand.vmem [shape: f32[512,1], index: 3, kind: input, shape index: {}]
  %s4 = inlined_call_operand.vmem [shape: bf16[2,2,16,288], index: 4, kind: input, shape index: {}]
  %s5 = inlined_call_operand.vmem [shape: f32[16,1], index: 5, kind: input, shape index: {}]
  %s6 = inlined_call_operand.vmem [shape: f32[16,1], index: 6, kind: input, shape index: {}]
  %s7 = inlined_call_operand.vmem [shape: bf16[2,2,8,144], index: 7, kind: input, shape index: {}]
  %s8 = inlined_call_operand.vmem [shape: f32[8,1], index: 8, kind: input, shape index: {}]
  %s9 = inlined_call_operand.vmem [shape: f32[8,1], index: 9, kind: input, shape index: {}]
  %s10 = inlined_call_operand.vmem [shape: bf16[2,2,1,72], index: 10, kind: input, shape index: {}]
  %s11 = inlined_call_operand.hbm [shape: f32[2,32,1,32], index: 11, kind: output, shape index: {}]
  %s12 = sld [smem:[#allocation0]]
  $region98: #{generator_forward.1} parent=0
    _
  %s14 = ssub.s32 1, %s12
  %s15 = scalar_select 0, %s14, %s12
  $region1: #{generator_forward.1} parent=0
    #allocation5 [shape = 'u8[32768]{0}', space=vmem, size = 0x8000, scoped, tag = 'output window, operand 0']
    #allocation6 [shape = 's32[2]{0}', space=sflag, size = 0x8, scoped, tag = 'scoped memory for generator_forward.1']
    %16 = vsyncpa [#allocation6], 0
    %s17 = scalar_lea.sflag [#allocation6], 1
    %18 = vsyncpa %s17, 0
    loop: start=0, step=1, limit=4
    $region2: #{generator_forward.1} parent=1 // loop_pre_header
      _
    $region3: #{generator_forward.1} parent=1 // loop_header
      %s20 = sphi 0, %s24
      %p21 = scmp.ge.s32.totalorder %s20, 4
      %s30 = sphi 0, %s32
      %s33 = sphi 0, %s30
      %s34 = sphi 0, %s33
      %s50 = sphi 0, %s34
      %s54 = sphi 0, %s54
      %s56 = sphi 0, %s54
      %s57 = sphi 0, %s56
      %s71 = sphi 0, %s57
      %s75 = sphi 0, %s75
      %s77 = sphi 0, %s75
      %s78 = sphi 0, %s77
      %s92 = sphi 0, %s78
      %s96 = sphi 0, %s96
      %s98 = sphi 0, %s96
      %s99 = sphi 0, %s98
      %s113 = sphi 0, %s99
      %s117 = sphi 0, %s117
      %s119 = sphi 0, %s117
      %s120 = sphi 0, %s119
      %s134 = sphi 0, %s120
      %s138 = sphi 0, %s138
      %s140 = sphi 0, %s138
      %s141 = sphi 0, %s140
      %s155 = sphi 0, %s141
      %s159 = sphi 0, %s159
      %s161 = sphi 0, %s159
      %s162 = sphi 0, %s161
      %s176 = sphi 0, %s162
      %s180 = sphi 0, %s180
      %s182 = sphi 0, %s180
      %s183 = sphi 0, %s182
      %s197 = sphi 0, %s183
      %s201 = sphi 0, %s201
      %s203 = sphi 0, %s201
      %s204 = sphi 0, %s203
      %s218 = sphi 0, %s204
      %s222 = sphi 0, %s222
      %s224 = sphi 0, %s222
      %s225 = sphi 0, %s224
      %s239 = sphi 0, %s225
      %s243 = sphi 0, %s243
      %s245 = sphi 0, %s243
      %s246 = sphi 0, %s245
      %s260 = sphi 0, %s246
      %s266 = sphi 0, %s268
      %s269 = sphi 0, %s266
      %s270 = sphi 0, %s269
      %s286 = sphi 0, %s270
    $region4: #{generator_forward.1} parent=1 // loop_header_branch
      %23 = sbr.rel (%p21) target = $region8
    $region5: #{generator_forward.1} parent=1 // loop_body
      %s25 = ssub.s32 %s20, 1
      %s26 = ssub.s32 %s20, 2
      %s27 = sadd.s32 %s20, 1
      %s28 = ssub.s32 %s20, %s27
      %p29 = scmp.eq.s32.totalorder %s28, 0
      %s31 = sadd.s32 %s30, 1
      %s32 = scalar_select %p29, %s30, %s31
      %p35 = pneg %p29
      %p36 = scmp.eq.s32.totalorder %s20, 1
      %p37 = por %p35, %p36
      %p38 = scmp.ne.s32.totalorder %s30, %s33
      %p39 = scmp.eq.s32.totalorder %s20, 0
      %p40 = por %p38, %p39
      %p41 = scmp.ne.s32.totalorder %s30, %s33
      %p42 = scmp.eq.s32.totalorder %s25, 1
      %p43 = por %p41, %p42
      %p44 = scmp.ne.s32.totalorder %s33, %s34
      %p45 = scmp.eq.s32.totalorder %s25, 0
      %p46 = por %p44, %p45
      %p47 = scmp.ne.s32.totalorder %s33, %s34
      %p48 = scmp.eq.s32.totalorder %s26, 1
      %p49 = por %p47, %p48
      %p51 = scmp.ne.s32.totalorder %s34, %s50
      %p52 = scmp.eq.s32.totalorder %s26, 0
      %p53 = por %p51, %p52
      %s55 = sadd.s32 %s54, 1
      %p58 = scmp.eq.s32.totalorder %s20, 1
      %p59 = scmp.ne.s32.totalorder %s54, %s56
      %p60 = scmp.eq.s32.totalorder %s20, 0
      %p61 = por %p59, %p60
      %p62 = scmp.ne.s32.totalorder %s54, %s56
      %p63 = scmp.eq.s32.totalorder %s25, 1
      %p64 = por %p62, %p63
      %p65 = scmp.ne.s32.totalorder %s56, %s57
      %p66 = scmp.eq.s32.totalorder %s25, 0
      %p67 = por %p65, %p66
      %p68 = scmp.ne.s32.totalorder %s56, %s57
      %p69 = scmp.eq.s32.totalorder %s26, 1
      %p70 = por %p68, %p69
      %p72 = scmp.ne.s32.totalorder %s57, %s71
      %p73 = scmp.eq.s32.totalorder %s26, 0
      %p74 = por %p72, %p73
      %s76 = sadd.s32 %s75, 1
      %p79 = scmp.eq.s32.totalorder %s20, 1
      %p80 = scmp.ne.s32.totalorder %s75, %s77
      %p81 = scmp.eq.s32.totalorder %s20, 0
      %p82 = por %p80, %p81
      %p83 = scmp.ne.s32.totalorder %s75, %s77
      %p84 = scmp.eq.s32.totalorder %s25, 1
      %p85 = por %p83, %p84
      %p86 = scmp.ne.s32.totalorder %s77, %s78
      %p87 = scmp.eq.s32.totalorder %s25, 0
      %p88 = por %p86, %p87
      %p89 = scmp.ne.s32.totalorder %s77, %s78
      %p90 = scmp.eq.s32.totalorder %s26, 1
      %p91 = por %p89, %p90
      %p93 = scmp.ne.s32.totalorder %s78, %s92
      %p94 = scmp.eq.s32.totalorder %s26, 0
      %p95 = por %p93, %p94
      %s97 = sadd.s32 %s96, 1
      %p100 = scmp.eq.s32.totalorder %s20, 1
      %p101 = scmp.ne.s32.totalorder %s96, %s98
      %p102 = scmp.eq.s32.totalorder %s20, 0
      %p103 = por %p101, %p102
      %p104 = scmp.ne.s32.totalorder %s96, %s98
      %p105 = scmp.eq.s32.totalorder %s25, 1
      %p106 = por %p104, %p105
      %p107 = scmp.ne.s32.totalorder %s98, %s99
      %p108 = scmp.eq.s32.totalorder %s25, 0
      %p109 = por %p107, %p108
      %p110 = scmp.ne.s32.totalorder %s98, %s99
      %p111 = scmp.eq.s32.totalorder %s26, 1
      %p112 = por %p110, %p111
      %p114 = scmp.ne.s32.totalorder %s99, %s113
      %p115 = scmp.eq.s32.totalorder %s26, 0
      %p116 = por %p114, %p115
      %s118 = sadd.s32 %s117, 1
      %p121 = scmp.eq.s32.totalorder %s20, 1
      %p122 = scmp.ne.s32.totalorder %s117, %s119
      %p123 = scmp.eq.s32.totalorder %s20, 0
      %p124 = por %p122, %p123
      %p125 = scmp.ne.s32.totalorder %s117, %s119
      %p126 = scmp.eq.s32.totalorder %s25, 1
      %p127 = por %p125, %p126
      %p128 = scmp.ne.s32.totalorder %s119, %s120
      %p129 = scmp.eq.s32.totalorder %s25, 0
      %p130 = por %p128, %p129
      %p131 = scmp.ne.s32.totalorder %s119, %s120
      %p132 = scmp.eq.s32.totalorder %s26, 1
      %p133 = por %p131, %p132
      %p135 = scmp.ne.s32.totalorder %s120, %s134
      %p136 = scmp.eq.s32.totalorder %s26, 0
      %p137 = por %p135, %p136
      %s139 = sadd.s32 %s138, 1
      %p142 = scmp.eq.s32.totalorder %s20, 1
      %p143 = scmp.ne.s32.totalorder %s138, %s140
      %p144 = scmp.eq.s32.totalorder %s20, 0
      %p145 = por %p143, %p144
      %p146 = scmp.ne.s32.totalorder %s138, %s140
      %p147 = scmp.eq.s32.totalorder %s25, 1
      %p148 = por %p146, %p147
      %p149 = scmp.ne.s32.totalorder %s140, %s141
      %p150 = scmp.eq.s32.totalorder %s25, 0
      %p151 = por %p149, %p150
      %p152 = scmp.ne.s32.totalorder %s140, %s141
      %p153 = scmp.eq.s32.totalorder %s26, 1
      %p154 = por %p152, %p153
      %p156 = scmp.ne.s32.totalorder %s141, %s155
      %p157 = scmp.eq.s32.totalorder %s26, 0
      %p158 = por %p156, %p157
      %s160 = sadd.s32 %s159, 1
      %p163 = scmp.eq.s32.totalorder %s20, 1
      %p164 = scmp.ne.s32.totalorder %s159, %s161
      %p165 = scmp.eq.s32.totalorder %s20, 0
      %p166 = por %p164, %p165
      %p167 = scmp.ne.s32.totalorder %s159, %s161
      %p168 = scmp.eq.s32.totalorder %s25, 1
      %p169 = por %p167, %p168
      %p170 = scmp.ne.s32.totalorder %s161, %s162
      %p171 = scmp.eq.s32.totalorder %s25, 0
      %p172 = por %p170, %p171
      %p173 = scmp.ne.s32.totalorder %s161, %s162
      %p174 = scmp.eq.s32.totalorder %s26, 1
      %p175 = por %p173, %p174
      %p177 = scmp.ne.s32.totalorder %s162, %s176
      %p178 = scmp.eq.s32.totalorder %s26, 0
      %p179 = por %p177, %p178
      %s181 = sadd.s32 %s180, 1
      %p184 = scmp.eq.s32.totalorder %s20, 1
      %p185 = scmp.ne.s32.totalorder %s180, %s182
      %p186 = scmp.eq.s32.totalorder %s20, 0
      %p187 = por %p185, %p186
      %p188 = scmp.ne.s32.totalorder %s180, %s182
      %p189 = scmp.eq.s32.totalorder %s25, 1
      %p190 = por %p188, %p189
      %p191 = scmp.ne.s32.totalorder %s182, %s183
      %p192 = scmp.eq.s32.totalorder %s25, 0
      %p193 = por %p191, %p192
      %p194 = scmp.ne.s32.totalorder %s182, %s183
      %p195 = scmp.eq.s32.totalorder %s26, 1
      %p196 = por %p194, %p195
      %p198 = scmp.ne.s32.totalorder %s183, %s197
      %p199 = scmp.eq.s32.totalorder %s26, 0
      %p200 = por %p198, %p199
      %s202 = sadd.s32 %s201, 1
      %p205 = scmp.eq.s32.totalorder %s20, 1
      %p206 = scmp.ne.s32.totalorder %s201, %s203
      %p207 = scmp.eq.s32.totalorder %s20, 0
      %p208 = por %p206, %p207
      %p209 = scmp.ne.s32.totalorder %s201, %s203
      %p210 = scmp.eq.s32.totalorder %s25, 1
      %p211 = por %p209, %p210
      %p212 = scmp.ne.s32.totalorder %s203, %s204
      %p213 = scmp.eq.s32.totalorder %s25, 0
      %p214 = por %p212, %p213
      %p215 = scmp.ne.s32.totalorder %s203, %s204
      %p216 = scmp.eq.s32.totalorder %s26, 1
      %p217 = por %p215, %p216
      %p219 = scmp.ne.s32.totalorder %s204, %s218
      %p220 = scmp.eq.s32.totalorder %s26, 0
      %p221 = por %p219, %p220
      %s223 = sadd.s32 %s222, 1
      %p226 = scmp.eq.s32.totalorder %s20, 1
      %p227 = scmp.ne.s32.totalorder %s222, %s224
      %p228 = scmp.eq.s32.totalorder %s20, 0
      %p229 = por %p227, %p228
      %p230 = scmp.ne.s32.totalorder %s222, %s224
      %p231 = scmp.eq.s32.totalorder %s25, 1
      %p232 = por %p230, %p231
      %p233 = scmp.ne.s32.totalorder %s224, %s225
      %p234 = scmp.eq.s32.totalorder %s25, 0
      %p235 = por %p233, %p234
      %p236 = scmp.ne.s32.totalorder %s224, %s225
      %p237 = scmp.eq.s32.totalorder %s26, 1
      %p238 = por %p236, %p237
      %p240 = scmp.ne.s32.totalorder %s225, %s239
      %p241 = scmp.eq.s32.totalorder %s26, 0
      %p242 = por %p240, %p241
      %s244 = sadd.s32 %s243, 1
      %p247 = scmp.eq.s32.totalorder %s20, 1
      %p248 = scmp.ne.s32.totalorder %s243, %s245
      %p249 = scmp.eq.s32.totalorder %s20, 0
      %p250 = por %p248, %p249
      %p251 = scmp.ne.s32.totalorder %s243, %s245
      %p252 = scmp.eq.s32.totalorder %s25, 1
      %p253 = por %p251, %p252
      %p254 = scmp.ne.s32.totalorder %s245, %s246
      %p255 = scmp.eq.s32.totalorder %s25, 0
      %p256 = por %p254, %p255
      %p257 = scmp.ne.s32.totalorder %s245, %s246
      %p258 = scmp.eq.s32.totalorder %s26, 1
      %p259 = por %p257, %p258
      %p261 = scmp.ne.s32.totalorder %s246, %s260
      %p262 = scmp.eq.s32.totalorder %s26, 0
      %p263 = por %p261, %p262
      %s264 = ssub.s32 %s20, %s27
      %p265 = scmp.eq.s32.totalorder %s264, 0
      %s267 = sadd.s32 %s266, 1
      %s268 = scalar_select %p265, %s266, %s267
      %p271 = pneg %p265
      %p272 = scmp.eq.s32.totalorder %s20, 1
      %p273 = por %p271, %p272
      %p274 = scmp.ne.s32.totalorder %s266, %s269
      %p275 = scmp.eq.s32.totalorder %s20, 0
      %p276 = por %p274, %p275
      %p277 = scmp.ne.s32.totalorder %s266, %s269
      %p278 = scmp.eq.s32.totalorder %s25, 1
      %p279 = por %p277, %p278
      %p280 = scmp.ne.s32.totalorder %s269, %s270
      %p281 = scmp.eq.s32.totalorder %s25, 0
      %p282 = por %p280, %p281
      %p283 = scmp.ne.s32.totalorder %s269, %s270
      %p284 = scmp.eq.s32.totalorder %s26, 1
      %p285 = por %p283, %p284
      %p287 = scmp.ne.s32.totalorder %s270, %s286
      %p288 = scmp.eq.s32.totalorder %s26, 0
      %p289 = por %p287, %p288
      %p290 = scmp.le.s32.totalorder 1, %s20
      %p291 = scmp.lt.s32.totalorder %s20, 3
      %p292 = pnand %p290, %p291
      %p293 = pneg %p292
      // Predicated region
      $region9: #{generator_forward.1} parent=5 // pred_check
        _
      $region10: #{generator_forward.1} parent=5 // pred_check_branch
        %295 = sbr.rel (%p292) target = $region12
      $region11: #{generator_forward.1} parent=5 // pred_region
        %s296 = ssub.s32 %s20, 1
        // Predicated region
        $region13: #{generator_forward.1} parent=11 // pred_check
          %p297 = pneg %p67
        $region14: #{generator_forward.1} parent=11 // pred_check_branch
          %299 = sbr.rel (%p297) target = $region16
        $region15: #{generator_forward.1} parent=11 // pred_region
          _
        $region16: #{generator_forward.1} parent=11 // pred_fallthru
          _
        // Predicated region
        $region17: #{generator_forward.1} parent=11 // pred_check
          %p300 = pneg %p88
        $region18: #{generator_forward.1} parent=11 // pred_check_branch
          %302 = sbr.rel (%p300) target = $region20
        $region19: #{generator_forward.1} parent=11 // pred_region
          _
        $region20: #{generator_forward.1} parent=11 // pred_fallthru
          _
        // Predicated region
        $region21: #{generator_forward.1} parent=11 // pred_check
          %p303 = pneg %p109
        $region22: #{generator_forward.1} parent=11 // pred_check_branch
          %305 = sbr.rel (%p303) target = $region24
        $region23: #{generator_forward.1} parent=11 // pred_region
          _
        $region24: #{generator_forward.1} parent=11 // pred_fallthru
          _
        // Predicated region
        $region25: #{generator_forward.1} parent=11 // pred_check
          %p306 = pneg %p130
        $region26: #{generator_forward.1} parent=11 // pred_check_branch
          %308 = sbr.rel (%p306) target = $region28
        $region27: #{generator_forward.1} parent=11 // pred_region
          _
        $region28: #{generator_forward.1} parent=11 // pred_fallthru
          _
        // Predicated region
        $region29: #{generator_forward.1} parent=11 // pred_check
          %p309 = pneg %p151
        $region30: #{generator_forward.1} parent=11 // pred_check_branch
          %311 = sbr.rel (%p309) target = $region32
        $region31: #{generator_forward.1} parent=11 // pred_region
          _
        $region32: #{generator_forward.1} parent=11 // pred_fallthru
          _
        // Predicated region
        $region33: #{generator_forward.1} parent=11 // pred_check
          %p312 = pneg %p172
        $region34: #{generator_forward.1} parent=11 // pred_check_branch
          %314 = sbr.rel (%p312) target = $region36
        $region35: #{generator_forward.1} parent=11 // pred_region
          _
        $region36: #{generator_forward.1} parent=11 // pred_fallthru
          _
        // Predicated region
        $region37: #{generator_forward.1} parent=11 // pred_check
          %p315 = pneg %p193
        $region38: #{generator_forward.1} parent=11 // pred_check_branch
          %317 = sbr.rel (%p315) target = $region40
        $region39: #{generator_forward.1} parent=11 // pred_region
          _
        $region40: #{generator_forward.1} parent=11 // pred_fallthru
          _
        // Predicated region
        $region41: #{generator_forward.1} parent=11 // pred_check
          %p318 = pneg %p214
        $region42: #{generator_forward.1} parent=11 // pred_check_branch
          %320 = sbr.rel (%p318) target = $region44
        $region43: #{generator_forward.1} parent=11 // pred_region
          _
        $region44: #{generator_forward.1} parent=11 // pred_fallthru
          _
        // Predicated region
        $region45: #{generator_forward.1} parent=11 // pred_check
          %p321 = pneg %p235
        $region46: #{generator_forward.1} parent=11 // pred_check_branch
          %323 = sbr.rel (%p321) target = $region48
        $region47: #{generator_forward.1} parent=11 // pred_region
          _
        $region48: #{generator_forward.1} parent=11 // pred_fallthru
          _
        // Predicated region
        $region49: #{generator_forward.1} parent=11 // pred_check
          %p324 = pneg %p256
        $region50: #{generator_forward.1} parent=11 // pred_check_branch
          %326 = sbr.rel (%p324) target = $region52
        $region51: #{generator_forward.1} parent=11 // pred_region
          _
        $region52: #{generator_forward.1} parent=11 // pred_fallthru
          _
      $region12: #{generator_forward.1} parent=5 // pred_fallthru
        _
      %p327 = scmp.lt.s32.totalorder %s20, 2
      // Predicated region
      $region53: #{generator_forward.1} parent=5 // pred_check
        %p328 = pneg %p327
      $region54: #{generator_forward.1} parent=5 // pred_check_branch
        %330 = sbr.rel (%p328) target = $region56
      $region55: #{generator_forward.1} parent=5 // pred_region
        // Predicated region
        $region57: #{generator_forward.1} parent=55 // pred_check
          %p331 = pneg %p40
        $region58: #{generator_forward.1} parent=55 // pred_check_branch
          %333 = sbr.rel (%p331) target = $region60
        $region59: #{generator_forward.1} parent=55 // pred_region
          %p334 = scmp.lt.s32.totalorder %s20, 1
          %s335 = scalar_select %p334, %s20, 1
          %s336 = smul.addr %s335, 2
          %s337 = smul.addr %s336, 8
          %s338 = scalar_lea.vmem %s0, %s337
        $region60: #{generator_forward.1} parent=55 // pred_fallthru
          _
      $region56: #{generator_forward.1} parent=5 // pred_fallthru
        _
      %p339 = scmp.le.s32.totalorder 1, %s20
      %p340 = scmp.lt.s32.totalorder %s20, 3
      %p341 = pnand %p339, %p340
      %p342 = pneg %p341
      // Predicated region
      $region61: #{generator_forward.1} parent=5 // pred_check
        _
      $region62: #{generator_forward.1} parent=5 // pred_check_branch
        %344 = sbr.rel (%p341) target = $region64
      $region63: #{generator_forward.1} parent=5 // pred_region
        %s345 = ssub.s32 %s20, 1
        %p346 = scmp.lt.s32.totalorder %s25, 1
        %s347 = scalar_select %p346, %s25, 1
        %s348 = smul.addr %s347, 2
        %s349 = smul.addr %s348, 8
        %s350 = scalar_lea.vmem %s0, %s349
        %p351 = pneg %p46
        %p352 = pneg %p43
        %p353 = pneg %p67
        %p354 = pneg %p64
        %p355 = pneg %p88
        %p356 = pneg %p85
        %p357 = pneg %p109
        %p358 = pneg %p106
        %p359 = pneg %p130
        %p360 = pneg %p127
        %p361 = pneg %p151
        %p362 = pneg %p148
        %p363 = pneg %p172
        %p364 = pneg %p169
        %p365 = pneg %p193
        %p366 = pneg %p190
        %p367 = pneg %p214
        %p368 = pneg %p211
        %p369 = pneg %p235
        %p370 = pneg %p232
        %p371 = pneg %p256
        %p372 = pneg %p253
        %p373 = pneg %p282
        %p374 = pneg %p279
        %s375 = sand.u32 %s269, 1
        %s376 = scalar_lea.sflag [#allocation6], %s375
        %s377 = sand.u32 %s269, 1
        %s378 = smul.addr %s377, 32
        %s379 = scalar_lea.vmem [#allocation5], %s378
        %p380 = scmp.lt.s32.totalorder %s25, 1
        %s381 = scalar_select %p380, %s25, 1
        %s382 = smul.addr %s381, 2
        %s383 = smul.addr %s382, 8
        %s384 = scalar_lea.vmem %s0, %s383
        %vm385 = vcmask 48128
        %386 = vst.msk [vmem:[#allocation2] sm:$0xff] %vm385, 0.0
        %387 = vst.msk [vmem:[#allocation2 + $0x8] sm:$0xff] %vm385, 0.0
        %388 = vst.msk [vmem:[#allocation2 + $0x10] sm:$0xff] %vm385, 0.0
        %389 = vst.msk [vmem:[#allocation2 + $0x18] sm:$0xff] %vm385, 0.0
        %390 = vst.msk [vmem:[#allocation2 + $0x20] sm:$0xff] %vm385, 0.0
        %391 = vst.msk [vmem:[#allocation2 + $0x28] sm:$0xff] %vm385, 0.0
        %392 = vst.msk [vmem:[#allocation2 + $0x30] sm:$0xff] %vm385, 0.0
        %393 = vst.msk [vmem:[#allocation2 + $0x38] sm:$0xff] %vm385, 0.0
        %394 = vst.msk [vmem:[#allocation2 + $0x40] sm:$0xff] %vm385, 0.0
        %395 = vst.msk [vmem:[#allocation2 + $0x48] sm:$0xff] %vm385, 0.0
        %396 = vst.msk [vmem:[#allocation2 + $0x50] sm:$0xff] %vm385, 0.0
        %397 = vst.msk [vmem:[#allocation2 + $0x58] sm:$0xff] %vm385, 0.0
        %398 = vst.msk [vmem:[#allocation2 + $0x60] sm:$0xff] %vm385, 0.0
        %399 = vst.msk [vmem:[#allocation2 + $0x68] sm:$0xff] %vm385, 0.0
        %400 = vst.msk [vmem:[#allocation2 + $0x70] sm:$0xff] %vm385, 0.0
        %401 = vst.msk [vmem:[#allocation2 + $0x78] sm:$0xff] %vm385, 0.0
        %402 = vst.msk [vmem:[#allocation2 + $0x80] sm:$0xff] %vm385, 0.0
        %403 = vst.msk [vmem:[#allocation2 + $0x88] sm:$0xff] %vm385, 0.0
        %404 = vst.msk [vmem:[#allocation2 + $0x90] sm:$0xff] %vm385, 0.0
        %405 = vst.msk [vmem:[#allocation2 + $0x98] sm:$0xff] %vm385, 0.0
        %406 = vst.msk [vmem:[#allocation2 + $0xa0] sm:$0xff] %vm385, 0.0
        %407 = vst.msk [vmem:[#allocation2 + $0xa8] sm:$0xff] %vm385, 0.0
        %408 = vst.msk [vmem:[#allocation2 + $0xb0] sm:$0xff] %vm385, 0.0
        %409 = vst.msk [vmem:[#allocation2 + $0xb8] sm:$0xff] %vm385, 0.0
        %vm410 = vcmask 80896
        %411 = vst.msk [vmem:[#allocation3] sm:$0xff] %vm410, 0.0
        %412 = vst.msk [vmem:[#allocation3 + $0x8] sm:$0xff] %vm410, 0.0
        %413 = vst.msk [vmem:[#allocation3 + $0x10] sm:$0xff] %vm410, 0.0
        %414 = vst.msk [vmem:[#allocation3 + $0x18] sm:$0xff] %vm410, 0.0
        %415 = vst.msk [vmem:[#allocation3 + $0x20] sm:$0xff] %vm410, 0.0
        %416 = vst.msk [vmem:[#allocation3 + $0x28] sm:$0xff] %vm410, 0.0
        %417 = vst.msk [vmem:[#allocation3 + $0x30] sm:$0xff] %vm410, 0.0
        %418 = vst.msk [vmem:[#allocation3 + $0x38] sm:$0xff] %vm410, 0.0
        %419 = vst.msk [vmem:[#allocation3 + $0x40] sm:$0xff] %vm410, 0.0
        %420 = vst.msk [vmem:[#allocation3 + $0x48] sm:$0xff] %vm410, 0.0
        %421 = vst.msk [vmem:[#allocation3 + $0x50] sm:$0xff] %vm410, 0.0
        %422 = vst.msk [vmem:[#allocation3 + $0x58] sm:$0xff] %vm410, 0.0
        %423 = vst.msk [vmem:[#allocation3 + $0x60] sm:$0xff] %vm410, 0.0
        %424 = vst.msk [vmem:[#allocation3 + $0x68] sm:$0xff] %vm410, 0.0
        %425 = vst.msk [vmem:[#allocation3 + $0x70] sm:$0xff] %vm410, 0.0
        %426 = vst.msk [vmem:[#allocation3 + $0x78] sm:$0xff] %vm410, 0.0
        %427 = vst.msk [vmem:[#allocation3 + $0x80] sm:$0xff] %vm410, 0.0
        %428 = vst.msk [vmem:[#allocation3 + $0x88] sm:$0xff] %vm410, 0.0
        %429 = vst.msk [vmem:[#allocation3 + $0x90] sm:$0xff] %vm410, 0.0
        %430 = vst.msk [vmem:[#allocation3 + $0x98] sm:$0xff] %vm410, 0.0
        %vm431 = vcmask 146432
        %432 = vst.msk [vmem:[#allocation4] sm:$0xff] %vm431, 0.0
        %433 = vst.msk [vmem:[#allocation4 + $0x8] sm:$0xff] %vm431, 0.0
        %434 = vst.msk [vmem:[#allocation4 + $0x10] sm:$0xff] %vm431, 0.0
        %435 = vst.msk [vmem:[#allocation4 + $0x18] sm:$0xff] %vm431, 0.0
        %436 = vst.msk [vmem:[#allocation4 + $0x20] sm:$0xff] %vm431, 0.0
        %437 = vst.msk [vmem:[#allocation4 + $0x28] sm:$0xff] %vm431, 0.0
        %438 = vst.msk [vmem:[#allocation4 + $0x30] sm:$0xff] %vm431, 0.0
        %439 = vst.msk [vmem:[#allocation4 + $0x38] sm:$0xff] %vm431, 0.0
        %440 = vst.msk [vmem:[#allocation4 + $0x40] sm:$0xff] %vm431, 0.0
        %441 = vst.msk [vmem:[#allocation4 + $0x48] sm:$0xff] %vm431, 0.0
        %442 = vst.msk [vmem:[#allocation4 + $0x50] sm:$0xff] %vm431, 0.0
        %443 = vst.msk [vmem:[#allocation4 + $0x58] sm:$0xff] %vm431, 0.0
        %444 = vst.msk [vmem:[#allocation4 + $0x60] sm:$0xff] %vm431, 0.0
        %445 = vst.msk [vmem:[#allocation4 + $0x68] sm:$0xff] %vm431, 0.0
        %446 = vst.msk [vmem:[#allocation4 + $0x70] sm:$0xff] %vm431, 0.0
        %447 = vst.msk [vmem:[#allocation4 + $0x78] sm:$0xff] %vm431, 0.0
        %448 = vst.msk [vmem:[#allocation4 + $0x80] sm:$0xff] %vm431, 0.0
        %449 = vst.msk [vmem:[#allocation4 + $0x88] sm:$0xff] %vm431, 0.0
        %v450 = vld [vmem:[%s1] sm:$0xf]
        %v451 = vld [vmem:[%s1 + $0x4] sm:$0xf]
        %v452 = vld [vmem:[%s1 + $0x8] sm:$0xf]
        %v453 = vld [vmem:[%s1 + $0xc] sm:$0xf]
        %v454 = vld [vmem:[%s1 + $0x10] sm:$0xf]
        %v455 = vld [vmem:[%s1 + $0x14] sm:$0xf]
        %v456 = vld [vmem:[%s1 + $0x18] sm:$0xf]
        %v457 = vld [vmem:[%s1 + $0x1c] sm:$0xf]
        %v458 = vld [vmem:[%s1 + $0x20] sm:$0xf]
        %v459 = vld [vmem:[%s1 + $0x24] sm:$0xf]
        %v460 = vld [vmem:[%s1 + $0x28] sm:$0xf]
        %v461 = vld [vmem:[%s1 + $0x2c] sm:$0xf]
        %v462 = vld [vmem:[%s1 + $0x30] sm:$0xf]
        %v463 = vld [vmem:[%s1 + $0x34] sm:$0xf]
        %v464 = vld [vmem:[%s1 + $0x38] sm:$0xf]
        %v465 = vld [vmem:[%s1 + $0x3c] sm:$0xf]
        %v466 = vld [vmem:[%s1 + $0x40] sm:$0xf]
        %v467 = vld [vmem:[%s1 + $0x44] sm:$0xf]
        %v468 = vld [vmem:[%s1 + $0x48] sm:$0xf]
        %v469 = vld [vmem:[%s1 + $0x4c] sm:$0xf]
        %v470 = vld [vmem:[%s1 + $0x50] sm:$0xf]
        %v471 = vld [vmem:[%s1 + $0x54] sm:$0xf]
        %v472 = vld [vmem:[%s1 + $0x58] sm:$0xf]
        %v473 = vld [vmem:[%s1 + $0x5c] sm:$0xf]
        %v474 = vld [vmem:[%s1 + $0x60] sm:$0xf]
        %v475 = vld [vmem:[%s1 + $0x64] sm:$0xf]
        %v476 = vld [vmem:[%s1 + $0x68] sm:$0xf]
        %v477 = vld [vmem:[%s1 + $0x6c] sm:$0xf]
        %v478 = vld [vmem:[%s1 + $0x70] sm:$0xf]
        %v479 = vld [vmem:[%s1 + $0x74] sm:$0xf]
        %v480 = vld [vmem:[%s1 + $0x78] sm:$0xf]
        %v481 = vld [vmem:[%s1 + $0x7c] sm:$0xf]
        %v482 = vld [vmem:[%s1 + $0x80] sm:$0xf]
        %v483 = vld [vmem:[%s1 + $0x84] sm:$0xf]
        %v484 = vld [vmem:[%s1 + $0x88] sm:$0xf]
        %v485 = vld [vmem:[%s1 + $0x8c] sm:$0xf]
        %v486 = vld [vmem:[%s1 + $0x90] sm:$0xf]
        %v487 = vld [vmem:[%s1 + $0x94] sm:$0xf]
        %v488 = vld [vmem:[%s1 + $0x98] sm:$0xf]
        %v489 = vld [vmem:[%s1 + $0x9c] sm:$0xf]
        %v490 = vld [vmem:[%s1 + $0xa0] sm:$0xf]
        %v491 = vld [vmem:[%s1 + $0xa4] sm:$0xf]
        %v492 = vld [vmem:[%s1 + $0xa8] sm:$0xf]
        %v493 = vld [vmem:[%s1 + $0xac] sm:$0xf]
        %v494 = vld [vmem:[%s1 + $0xb0] sm:$0xf]
        %v495 = vld [vmem:[%s1 + $0xb4] sm:$0xf]
        %v496 = vld [vmem:[%s1 + $0xb8] sm:$0xf]
        %v497 = vld [vmem:[%s1 + $0xbc] sm:$0xf]
        %v498 = vld [vmem:[%s1 + $0xc0] sm:$0xf]
        %v499 = vld [vmem:[%s1 + $0xc4] sm:$0xf]
        %v500 = vld [vmem:[%s1 + $0xc8] sm:$0xf]
        %v501 = vld [vmem:[%s1 + $0xcc] sm:$0xf]
        %v502 = vld [vmem:[%s1 + $0xd0] sm:$0xf]
        %v503 = vld [vmem:[%s1 + $0xd4] sm:$0xf]
        %v504 = vld [vmem:[%s1 + $0xd8] sm:$0xf]
        %v505 = vld [vmem:[%s1 + $0xdc] sm:$0xf]
        %v506 = vld [vmem:[%s1 + $0xe0] sm:$0xf]
        %v507 = vld [vmem:[%s1 + $0xe4] sm:$0xf]
        %v508 = vld [vmem:[%s1 + $0xe8] sm:$0xf]
        %v509 = vld [vmem:[%s1 + $0xec] sm:$0xf]
        %v510 = vld [vmem:[%s1 + $0xf0] sm:$0xf]
        %v511 = vld [vmem:[%s1 + $0xf4] sm:$0xf]
        %v512 = vld [vmem:[%s1 + $0xf8] sm:$0xf]
        %v513 = vld [vmem:[%s1 + $0xfc] sm:$0xf]
        %v514 = vunpack.c.l.bf16 %v450
        %v515 = vunpack.c.l.bf16 %v451
        %v516 = vunpack.c.l.bf16 %v452
        %v517 = vunpack.c.l.bf16 %v453
        %v518 = vunpack.c.l.bf16 %v454
        %v519 = vunpack.c.l.bf16 %v455
        %v520 = vunpack.c.l.bf16 %v456
        %v521 = vunpack.c.l.bf16 %v457
        %v522 = vunpack.c.l.bf16 %v458
        %v523 = vunpack.c.l.bf16 %v459
        %v524 = vunpack.c.l.bf16 %v460
        %v525 = vunpack.c.l.bf16 %v461
        %v526 = vunpack.c.l.bf16 %v462
        %v527 = vunpack.c.l.bf16 %v463
        %v528 = vunpack.c.l.bf16 %v464
        %v529 = vunpack.c.l.bf16 %v465
        %v530 = vunpack.c.l.bf16 %v466
        %v531 = vunpack.c.l.bf16 %v467
        %v532 = vunpack.c.l.bf16 %v468
        %v533 = vunpack.c.l.bf16 %v469
        %v534 = vunpack.c.l.bf16 %v470
        %v535 = vunpack.c.l.bf16 %v471
        %v536 = vunpack.c.l.bf16 %v472
        %v537 = vunpack.c.l.bf16 %v473
        %v538 = vunpack.c.l.bf16 %v474
        %v539 = vunpack.c.l.bf16 %v475
        %v540 = vunpack.c.l.bf16 %v476
        %v541 = vunpack.c.l.bf16 %v477
        %v542 = vunpack.c.l.bf16 %v478
        %v543 = vunpack.c.l.bf16 %v479
        %v544 = vunpack.c.l.bf16 %v480
        %v545 = vunpack.c.l.bf16 %v481
        %v546 = vunpack.c.l.bf16 %v482
        %v547 = vunpack.c.l.bf16 %v483
        %v548 = vunpack.c.l.bf16 %v484
        %v549 = vunpack.c.l.bf16 %v485
        %v550 = vunpack.c.l.bf16 %v486
        %v551 = vunpack.c.l.bf16 %v487
        %v552 = vunpack.c.l.bf16 %v488
        %v553 = vunpack.c.l.bf16 %v489
        %v554 = vunpack.c.l.bf16 %v490
        %v555 = vunpack.c.l.bf16 %v491
        %v556 = vunpack.c.l.bf16 %v492
        %v557 = vunpack.c.l.bf16 %v493
        %v558 = vunpack.c.l.bf16 %v494
        %v559 = vunpack.c.l.bf16 %v495
        %v560 = vunpack.c.l.bf16 %v496
        %v561 = vunpack.c.l.bf16 %v497
        %v562 = vunpack.c.l.bf16 %v498
        %v563 = vunpack.c.l.bf16 %v499
        %v564 = vunpack.c.l.bf16 %v500
        %v565 = vunpack.c.l.bf16 %v501
        %v566 = vunpack.c.l.bf16 %v502
        %v567 = vunpack.c.l.bf16 %v503
        %v568 = vunpack.c.l.bf16 %v504
        %v569 = vunpack.c.l.bf16 %v505
        %v570 = vunpack.c.l.bf16 %v506
        %v571 = vunpack.c.l.bf16 %v507
        %v572 = vunpack.c.l.bf16 %v508
        %v573 = vunpack.c.l.bf16 %v509
        %v574 = vunpack.c.l.bf16 %v510
        %v575 = vunpack.c.l.bf16 %v511
        %v576 = vunpack.c.l.bf16 %v512
        %v577 = vunpack.c.l.bf16 %v513
        %v578 = vld [vmem:[%s384] sm:$0xff]
        %v579 = vld [vmem:[%s384 + $0x8] sm:$0xff]
        %vm580 = vcmask 130048
        %v582 = vsel %vm580, %v514, 0
        %v585 = vsel %vm580, %v515, 0
        %v588 = vsel %vm580, %v516, 0
        %v591 = vsel %vm580, %v517, 0
        %v594 = vsel %vm580, %v518, 0
        %v597 = vsel %vm580, %v519, 0
        %v600 = vsel %vm580, %v520, 0
        %v603 = vsel %vm580, %v521, 0
        %v606 = vsel %vm580, %v522, 0
        %v609 = vsel %vm580, %v523, 0
        %v612 = vsel %vm580, %v524, 0
        %v615 = vsel %vm580, %v525, 0
        %v618 = vsel %vm580, %v526, 0
        %v621 = vsel %vm580, %v527, 0
        %v624 = vsel %vm580, %v528, 0
        %v627 = vsel %vm580, %v529, 0
        %v630 = vsel %vm580, %v530, 0
        %v633 = vsel %vm580, %v531, 0
        %v636 = vsel %vm580, %v532, 0
        %v639 = vsel %vm580, %v533, 0
        %v642 = vsel %vm580, %v534, 0
        %v645 = vsel %vm580, %v535, 0
        %v648 = vsel %vm580, %v536, 0
        %v651 = vsel %vm580, %v537, 0
        %v654 = vsel %vm580, %v538, 0
        %v657 = vsel %vm580, %v539, 0
        %v660 = vsel %vm580, %v540, 0
        %v663 = vsel %vm580, %v541, 0
        %v666 = vsel %vm580, %v542, 0
        %v669 = vsel %vm580, %v543, 0
        %v672 = vsel %vm580, %v544, 0
        %v675 = vsel %vm580, %v545, 0
        %v678 = vsel %vm580, %v546, 0
        %v681 = vsel %vm580, %v547, 0
        %v684 = vsel %vm580, %v548, 0
        %v687 = vsel %vm580, %v549, 0
        %v690 = vsel %vm580, %v550, 0
        %v693 = vsel %vm580, %v551, 0
        %v696 = vsel %vm580, %v552, 0
        %v699 = vsel %vm580, %v553, 0
        %v702 = vsel %vm580, %v554, 0
        %v705 = vsel %vm580, %v555, 0
        %v708 = vsel %vm580, %v556, 0
        %v711 = vsel %vm580, %v557, 0
        %v714 = vsel %vm580, %v558, 0
        %v717 = vsel %vm580, %v559, 0
        %v720 = vsel %vm580, %v560, 0
        %v723 = vsel %vm580, %v561, 0
        %v726 = vsel %vm580, %v562, 0
        %v729 = vsel %vm580, %v563, 0
        %v732 = vsel %vm580, %v564, 0
        %v735 = vsel %vm580, %v565, 0
        %v738 = vsel %vm580, %v566, 0
        %v741 = vsel %vm580, %v567, 0
        %v744 = vsel %vm580, %v568, 0
        %v747 = vsel %vm580, %v569, 0
        %v750 = vsel %vm580, %v570, 0
        %v753 = vsel %vm580, %v571, 0
        %v756 = vsel %vm580, %v572, 0
        %v759 = vsel %vm580, %v573, 0
        %v762 = vsel %vm580, %v574, 0
        %v765 = vsel %vm580, %v575, 0
        %v768 = vsel %vm580, %v576, 0
        %v771 = vsel %vm580, %v577, 0
        %773 = vmatprep.subr.mxu0 0.0
        %774 = vmatpush1.msra.mxu0 %v578
        %775 = vmatprep.subr.mxu0 0.0
        %776 = vmatpush1.msra.mxu0 %v579
        %777 = vmatprep.subr.mxu0 0.0
        %778 = vmatpush1.msra.mxu0 0.0
        %779 = vmatprep.subr.mxu0 0.0
        %780 = vmatpush1.msra.mxu0 0.0
        %781 = vmatprep.subr.mxu0 0.0
        %782 = vmatpush1.msra.mxu0 0.0
        %783 = vmatprep.subr.mxu0 0.0
        %784 = vmatpush1.msra.mxu0 0.0
        %785 = vmatprep.subr.mxu0 0.0
        %786 = vmatpush1.msra.mxu0 0.0
        %787 = vmatprep.subr.mxu0 0.0
        %788 = vmatpush1.msra.mxu0 0.0
        %789 = vmatprep.subr.mxu0 0.0
        %790 = vmatpush1.msra.mxu0 0.0
        %791 = vmatprep.subr.mxu0 0.0
        %792 = vmatpush1.msra.mxu0 0.0
        %793 = vmatprep.subr.mxu0 0.0
        %794 = vmatpush1.msra.mxu0 0.0
        %795 = vmatprep.subr.mxu0 0.0
        %796 = vmatpush1.msra.mxu0 0.0
        %797 = vmatprep.subr.mxu0 0.0
        %798 = vmatpush1.msra.mxu0 0.0
        %799 = vmatprep.subr.mxu0 0.0
        %800 = vmatpush1.msra.mxu0 0.0
        %801 = vmatprep.subr.mxu0 0.0
        %802 = vmatpush1.msra.mxu0 0.0
        %803 = vmatprep.subr.mxu0 0.0
        %804 = vmatpush1.msra.mxu0 0.0
        %805 = vmatprep.subr.mxu0 0.0
        %806 = vmatpush1.msra.mxu0 0.0
        %807 = vmatprep.subr.mxu0 0.0
        %808 = vmatpush1.msra.mxu0 0.0
        %809 = vmatprep.subr.mxu0 0.0
        %810 = vmatpush1.msra.mxu0 0.0
        %811 = vmatprep.subr.mxu0 0.0
        %812 = vmatpush1.msra.mxu0 0.0
        %813 = vmatprep.subr.mxu0 0.0
        %814 = vmatpush1.msra.mxu0 0.0
        %815 = vmatprep.subr.mxu0 0.0
        %816 = vmatpush1.msra.mxu0 0.0
        %817 = vmatprep.subr.mxu0 0.0
        %818 = vmatpush1.msra.mxu0 0.0
        %819 = vmatprep.subr.mxu0 0.0
        %820 = vmatpush1.msra.mxu0 0.0
        %821 = vmatprep.subr.mxu0 0.0
        %822 = vmatpush1.msra.mxu0 0.0
        %823 = vmatprep.subr.mxu0 0.0
        %824 = vmatpush1.msra.mxu0 0.0
        %825 = vmatprep.subr.mxu0 0.0
        %826 = vmatpush1.msra.mxu0 0.0
        %827 = vmatprep.subr.mxu0 0.0
        %828 = vmatpush1.msra.mxu0 0.0
        %829 = vmatprep.subr.mxu0 0.0
        %830 = vmatpush1.msra.mxu0 0.0
        %831 = vmatprep.subr.mxu0 0.0
        %832 = vmatpush1.msra.mxu0 0.0
        %833 = vmatprep.subr.mxu0 0.0
        %834 = vmatpush1.msra.mxu0 0.0
        %835 = vmatprep.subr.mxu0 0.0
        %836 = vmatpush1.msra.mxu0 0.0
        %837 = vmatprep.mubr.f32.mxu0 0.0
        %838 = vmatmul.mubr.f32.gmra.mrb[0].mxu0 %v582
        %v839 = vpop.f32.mrb[0].mxu0
        %v840 = vadd.f32 0.0, %v839
        %v841 = vpop.f32.mrb[0].mxu0
        %842 = vmatprep.mubr.f32.mxu0 0.0
        %843 = vmatmul.mubr.f32.gmra.mrb[0].mxu0 %v585
        %v844 = vpop.f32.mrb[0].mxu0
        %v845 = vadd.f32 0.0, %v844
        %v846 = vpop.f32.mrb[0].mxu0
        %847 = vmatprep.mubr.f32.mxu0 0.0
        %848 = vmatmul.mubr.f32.gmra.mrb[0].mxu0 %v588
        %v849 = vpop.f32.mrb[0].mxu0
        %v850 = vadd.f32 0.0, %v849
        %v851 = vpop.f32.mrb[0].mxu0
        %852 = vmatprep.mubr.f32.mxu0 0.0
        %853 = vmatmul.mubr.f32.gmra.mrb[0].mxu0 %v591
        %v854 = vpop.f32.mrb[0].mxu0
        %v855 = vadd.f32 0.0, %v854
        %v856 = vpop.f32.mrb[0].mxu0
        %857 = vmatprep.mubr.f32.mxu0 0.0
        %858 = vmatmul.mubr.f32.gmra.mrb[0].mxu0 %v594
        %v859 = vpop.f32.mrb[0].mxu0
        %v860 = vadd.f32 0.0, %v859
        %v861 = vpop.f32.mrb[0].mxu0
        %862 = vmatprep.mubr.f32.mxu0 0.0
        %863 = vmatmul.mubr.f32.gmra.mrb[0].mxu0 %v597
        %v864 = vpop.f32.mrb[0].mxu0
        %v865 = vadd.f32 0.0, %v864
        %v866 = vpop.f32.mrb[0].mxu0
        %867 = vmatprep.mubr.f32.mxu0 0.0
        %868 = vmatmul.mubr.f32.gmra.mrb[0].mxu0 %v600
        %v869 = vpop.f32.mrb[0].mxu0
        %v870 = vadd.f32 0.0, %v869
        %v871 = vpop.f32.mrb[0].mxu0
        %872 = vmatprep.mubr.f32.mxu0 0.0
        %873 = vmatmul.mubr.f32.gmra.mrb[0].mxu0 %v603
        %v874 = vpop.f32.mrb[0].mxu0
        %v875 = vadd.f32 0.0, %v874
        %v876 = vpop.f32.mrb[0].mxu0
        %877 = vmatprep.mubr.f32.mxu0 0.0
        %878 = vmatmul.mubr.f32.gmra.mrb[0].mxu0 %v606
        %v879 = vpop.f32.mrb[0].mxu0
        %v880 = vadd.f32 0.0, %v879
        %v881 = vpop.f32.mrb[0].mxu0
        %882 = vmatprep.mubr.f32.mxu0 0.0
        %883 = vmatmul.mubr.f32.gmra.mrb[0].mxu0 %v609
        %v884 = vpop.f32.mrb[0].mxu0
        %v885 = vadd.f32 0.0, %v884
        %v886 = vpop.f32.mrb[0].mxu0
        %887 = vmatprep.mubr.f32.mxu0 0.0
        %888 = vmatmul.mubr.f32.gmra.mrb[0].mxu0 %v612
        %v889 = vpop.f32.mrb[0].mxu0
        %v890 = vadd.f32 0.0, %v889
        %v891 = vpop.f32.mrb[0].mxu0
        %892 = vmatprep.mubr.f32.mxu0 0.0
        %893 = vmatmul.mubr.f32.gmra.mrb[0].mxu0 %v615
        %v894 = vpop.f32.mrb[0].mxu0
        %v895 = vadd.f32 0.0, %v894
        %v896 = vpop.f32.mrb[0].mxu0
        %897 = vmatprep.mubr.f32.mxu0 0.0
        %898 = vmatmul.mubr.f32.gmra.mrb[0].mxu0 %v618
        %v899 = vpop.f32.mrb[0].mxu0
        %v900 = vadd.f32 0.0, %v899
        %v901 = vpop.f32.mrb[0].mxu0
        %902 = vmatprep.mubr.f32.mxu0 0.0
        %903 = vmatmul.mubr.f32.gmra.mrb[0].mxu0 %v621
        %v904 = vpop.f32.mrb[0].mxu0
        %v905 = vadd.f32 0.0, %v904
        %v906 = vpop.f32.mrb[0].mxu0
        %907 = vmatprep.mubr.f32.mxu0 0.0
        %908 = vmatmul.mubr.f32.gmra.mrb[0].mxu0 %v624
        %v909 = vpop.f32.mrb[0].mxu0
        %v910 = vadd.f32 0.0, %v909
        %v911 = vpop.f32.mrb[0].mxu0
        %912 = vmatprep.mubr.f32.mxu0 0.0
        %913 = vmatmul.mubr.f32.gmra.mrb[0].mxu0 %v627
        %v914 = vpop.f32.mrb[0].mxu0
        %v915 = vadd.f32 0.0, %v914
        %v916 = vpop.f32.mrb[0].mxu0
        %917 = vmatprep.mubr.f32.mxu0 0.0
        %918 = vmatmul.mubr.f32.gmra.mrb[0].mxu0 %v630
        %v919 = vpop.f32.mrb[0].mxu0
        %v920 = vadd.f32 0.0, %v919
        %v921 = vpop.f32.mrb[0].mxu0
        %922 = vmatprep.mubr.f32.mxu0 0.0
        %923 = vmatmul.mubr.f32.gmra.mrb[0].mxu0 %v633
        %v924 = vpop.f32.mrb[0].mxu0
        %v925 = vadd.f32 0.0, %v924
        %v926 = vpop.f32.mrb[0].mxu0
        %927 = vmatprep.mubr.f32.mxu0 0.0
        %928 = vmatmul.mubr.f32.gmra.mrb[0].mxu0 %v636
        %v929 = vpop.f32.mrb[0].mxu0
        %v930 = vadd.f32 0.0, %v929
        %v931 = vpop.f32.mrb[0].mxu0
        %932 = vmatprep.mubr.f32.mxu0 0.0
        %933 = vmatmul.mubr.f32.gmra.mrb[0].mxu0 %v639
        %v934 = vpop.f32.mrb[0].mxu0
        %v935 = vadd.f32 0.0, %v934
        %v936 = vpop.f32.mrb[0].mxu0
        %937 = vmatprep.mubr.f32.mxu0 0.0
        %938 = vmatmul.mubr.f32.gmra.mrb[0].mxu0 %v642
        %v939 = vpop.f32.mrb[0].mxu0
        %v940 = vadd.f32 0.0, %v939
        %v941 = vpop.f32.mrb[0].mxu0
        %942 = vmatprep.mubr.f32.mxu0 0.0
        %943 = vmatmul.mubr.f32.gmra.mrb[0].mxu0 %v645
        %v944 = vpop.f32.mrb[0].mxu0
        %v945 = vadd.f32 0.0, %v944
        %v946 = vpop.f32.mrb[0].mxu0
        %947 = vmatprep.mubr.f32.mxu0 0.0
        %948 = vmatmul.mubr.f32.gmra.mrb[0].mxu0 %v648
        %v949 = vpop.f32.mrb[0].mxu0
        %v950 = vadd.f32 0.0, %v949
        %v951 = vpop.f32.mrb[0].mxu0
        %952 = vmatprep.mubr.f32.mxu0 0.0
        %953 = vmatmul.mubr.f32.gmra.mrb[0].mxu0 %v651
        %v954 = vpop.f32.mrb[0].mxu0
        %v955 = vadd.f32 0.0, %v954
        %v956 = vpop.f32.mrb[0].mxu0
        %957 = vmatprep.mubr.f32.mxu0 0.0
        %958 = vmatmul.mubr.f32.gmra.mrb[0].mxu0 %v654
        %v959 = vpop.f32.mrb[0].mxu0
        %v960 = vadd.f32 0.0, %v959
        %v961 = vpop.f32.mrb[0].mxu0
        %962 = vmatprep.mubr.f32.mxu0 0.0
        %963 = vmatmul.mubr.f32.gmra.mrb[0].mxu0 %v657
        %v964 = vpop.f32.mrb[0].mxu0
        %v965 = vadd.f32 0.0, %v964
        %v966 = vpop.f32.mrb[0].mxu0
        %967 = vmatprep.mubr.f32.mxu0 0.0
        %968 = vmatmul.mubr.f32.gmra.mrb[0].mxu0 %v660
        %v969 = vpop.f32.mrb[0].mxu0
        %v970 = vadd.f32 0.0, %v969
        %v971 = vpop.f32.mrb[0].mxu0
        %972 = vmatprep.mubr.f32.mxu0 0.0
        %973 = vmatmul.mubr.f32.gmra.mrb[0].mxu0 %v663
        %v974 = vpop.f32.mrb[0].mxu0
        %v975 = vadd.f32 0.0, %v974
        %v976 = vpop.f32.mrb[0].mxu0
        %977 = vmatprep.mubr.f32.mxu0 0.0
        %978 = vmatmul.mubr.f32.gmra.mrb[0].mxu0 %v666
        %v979 = vpop.f32.mrb[0].mxu0
        %v980 = vadd.f32 0.0, %v979
        %v981 = vpop.f32.mrb[0].mxu0
        %982 = vmatprep.mubr.f32.mxu0 0.0
        %983 = vmatmul.mubr.f32.gmra.mrb[0].mxu0 %v669
        %v984 = vpop.f32.mrb[0].mxu0
        %v985 = vadd.f32 0.0, %v984
        %v986 = vpop.f32.mrb[0].mxu0
        %987 = vmatprep.mubr.f32.mxu0 0.0
        %988 = vmatmul.mubr.f32.gmra.mrb[0].mxu0 %v672
        %v989 = vpop.f32.mrb[0].mxu0
        %v990 = vadd.f32 0.0, %v989
        %v991 = vpop.f32.mrb[0].mxu0
        %992 = vmatprep.mubr.f32.mxu0 0.0
        %993 = vmatmul.mubr.f32.gmra.mrb[0].mxu0 %v675
        %v994 = vpop.f32.mrb[0].mxu0
        %v995 = vadd.f32 0.0, %v994
        %v996 = vpop.f32.mrb[0].mxu0
        %997 = vmatprep.mubr.f32.mxu0 0.0
        %998 = vmatmul.mubr.f32.gmra.mrb[0].mxu0 %v678
        %v999 = vpop.f32.mrb[0].mxu0
        %v1000 = vadd.f32 0.0, %v999
        %v1001 = vpop.f32.mrb[0].mxu0
        %1002 = vmatprep.mubr.f32.mxu0 0.0
        %1003 = vmatmul.mubr.f32.gmra.mrb[0].mxu0 %v681
        %v1004 = vpop.f32.mrb[0].mxu0
        %v1005 = vadd.f32 0.0, %v1004
        %v1006 = vpop.f32.mrb[0].mxu0
        %1007 = vmatprep.mubr.f32.mxu0 0.0
        %1008 = vmatmul.mubr.f32.gmra.mrb[0].mxu0 %v684
        %v1009 = vpop.f32.mrb[0].mxu0
        %v1010 = vadd.f32 0.0, %v1009
        %v1011 = vpop.f32.mrb[0].mxu0
        %1012 = vmatprep.mubr.f32.mxu0 0.0
        %1013 = vmatmul.mubr.f32.gmra.mrb[0].mxu0 %v687
        %v1014 = vpop.f32.mrb[0].mxu0
        %v1015 = vadd.f32 0.0, %v1014
        %v1016 = vpop.f32.mrb[0].mxu0
        %1017 = vmatprep.mubr.f32.mxu0 0.0
        %1018 = vmatmul.mubr.f32.gmra.mrb[0].mxu0 %v690
        %v1019 = vpop.f32.mrb[0].mxu0
        %v1020 = vadd.f32 0.0, %v1019
        %v1021 = vpop.f32.mrb[0].mxu0
        %1022 = vmatprep.mubr.f32.mxu0 0.0
        %1023 = vmatmul.mubr.f32.gmra.mrb[0].mxu0 %v693
        %v1024 = vpop.f32.mrb[0].mxu0
        %v1025 = vadd.f32 0.0, %v1024
        %v1026 = vpop.f32.mrb[0].mxu0
        %1027 = vmatprep.mubr.f32.mxu0 0.0
        %1028 = vmatmul.mubr.f32.gmra.mrb[0].mxu0 %v696
        %v1029 = vpop.f32.mrb[0].mxu0
        %v1030 = vadd.f32 0.0, %v1029
        %v1031 = vpop.f32.mrb[0].mxu0
        %1032 = vmatprep.mubr.f32.mxu0 0.0
        %1033 = vmatmul.mubr.f32.gmra.mrb[0].mxu0 %v699
        %v1034 = vpop.f32.mrb[0].mxu0
        %v1035 = vadd.f32 0.0, %v1034
        %v1036 = vpop.f32.mrb[0].mxu0
        %1037 = vmatprep.mubr.f32.mxu0 0.0
        %1038 = vmatmul.mubr.f32.gmra.mrb[0].mxu0 %v702
        %v1039 = vpop.f32.mrb[0].mxu0
        %v1040 = vadd.f32 0.0, %v1039
        %v1041 = vpop.f32.mrb[0].mxu0
        %1042 = vmatprep.mubr.f32.mxu0 0.0
        %1043 = vmatmul.mubr.f32.gmra.mrb[0].mxu0 %v705
        %v1044 = vpop.f32.mrb[0].mxu0
        %v1045 = vadd.f32 0.0, %v1044
        %v1046 = vpop.f32.mrb[0].mxu0
        %1047 = vmatprep.mubr.f32.mxu0 0.0
        %1048 = vmatmul.mubr.f32.gmra.mrb[0].mxu0 %v708
        %v1049 = vpop.f32.mrb[0].mxu0
        %v1050 = vadd.f32 0.0, %v1049
        %v1051 = vpop.f32.mrb[0].mxu0
        %1052 = vmatprep.mubr.f32.mxu0 0.0
        %1053 = vmatmul.mubr.f32.gmra.mrb[0].mxu0 %v711
        %v1054 = vpop.f32.mrb[0].mxu0
        %v1055 = vadd.f32 0.0, %v1054
        %v1056 = vpop.f32.mrb[0].mxu0
        %1057 = vmatprep.mubr.f32.mxu0 0.0
        %1058 = vmatmul.mubr.f32.gmra.mrb[0].mxu0 %v714
        %v1059 = vpop.f32.mrb[0].mxu0
        %v1060 = vadd.f32 0.0, %v1059
        %v1061 = vpop.f32.mrb[0].mxu0
        %1062 = vmatprep.mubr.f32.mxu0 0.0
        %1063 = vmatmul.mubr.f32.gmra.mrb[0].mxu0 %v717
        %v1064 = vpop.f32.mrb[0].mxu0
        %v1065 = vadd.f32 0.0, %v1064
        %v1066 = vpop.f32.mrb[0].mxu0
        %1067 = vmatprep.mubr.f32.mxu0 0.0
        %1068 = vmatmul.mubr.f32.gmra.mrb[0].mxu0 %v720
        %v1069 = vpop.f32.mrb[0].mxu0
        %v1070 = vadd.f32 0.0, %v1069
        %v1071 = vpop.f32.mrb[0].mxu0
        %1072 = vmatprep.mubr.f32.mxu0 0.0
        %1073 = vmatmul.mubr.f32.gmra.mrb[0].mxu0 %v723
        %v1074 = vpop.f32.mrb[0].mxu0
        %v1075 = vadd.f32 0.0, %v1074
        %v1076 = vpop.f32.mrb[0].mxu0
        %1077 = vmatprep.mubr.f32.mxu0 0.0
        %1078 = vmatmul.mubr.f32.gmra.mrb[0].mxu0 %v726
        %v1079 = vpop.f32.mrb[0].mxu0
        %v1080 = vadd.f32 0.0, %v1079
        %v1081 = vpop.f32.mrb[0].mxu0
        %1082 = vmatprep.mubr.f32.mxu0 0.0
        %1083 = vmatmul.mubr.f32.gmra.mrb[0].mxu0 %v729
        %v1084 = vpop.f32.mrb[0].mxu0
        %v1085 = vadd.f32 0.0, %v1084
        %v1086 = vpop.f32.mrb[0].mxu0
        %1087 = vmatprep.mubr.f32.mxu0 0.0
        %1088 = vmatmul.mubr.f32.gmra.mrb[0].mxu0 %v732
        %v1089 = vpop.f32.mrb[0].mxu0
        %v1090 = vadd.f32 0.0, %v1089
        %v1091 = vpop.f32.mrb[0].mxu0
        %1092 = vmatprep.mubr.f32.mxu0 0.0
        %1093 = vmatmul.mubr.f32.gmra.mrb[0].mxu0 %v735
        %v1094 = vpop.f32.mrb[0].mxu0
        %v1095 = vadd.f32 0.0, %v1094
        %v1096 = vpop.f32.mrb[0].mxu0
        %1097 = vmatprep.mubr.f32.mxu0 0.0
        %1098 = vmatmul.mubr.f32.gmra.mrb[0].mxu0 %v738
        %v1099 = vpop.f32.mrb[0].mxu0
        %v1100 = vadd.f32 0.0, %v1099
        %v1101 = vpop.f32.mrb[0].mxu0
        %1102 = vmatprep.mubr.f32.mxu0 0.0
        %1103 = vmatmul.mubr.f32.gmra.mrb[0].mxu0 %v741
        %v1104 = vpop.f32.mrb[0].mxu0
        %v1105 = vadd.f32 0.0, %v1104
        %v1106 = vpop.f32.mrb[0].mxu0
        %1107 = vmatprep.mubr.f32.mxu0 0.0
        %1108 = vmatmul.mubr.f32.gmra.mrb[0].mxu0 %v744
        %v1109 = vpop.f32.mrb[0].mxu0
        %v1110 = vadd.f32 0.0, %v1109
        %v1111 = vpop.f32.mrb[0].mxu0
        %1112 = vmatprep.mubr.f32.mxu0 0.0
        %1113 = vmatmul.mubr.f32.gmra.mrb[0].mxu0 %v747
        %v1114 = vpop.f32.mrb[0].mxu0
        %v1115 = vadd.f32 0.0, %v1114
        %v1116 = vpop.f32.mrb[0].mxu0
        %1117 = vmatprep.mubr.f32.mxu0 0.0
        %1118 = vmatmul.mubr.f32.gmra.mrb[0].mxu0 %v750
        %v1119 = vpop.f32.mrb[0].mxu0
        %v1120 = vadd.f32 0.0, %v1119
        %v1121 = vpop.f32.mrb[0].mxu0
        %1122 = vmatprep.mubr.f32.mxu0 0.0
        %1123 = vmatmul.mubr.f32.gmra.mrb[0].mxu0 %v753
        %v1124 = vpop.f32.mrb[0].mxu0
        %v1125 = vadd.f32 0.0, %v1124
        %v1126 = vpop.f32.mrb[0].mxu0
        %1127 = vmatprep.mubr.f32.mxu0 0.0
        %1128 = vmatmul.mubr.f32.gmra.mrb[0].mxu0 %v756
        %v1129 = vpop.f32.mrb[0].mxu0
        %v1130 = vadd.f32 0.0, %v1129
        %v1131 = vpop.f32.mrb[0].mxu0
        %1132 = vmatprep.mubr.f32.mxu0 0.0
        %1133 = vmatmul.mubr.f32.gmra.mrb[0].mxu0 %v759
        %v1134 = vpop.f32.mrb[0].mxu0
        %v1135 = vadd.f32 0.0, %v1134
        %v1136 = vpop.f32.mrb[0].mxu0
        %1137 = vmatprep.mubr.f32.mxu0 0.0
        %1138 = vmatmul.mubr.f32.gmra.mrb[0].mxu0 %v762
        %v1139 = vpop.f32.mrb[0].mxu0
        %v1140 = vadd.f32 0.0, %v1139
        %v1141 = vpop.f32.mrb[0].mxu0
        %1142 = vmatprep.mubr.f32.mxu0 0.0
        %1143 = vmatmul.mubr.f32.gmra.mrb[0].mxu0 %v765
        %v1144 = vpop.f32.mrb[0].mxu0
        %v1145 = vadd.f32 0.0, %v1144
        %v1146 = vpop.f32.mrb[0].mxu0
        %1147 = vmatprep.mubr.f32.mxu0 0.0
        %1148 = vmatmul.mubr.f32.gmra.mrb[0].mxu0 %v768
        %v1149 = vpop.f32.mrb[0].mxu0
        %v1150 = vadd.f32 0.0, %v1149
        %v1151 = vpop.f32.mrb[0].mxu0
        %1152 = vmatprep.mubr.f32.mxu0 0.0
        %1153 = vmatmul.mubr.f32.gmra.mrb[0].mxu0 %v771
        %v1154 = vpop.f32.mrb[0].mxu0
        %v1155 = vadd.f32 0.0, %v1154
        %v1156 = vpop.f32.mrb[0].mxu0
        %1157 = vdwg.mxu0
        %v1158 = vld [vmem:[%s2] sm:$0xff]
        %v1159 = vld [vmem:[%s2 + $0x8] sm:$0xff]
        %v1160 = vld [vmem:[%s2 + $0x10] sm:$0xff]
        %v1161 = vld [vmem:[%s2 + $0x18] sm:$0xff]
        %v1162 = vld [vmem:[%s2 + $0x20] sm:$0xff]
        %v1163 = vld [vmem:[%s2 + $0x28] sm:$0xff]
        %v1164 = vld [vmem:[%s2 + $0x30] sm:$0xff]
        %v1165 = vld [vmem:[%s2 + $0x38] sm:$0xff]
        %v1166 = vld [vmem:[%s2 + $0x40] sm:$0xff]
        %v1167 = vld [vmem:[%s2 + $0x48] sm:$0xff]
        %v1168 = vld [vmem:[%s2 + $0x50] sm:$0xff]
        %v1169 = vld [vmem:[%s2 + $0x58] sm:$0xff]
        %v1170 = vld [vmem:[%s2 + $0x60] sm:$0xff]
        %v1171 = vld [vmem:[%s2 + $0x68] sm:$0xff]
        %v1172 = vld [vmem:[%s2 + $0x70] sm:$0xff]
        %v1173 = vld [vmem:[%s2 + $0x78] sm:$0xff]
        %v1174 = vld [vmem:[%s2 + $0x80] sm:$0xff]
        %v1175 = vld [vmem:[%s2 + $0x88] sm:$0xff]
        %v1176 = vld [vmem:[%s2 + $0x90] sm:$0xff]
        %v1177 = vld [vmem:[%s2 + $0x98] sm:$0xff]
        %v1178 = vld [vmem:[%s2 + $0xa0] sm:$0xff]
        %v1179 = vld [vmem:[%s2 + $0xa8] sm:$0xff]
        %v1180 = vld [vmem:[%s2 + $0xb0] sm:$0xff]
        %v1181 = vld [vmem:[%s2 + $0xb8] sm:$0xff]
        %v1182 = vld [vmem:[%s2 + $0xc0] sm:$0xff]
        %v1183 = vld [vmem:[%s2 + $0xc8] sm:$0xff]
        %v1184 = vld [vmem:[%s2 + $0xd0] sm:$0xff]
        %v1185 = vld [vmem:[%s2 + $0xd8] sm:$0xff]
        %v1186 = vld [vmem:[%s2 + $0xe0] sm:$0xff]
        %v1187 = vld [vmem:[%s2 + $0xe8] sm:$0xff]
        %v1188 = vld [vmem:[%s2 + $0xf0] sm:$0xff]
        %v1189 = vld [vmem:[%s2 + $0xf8] sm:$0xff]
        %v1190 = vld [vmem:[%s2 + $0x100] sm:$0xff]
        %v1191 = vld [vmem:[%s2 + $0x108] sm:$0xff]
        %v1192 = vld [vmem:[%s2 + $0x110] sm:$0xff]
        %v1193 = vld [vmem:[%s2 + $0x118] sm:$0xff]
        %v1194 = vld [vmem:[%s2 + $0x120] sm:$0xff]
        %v1195 = vld [vmem:[%s2 + $0x128] sm:$0xff]
        %v1196 = vld [vmem:[%s2 + $0x130] sm:$0xff]
        %v1197 = vld [vmem:[%s2 + $0x138] sm:$0xff]
        %v1198 = vld [vmem:[%s2 + $0x140] sm:$0xff]
        %v1199 = vld [vmem:[%s2 + $0x148] sm:$0xff]
        %v1200 = vld [vmem:[%s2 + $0x150] sm:$0xff]
        %v1201 = vld [vmem:[%s2 + $0x158] sm:$0xff]
        %v1202 = vld [vmem:[%s2 + $0x160] sm:$0xff]
        %v1203 = vld [vmem:[%s2 + $0x168] sm:$0xff]
        %v1204 = vld [vmem:[%s2 + $0x170] sm:$0xff]
        %v1205 = vld [vmem:[%s2 + $0x178] sm:$0xff]
        %v1206 = vld [vmem:[%s2 + $0x180] sm:$0xff]
        %v1207 = vld [vmem:[%s2 + $0x188] sm:$0xff]
        %v1208 = vld [vmem:[%s2 + $0x190] sm:$0xff]
        %v1209 = vld [vmem:[%s2 + $0x198] sm:$0xff]
        %v1210 = vld [vmem:[%s2 + $0x1a0] sm:$0xff]
        %v1211 = vld [vmem:[%s2 + $0x1a8] sm:$0xff]
        %v1212 = vld [vmem:[%s2 + $0x1b0] sm:$0xff]
        %v1213 = vld [vmem:[%s2 + $0x1b8] sm:$0xff]
        %v1214 = vld [vmem:[%s2 + $0x1c0] sm:$0xff]
        %v1215 = vld [vmem:[%s2 + $0x1c8] sm:$0xff]
        %v1216 = vld [vmem:[%s2 + $0x1d0] sm:$0xff]
        %v1217 = vld [vmem:[%s2 + $0x1d8] sm:$0xff]
        %v1218 = vld [vmem:[%s2 + $0x1e0] sm:$0xff]
        %v1219 = vld [vmem:[%s2 + $0x1e8] sm:$0xff]
        %v1220 = vld [vmem:[%s2 + $0x1f0] sm:$0xff]
        %v1221 = vld [vmem:[%s2 + $0x1f8] sm:$0xff]
        %v1222 = vmul.f32 %v840, %v1158
        %v1223 = vmul.f32 %v845, %v1159
        %v1224 = vmul.f32 %v850, %v1160
        %v1225 = vmul.f32 %v855, %v1161
        %v1226 = vmul.f32 %v860, %v1162
        %v1227 = vmul.f32 %v865, %v1163
        %v1228 = vmul.f32 %v870, %v1164
        %v1229 = vmul.f32 %v875, %v1165
        %v1230 = vmul.f32 %v880, %v1166
        %v1231 = vmul.f32 %v885, %v1167
        %v1232 = vmul.f32 %v890, %v1168
        %v1233 = vmul.f32 %v895, %v1169
        %v1234 = vmul.f32 %v900, %v1170
        %v1235 = vmul.f32 %v905, %v1171
        %v1236 = vmul.f32 %v910, %v1172
        %v1237 = vmul.f32 %v915, %v1173
        %v1238 = vmul.f32 %v920, %v1174
        %v1239 = vmul.f32 %v925, %v1175
        %v1240 = vmul.f32 %v930, %v1176
        %v1241 = vmul.f32 %v935, %v1177
        %v1242 = vmul.f32 %v940, %v1178
        %v1243 = vmul.f32 %v945, %v1179
        %v1244 = vmul.f32 %v950, %v1180
        %v1245 = vmul.f32 %v955, %v1181
        %v1246 = vmul.f32 %v960, %v1182
        %v1247 = vmul.f32 %v965, %v1183
        %v1248 = vmul.f32 %v970, %v1184
        %v1249 = vmul.f32 %v975, %v1185
        %v1250 = vmul.f32 %v980, %v1186
        %v1251 = vmul.f32 %v985, %v1187
        %v1252 = vmul.f32 %v990, %v1188
        %v1253 = vmul.f32 %v995, %v1189
        %v1254 = vmul.f32 %v1000, %v1190
        %v1255 = vmul.f32 %v1005, %v1191
        %v1256 = vmul.f32 %v1010, %v1192
        %v1257 = vmul.f32 %v1015, %v1193
        %v1258 = vmul.f32 %v1020, %v1194
        %v1259 = vmul.f32 %v1025, %v1195
        %v1260 = vmul.f32 %v1030, %v1196
        %v1261 = vmul.f32 %v1035, %v1197
        %v1262 = vmul.f32 %v1040, %v1198
        %v1263 = vmul.f32 %v1045, %v1199
        %v1264 = vmul.f32 %v1050, %v1200
        %v1265 = vmul.f32 %v1055, %v1201
        %v1266 = vmul.f32 %v1060, %v1202
        %v1267 = vmul.f32 %v1065, %v1203
        %v1268 = vmul.f32 %v1070, %v1204
        %v1269 = vmul.f32 %v1075, %v1205
        %v1270 = vmul.f32 %v1080, %v1206
        %v1271 = vmul.f32 %v1085, %v1207
        %v1272 = vmul.f32 %v1090, %v1208
        %v1273 = vmul.f32 %v1095, %v1209
        %v1274 = vmul.f32 %v1100, %v1210
        %v1275 = vmul.f32 %v1105, %v1211
        %v1276 = vmul.f32 %v1110, %v1212
        %v1277 = vmul.f32 %v1115, %v1213
        %v1278 = vmul.f32 %v1120, %v1214
        %v1279 = vmul.f32 %v1125, %v1215
        %v1280 = vmul.f32 %v1130, %v1216
        %v1281 = vmul.f32 %v1135, %v1217
        %v1282 = vmul.f32 %v1140, %v1218
        %v1283 = vmul.f32 %v1145, %v1219
        %v1284 = vmul.f32 %v1150, %v1220
        %v1285 = vmul.f32 %v1155, %v1221
        %v1286 = vld [vmem:[%s3] sm:$0xff]
        %v1287 = vld [vmem:[%s3 + $0x8] sm:$0xff]
        %v1288 = vld [vmem:[%s3 + $0x10] sm:$0xff]
        %v1289 = vld [vmem:[%s3 + $0x18] sm:$0xff]
        %v1290 = vld [vmem:[%s3 + $0x20] sm:$0xff]
        %v1291 = vld [vmem:[%s3 + $0x28] sm:$0xff]
        %v1292 = vld [vmem:[%s3 + $0x30] sm:$0xff]
        %v1293 = vld [vmem:[%s3 + $0x38] sm:$0xff]
        %v1294 = vld [vmem:[%s3 + $0x40] sm:$0xff]
        %v1295 = vld [vmem:[%s3 + $0x48] sm:$0xff]
        %v1296 = vld [vmem:[%s3 + $0x50] sm:$0xff]
        %v1297 = vld [vmem:[%s3 + $0x58] sm:$0xff]
        %v1298 = vld [vmem:[%s3 + $0x60] sm:$0xff]
        %v1299 = vld [vmem:[%s3 + $0x68] sm:$0xff]
        %v1300 = vld [vmem:[%s3 + $0x70] sm:$0xff]
        %v1301 = vld [vmem:[%s3 + $0x78] sm:$0xff]
        %v1302 = vld [vmem:[%s3 + $0x80] sm:$0xff]
        %v1303 = vld [vmem:[%s3 + $0x88] sm:$0xff]
        %v1304 = vld [vmem:[%s3 + $0x90] sm:$0xff]
        %v1305 = vld [vmem:[%s3 + $0x98] sm:$0xff]
        %v1306 = vld [vmem:[%s3 + $0xa0] sm:$0xff]
        %v1307 = vld [vmem:[%s3 + $0xa8] sm:$0xff]
        %v1308 = vld [vmem:[%s3 + $0xb0] sm:$0xff]
        %v1309 = vld [vmem:[%s3 + $0xb8] sm:$0xff]
        %v1310 = vld [vmem:[%s3 + $0xc0] sm:$0xff]
        %v1311 = vld [vmem:[%s3 + $0xc8] sm:$0xff]
        %v1312 = vld [vmem:[%s3 + $0xd0] sm:$0xff]
        %v1313 = vld [vmem:[%s3 + $0xd8] sm:$0xff]
        %v1314 = vld [vmem:[%s3 + $0xe0] sm:$0xff]
        %v1315 = vld [vmem:[%s3 + $0xe8] sm:$0xff]
        %v1316 = vld [vmem:[%s3 + $0xf0] sm:$0xff]
        %v1317 = vld [vmem:[%s3 + $0xf8] sm:$0xff]
        %v1318 = vld [vmem:[%s3 + $0x100] sm:$0xff]
        %v1319 = vld [vmem:[%s3 + $0x108] sm:$0xff]
        %v1320 = vld [vmem:[%s3 + $0x110] sm:$0xff]
        %v1321 = vld [vmem:[%s3 + $0x118] sm:$0xff]
        %v1322 = vld [vmem:[%s3 + $0x120] sm:$0xff]
        %v1323 = vld [vmem:[%s3 + $0x128] sm:$0xff]
        %v1324 = vld [vmem:[%s3 + $0x130] sm:$0xff]
        %v1325 = vld [vmem:[%s3 + $0x138] sm:$0xff]
        %v1326 = vld [vmem:[%s3 + $0x140] sm:$0xff]
        %v1327 = vld [vmem:[%s3 + $0x148] sm:$0xff]
        %v1328 = vld [vmem:[%s3 + $0x150] sm:$0xff]
        %v1329 = vld [vmem:[%s3 + $0x158] sm:$0xff]
        %v1330 = vld [vmem:[%s3 + $0x160] sm:$0xff]
        %v1331 = vld [vmem:[%s3 + $0x168] sm:$0xff]
        %v1332 = vld [vmem:[%s3 + $0x170] sm:$0xff]
        %v1333 = vld [vmem:[%s3 + $0x178] sm:$0xff]
        %v1334 = vld [vmem:[%s3 + $0x180] sm:$0xff]
        %v1335 = vld [vmem:[%s3 + $0x188] sm:$0xff]
        %v1336 = vld [vmem:[%s3 + $0x190] sm:$0xff]
        %v1337 = vld [vmem:[%s3 + $0x198] sm:$0xff]
        %v1338 = vld [vmem:[%s3 + $0x1a0] sm:$0xff]
        %v1339 = vld [vmem:[%s3 + $0x1a8] sm:$0xff]
        %v1340 = vld [vmem:[%s3 + $0x1b0] sm:$0xff]
        %v1341 = vld [vmem:[%s3 + $0x1b8] sm:$0xff]
        %v1342 = vld [vmem:[%s3 + $0x1c0] sm:$0xff]
        %v1343 = vld [vmem:[%s3 + $0x1c8] sm:$0xff]
        %v1344 = vld [vmem:[%s3 + $0x1d0] sm:$0xff]
        %v1345 = vld [vmem:[%s3 + $0x1d8] sm:$0xff]
        %v1346 = vld [vmem:[%s3 + $0x1e0] sm:$0xff]
        %v1347 = vld [vmem:[%s3 + $0x1e8] sm:$0xff]
        %v1348 = vld [vmem:[%s3 + $0x1f0] sm:$0xff]
        %v1349 = vld [vmem:[%s3 + $0x1f8] sm:$0xff]
        %v1350 = vadd.f32 %v1222, %v1286
        %v1351 = vadd.f32 %v1223, %v1287
        %v1352 = vadd.f32 %v1224, %v1288
        %v1353 = vadd.f32 %v1225, %v1289
        %v1354 = vadd.f32 %v1226, %v1290
        %v1355 = vadd.f32 %v1227, %v1291
        %v1356 = vadd.f32 %v1228, %v1292
        %v1357 = vadd.f32 %v1229, %v1293
        %v1358 = vadd.f32 %v1230, %v1294
        %v1359 = vadd.f32 %v1231, %v1295
        %v1360 = vadd.f32 %v1232, %v1296
        %v1361 = vadd.f32 %v1233, %v1297
        %v1362 = vadd.f32 %v1234, %v1298
        %v1363 = vadd.f32 %v1235, %v1299
        %v1364 = vadd.f32 %v1236, %v1300
        %v1365 = vadd.f32 %v1237, %v1301
        %v1366 = vadd.f32 %v1238, %v1302
        %v1367 = vadd.f32 %v1239, %v1303
        %v1368 = vadd.f32 %v1240, %v1304
        %v1369 = vadd.f32 %v1241, %v1305
        %v1370 = vadd.f32 %v1242, %v1306
        %v1371 = vadd.f32 %v1243, %v1307
        %v1372 = vadd.f32 %v1244, %v1308
        %v1373 = vadd.f32 %v1245, %v1309
        %v1374 = vadd.f32 %v1246, %v1310
        %v1375 = vadd.f32 %v1247, %v1311
        %v1376 = vadd.f32 %v1248, %v1312
        %v1377 = vadd.f32 %v1249, %v1313
        %v1378 = vadd.f32 %v1250, %v1314
        %v1379 = vadd.f32 %v1251, %v1315
        %v1380 = vadd.f32 %v1252, %v1316
        %v1381 = vadd.f32 %v1253, %v1317
        %v1382 = vadd.f32 %v1254, %v1318
        %v1383 = vadd.f32 %v1255, %v1319
        %v1384 = vadd.f32 %v1256, %v1320
        %v1385 = vadd.f32 %v1257, %v1321
        %v1386 = vadd.f32 %v1258, %v1322
        %v1387 = vadd.f32 %v1259, %v1323
        %v1388 = vadd.f32 %v1260, %v1324
        %v1389 = vadd.f32 %v1261, %v1325
        %v1390 = vadd.f32 %v1262, %v1326
        %v1391 = vadd.f32 %v1263, %v1327
        %v1392 = vadd.f32 %v1264, %v1328
        %v1393 = vadd.f32 %v1265, %v1329
        %v1394 = vadd.f32 %v1266, %v1330
        %v1395 = vadd.f32 %v1267, %v1331
        %v1396 = vadd.f32 %v1268, %v1332
        %v1397 = vadd.f32 %v1269, %v1333
        %v1398 = vadd.f32 %v1270, %v1334
        %v1399 = vadd.f32 %v1271, %v1335
        %v1400 = vadd.f32 %v1272, %v1336
        %v1401 = vadd.f32 %v1273, %v1337
        %v1402 = vadd.f32 %v1274, %v1338
        %v1403 = vadd.f32 %v1275, %v1339
        %v1404 = vadd.f32 %v1276, %v1340
        %v1405 = vadd.f32 %v1277, %v1341
        %v1406 = vadd.f32 %v1278, %v1342
        %v1407 = vadd.f32 %v1279, %v1343
        %v1408 = vadd.f32 %v1280, %v1344
        %v1409 = vadd.f32 %v1281, %v1345
        %v1410 = vadd.f32 %v1282, %v1346
        %v1411 = vadd.f32 %v1283, %v1347
        %v1412 = vadd.f32 %v1284, %v1348
        %v1413 = vadd.f32 %v1285, %v1349
        %v1414 = vmul.f32 %v1350, 0.2
        %v1415 = vmul.f32 %v1351, 0.2
        %v1416 = vmul.f32 %v1352, 0.2
        %v1417 = vmul.f32 %v1353, 0.2
        %v1418 = vmul.f32 %v1354, 0.2
        %v1419 = vmul.f32 %v1355, 0.2
        %v1420 = vmul.f32 %v1356, 0.2
        %v1421 = vmul.f32 %v1357, 0.2
        %v1422 = vmul.f32 %v1358, 0.2
        %v1423 = vmul.f32 %v1359, 0.2
        %v1424 = vmul.f32 %v1360, 0.2
        %v1425 = vmul.f32 %v1361, 0.2
        %v1426 = vmul.f32 %v1362, 0.2
        %v1427 = vmul.f32 %v1363, 0.2
        %v1428 = vmul.f32 %v1364, 0.2
        %v1429 = vmul.f32 %v1365, 0.2
        %v1430 = vmul.f32 %v1366, 0.2
        %v1431 = vmul.f32 %v1367, 0.2
        %v1432 = vmul.f32 %v1368, 0.2
        %v1433 = vmul.f32 %v1369, 0.2
        %v1434 = vmul.f32 %v1370, 0.2
        %v1435 = vmul.f32 %v1371, 0.2
        %v1436 = vmul.f32 %v1372, 0.2
        %v1437 = vmul.f32 %v1373, 0.2
        %v1438 = vmul.f32 %v1374, 0.2
        %v1439 = vmul.f32 %v1375, 0.2
        %v1440 = vmul.f32 %v1376, 0.2
        %v1441 = vmul.f32 %v1377, 0.2
        %v1442 = vmul.f32 %v1378, 0.2
        %v1443 = vmul.f32 %v1379, 0.2
        %v1444 = vmul.f32 %v1380, 0.2
        %v1445 = vmul.f32 %v1381, 0.2
        %v1446 = vmul.f32 %v1382, 0.2
        %v1447 = vmul.f32 %v1383, 0.2
        %v1448 = vmul.f32 %v1384, 0.2
        %v1449 = vmul.f32 %v1385, 0.2
        %v1450 = vmul.f32 %v1386, 0.2
        %v1451 = vmul.f32 %v1387, 0.2
        %v1452 = vmul.f32 %v1388, 0.2
        %v1453 = vmul.f32 %v1389, 0.2
        %v1454 = vmul.f32 %v1390, 0.2
        %v1455 = vmul.f32 %v1391, 0.2
        %v1456 = vmul.f32 %v1392, 0.2
        %v1457 = vmul.f32 %v1393, 0.2
        %v1458 = vmul.f32 %v1394, 0.2
        %v1459 = vmul.f32 %v1395, 0.2
        %v1460 = vmul.f32 %v1396, 0.2
        %v1461 = vmul.f32 %v1397, 0.2
        %v1462 = vmul.f32 %v1398, 0.2
        %v1463 = vmul.f32 %v1399, 0.2
        %v1464 = vmul.f32 %v1400, 0.2
        %v1465 = vmul.f32 %v1401, 0.2
        %v1466 = vmul.f32 %v1402, 0.2
        %v1467 = vmul.f32 %v1403, 0.2
        %v1468 = vmul.f32 %v1404, 0.2
        %v1469 = vmul.f32 %v1405, 0.2
        %v1470 = vmul.f32 %v1406, 0.2
        %v1471 = vmul.f32 %v1407, 0.2
        %v1472 = vmul.f32 %v1408, 0.2
        %v1473 = vmul.f32 %v1409, 0.2
        %v1474 = vmul.f32 %v1410, 0.2
        %v1475 = vmul.f32 %v1411, 0.2
        %v1476 = vmul.f32 %v1412, 0.2
        %v1477 = vmul.f32 %v1413, 0.2
        %v1478 = vmax.f32 %v1350, %v1414
        %v1479 = vmax.f32 %v1351, %v1415
        %v1480 = vmax.f32 %v1352, %v1416
        %v1481 = vmax.f32 %v1353, %v1417
        %v1482 = vmax.f32 %v1354, %v1418
        %v1483 = vmax.f32 %v1355, %v1419
        %v1484 = vmax.f32 %v1356, %v1420
        %v1485 = vmax.f32 %v1357, %v1421
        %v1486 = vmax.f32 %v1358, %v1422
        %v1487 = vmax.f32 %v1359, %v1423
        %v1488 = vmax.f32 %v1360, %v1424
        %v1489 = vmax.f32 %v1361, %v1425
        %v1490 = vmax.f32 %v1362, %v1426
        %v1491 = vmax.f32 %v1363, %v1427
        %v1492 = vmax.f32 %v1364, %v1428
        %v1493 = vmax.f32 %v1365, %v1429
        %v1494 = vmax.f32 %v1366, %v1430
        %v1495 = vmax.f32 %v1367, %v1431
        %v1496 = vmax.f32 %v1368, %v1432
        %v1497 = vmax.f32 %v1369, %v1433
        %v1498 = vmax.f32 %v1370, %v1434
        %v1499 = vmax.f32 %v1371, %v1435
        %v1500 = vmax.f32 %v1372, %v1436
        %v1501 = vmax.f32 %v1373, %v1437
        %v1502 = vmax.f32 %v1374, %v1438
        %v1503 = vmax.f32 %v1375, %v1439
        %v1504 = vmax.f32 %v1376, %v1440
        %v1505 = vmax.f32 %v1377, %v1441
        %v1506 = vmax.f32 %v1378, %v1442
        %v1507 = vmax.f32 %v1379, %v1443
        %v1508 = vmax.f32 %v1380, %v1444
        %v1509 = vmax.f32 %v1381, %v1445
        %v1510 = vmax.f32 %v1382, %v1446
        %v1511 = vmax.f32 %v1383, %v1447
        %v1512 = vmax.f32 %v1384, %v1448
        %v1513 = vmax.f32 %v1385, %v1449
        %v1514 = vmax.f32 %v1386, %v1450
        %v1515 = vmax.f32 %v1387, %v1451
        %v1516 = vmax.f32 %v1388, %v1452
        %v1517 = vmax.f32 %v1389, %v1453
        %v1518 = vmax.f32 %v1390, %v1454
        %v1519 = vmax.f32 %v1391, %v1455
        %v1520 = vmax.f32 %v1392, %v1456
        %v1521 = vmax.f32 %v1393, %v1457
        %v1522 = vmax.f32 %v1394, %v1458
        %v1523 = vmax.f32 %v1395, %v1459
        %v1524 = vmax.f32 %v1396, %v1460
        %v1525 = vmax.f32 %v1397, %v1461
        %v1526 = vmax.f32 %v1398, %v1462
        %v1527 = vmax.f32 %v1399, %v1463
        %v1528 = vmax.f32 %v1400, %v1464
        %v1529 = vmax.f32 %v1401, %v1465
        %v1530 = vmax.f32 %v1402, %v1466
        %v1531 = vmax.f32 %v1403, %v1467
        %v1532 = vmax.f32 %v1404, %v1468
        %v1533 = vmax.f32 %v1405, %v1469
        %v1534 = vmax.f32 %v1406, %v1470
        %v1535 = vmax.f32 %v1407, %v1471
        %v1536 = vmax.f32 %v1408, %v1472
        %v1537 = vmax.f32 %v1409, %v1473
        %v1538 = vmax.f32 %v1410, %v1474
        %v1539 = vmax.f32 %v1411, %v1475
        %v1540 = vmax.f32 %v1412, %v1476
        %v1541 = vmax.f32 %v1413, %v1477
        %1546 = vrot.lane.b32.xlu0 %v1478, 1
        %v1547 = vpop.permute.xlu0 %1546
        %1548 = vrot.lane.b32.xlu0 %v1479, 1
        %v1549 = vpop.permute.xlu0 %1548
        %1550 = vrot.lane.b32.xlu0 %v1480, 1
        %v1551 = vpop.permute.xlu0 %1550
        %1552 = vrot.lane.b32.xlu0 %v1481, 1
        %v1553 = vpop.permute.xlu0 %1552
        %s1558 = scalar_lea.vmem [#allocation2], 32
        %vm1559 = vcmask 15368
        %1560 = vst.msk [vmem:[%s1558] sm:$0xff] %vm1559, %v1547
        %1561 = vst.msk [vmem:[%s1558 + $0x8] sm:$0xff] %vm1559, %v1549
        %1562 = vst.msk [vmem:[%s1558 + $0x10] sm:$0xff] %vm1559, %v1551
        %1563 = vst.msk [vmem:[%s1558 + $0x18] sm:$0xff] %vm1559, %v1553
        %1568 = vrot.lane.b32.xlu0 %v1482, 2
        %v1569 = vpop.permute.xlu0 %1568
        %1570 = vrot.lane.b32.xlu0 %v1483, 2
        %v1571 = vpop.permute.xlu0 %1570
        %1572 = vrot.lane.b32.xlu0 %v1484, 2
        %v1573 = vpop.permute.xlu0 %1572
        %1574 = vrot.lane.b32.xlu0 %v1485, 2
        %v1575 = vpop.permute.xlu0 %1574
        %vm1580 = vcmask 23568
        %1581 = vst.msk [vmem:[%s1558] sm:$0xff] %vm1580, %v1569
        %1582 = vst.msk [vmem:[%s1558 + $0x8] sm:$0xff] %vm1580, %v1571
        %1583 = vst.msk [vmem:[%s1558 + $0x10] sm:$0xff] %vm1580, %v1573
        %1584 = vst.msk [vmem:[%s1558 + $0x18] sm:$0xff] %vm1580, %v1575
        %1589 = vrot.lane.b32.xlu0 %v1486, 3
        %v1590 = vpop.permute.xlu0 %1589
        %1591 = vrot.lane.b32.xlu0 %v1487, 3
        %v1592 = vpop.permute.xlu0 %1591
        %1593 = vrot.lane.b32.xlu0 %v1488, 3
        %v1594 = vpop.permute.xlu0 %1593
        %1595 = vrot.lane.b32.xlu0 %v1489, 3
        %v1596 = vpop.permute.xlu0 %1595
        %vm1601 = vcmask 31768
        %1602 = vst.msk [vmem:[%s1558] sm:$0xff] %vm1601, %v1590
        %1603 = vst.msk [vmem:[%s1558 + $0x8] sm:$0xff] %vm1601, %v1592
        %1604 = vst.msk [vmem:[%s1558 + $0x10] sm:$0xff] %vm1601, %v1594
        %1605 = vst.msk [vmem:[%s1558 + $0x18] sm:$0xff] %vm1601, %v1596
        %1610 = vrot.lane.b32.xlu0 %v1490, 4
        %v1611 = vpop.permute.xlu0 %1610
        %1612 = vrot.lane.b32.xlu0 %v1491, 4
        %v1613 = vpop.permute.xlu0 %1612
        %1614 = vrot.lane.b32.xlu0 %v1492, 4
        %v1615 = vpop.permute.xlu0 %1614
        %1616 = vrot.lane.b32.xlu0 %v1493, 4
        %v1617 = vpop.permute.xlu0 %1616
        %vm1622 = vcmask 39968
        %1623 = vst.msk [vmem:[%s1558] sm:$0xff] %vm1622, %v1611
        %1624 = vst.msk [vmem:[%s1558 + $0x8] sm:$0xff] %vm1622, %v1613
        %1625 = vst.msk [vmem:[%s1558 + $0x10] sm:$0xff] %vm1622, %v1615
        %1626 = vst.msk [vmem:[%s1558 + $0x18] sm:$0xff] %vm1622, %v1617
        %1631 = vrot.lane.b32.xlu0 %v1494, 1
        %v1632 = vpop.permute.xlu0 %1631
        %1633 = vrot.lane.b32.xlu0 %v1495, 1
        %v1634 = vpop.permute.xlu0 %1633
        %1635 = vrot.lane.b32.xlu0 %v1496, 1
        %v1636 = vpop.permute.xlu0 %1635
        %1637 = vrot.lane.b32.xlu0 %v1497, 1
        %v1638 = vpop.permute.xlu0 %1637
        %s1643 = scalar_lea.vmem [#allocation2], 64
        %1644 = vst.msk [vmem:[%s1643] sm:$0xff] %vm1559, %v1632
        %1645 = vst.msk [vmem:[%s1643 + $0x8] sm:$0xff] %vm1559, %v1634
        %1646 = vst.msk [vmem:[%s1643 + $0x10] sm:$0xff] %vm1559, %v1636
        %1647 = vst.msk [vmem:[%s1643 + $0x18] sm:$0xff] %vm1559, %v1638
        %1652 = vrot.lane.b32.xlu0 %v1498, 2
        %v1653 = vpop.permute.xlu0 %1652
        %1654 = vrot.lane.b32.xlu0 %v1499, 2
        %v1655 = vpop.permute.xlu0 %1654
        %1656 = vrot.lane.b32.xlu0 %v1500, 2
        %v1657 = vpop.permute.xlu0 %1656
        %1658 = vrot.lane.b32.xlu0 %v1501, 2
        %v1659 = vpop.permute.xlu0 %1658
        %1664 = vst.msk [vmem:[%s1643] sm:$0xff] %vm1580, %v1653
        %1665 = vst.msk [vmem:[%s1643 + $0x8] sm:$0xff] %vm1580, %v1655
        %1666 = vst.msk [vmem:[%s1643 + $0x10] sm:$0xff] %vm1580, %v1657
        %1667 = vst.msk [vmem:[%s1643 + $0x18] sm:$0xff] %vm1580, %v1659
        %1672 = vrot.lane.b32.xlu0 %v1502, 3
        %v1673 = vpop.permute.xlu0 %1672
        %1674 = vrot.lane.b32.xlu0 %v1503, 3
        %v1675 = vpop.permute.xlu0 %1674
        %1676 = vrot.lane.b32.xlu0 %v1504, 3
        %v1677 = vpop.permute.xlu0 %1676
        %1678 = vrot.lane.b32.xlu0 %v1505, 3
        %v1679 = vpop.permute.xlu0 %1678
        %1684 = vst.msk [vmem:[%s1643] sm:$0xff] %vm1601, %v1673
        %1685 = vst.msk [vmem:[%s1643 + $0x8] sm:$0xff] %vm1601, %v1675
        %1686 = vst.msk [vmem:[%s1643 + $0x10] sm:$0xff] %vm1601, %v1677
        %1687 = vst.msk [vmem:[%s1643 + $0x18] sm:$0xff] %vm1601, %v1679
        %1692 = vrot.lane.b32.xlu0 %v1506, 4
        %v1693 = vpop.permute.xlu0 %1692
        %1694 = vrot.lane.b32.xlu0 %v1507, 4
        %v1695 = vpop.permute.xlu0 %1694
        %1696 = vrot.lane.b32.xlu0 %v1508, 4
        %v1697 = vpop.permute.xlu0 %1696
        %1698 = vrot.lane.b32.xlu0 %v1509, 4
        %v1699 = vpop.permute.xlu0 %1698
        %1704 = vst.msk [vmem:[%s1643] sm:$0xff] %vm1622, %v1693
        %1705 = vst.msk [vmem:[%s1643 + $0x8] sm:$0xff] %vm1622, %v1695
        %1706 = vst.msk [vmem:[%s1643 + $0x10] sm:$0xff] %vm1622, %v1697
        %1707 = vst.msk [vmem:[%s1643 + $0x18] sm:$0xff] %vm1622, %v1699
        %1712 = vrot.lane.b32.xlu0 %v1510, 1
        %v1713 = vpop.permute.xlu0 %1712
        %1714 = vrot.lane.b32.xlu0 %v1511, 1
        %v1715 = vpop.permute.xlu0 %1714
        %1716 = vrot.lane.b32.xlu0 %v1512, 1
        %v1717 = vpop.permute.xlu0 %1716
        %1718 = vrot.lane.b32.xlu0 %v1513, 1
        %v1719 = vpop.permute.xlu0 %1718
        %s1724 = scalar_lea.vmem [#allocation2], 96
        %1725 = vst.msk [vmem:[%s1724] sm:$0xff] %vm1559, %v1713
        %1726 = vst.msk [vmem:[%s1724 + $0x8] sm:$0xff] %vm1559, %v1715
        %1727 = vst.msk [vmem:[%s1724 + $0x10] sm:$0xff] %vm1559, %v1717
        %1728 = vst.msk [vmem:[%s1724 + $0x18] sm:$0xff] %vm1559, %v1719
        %1733 = vrot.lane.b32.xlu0 %v1514, 2
        %v1734 = vpop.permute.xlu0 %1733
        %1735 = vrot.lane.b32.xlu0 %v1515, 2
        %v1736 = vpop.permute.xlu0 %1735
        %1737 = vrot.lane.b32.xlu0 %v1516, 2
        %v1738 = vpop.permute.xlu0 %1737
        %1739 = vrot.lane.b32.xlu0 %v1517, 2
        %v1740 = vpop.permute.xlu0 %1739
        %1745 = vst.msk [vmem:[%s1724] sm:$0xff] %vm1580, %v1734
        %1746 = vst.msk [vmem:[%s1724 + $0x8] sm:$0xff] %vm1580, %v1736
        %1747 = vst.msk [vmem:[%s1724 + $0x10] sm:$0xff] %vm1580, %v1738
        %1748 = vst.msk [vmem:[%s1724 + $0x18] sm:$0xff] %vm1580, %v1740
        %1753 = vrot.lane.b32.xlu0 %v1518, 3
        %v1754 = vpop.permute.xlu0 %1753
        %1755 = vrot.lane.b32.xlu0 %v1519, 3
        %v1756 = vpop.permute.xlu0 %1755
        %1757 = vrot.lane.b32.xlu0 %v1520, 3
        %v1758 = vpop.permute.xlu0 %1757
        %1759 = vrot.lane.b32.xlu0 %v1521, 3
        %v1760 = vpop.permute.xlu0 %1759
        %1765 = vst.msk [vmem:[%s1724] sm:$0xff] %vm1601, %v1754
        %1766 = vst.msk [vmem:[%s1724 + $0x8] sm:$0xff] %vm1601, %v1756
        %1767 = vst.msk [vmem:[%s1724 + $0x10] sm:$0xff] %vm1601, %v1758
        %1768 = vst.msk [vmem:[%s1724 + $0x18] sm:$0xff] %vm1601, %v1760
        %1773 = vrot.lane.b32.xlu0 %v1522, 4
        %v1774 = vpop.permute.xlu0 %1773
        %1775 = vrot.lane.b32.xlu0 %v1523, 4
        %v1776 = vpop.permute.xlu0 %1775
        %1777 = vrot.lane.b32.xlu0 %v1524, 4
        %v1778 = vpop.permute.xlu0 %1777
        %1779 = vrot.lane.b32.xlu0 %v1525, 4
        %v1780 = vpop.permute.xlu0 %1779
        %1785 = vst.msk [vmem:[%s1724] sm:$0xff] %vm1622, %v1774
        %1786 = vst.msk [vmem:[%s1724 + $0x8] sm:$0xff] %vm1622, %v1776
        %1787 = vst.msk [vmem:[%s1724 + $0x10] sm:$0xff] %vm1622, %v1778
        %1788 = vst.msk [vmem:[%s1724 + $0x18] sm:$0xff] %vm1622, %v1780
        %1793 = vrot.lane.b32.xlu0 %v1526, 1
        %v1794 = vpop.permute.xlu0 %1793
        %1795 = vrot.lane.b32.xlu0 %v1527, 1
        %v1796 = vpop.permute.xlu0 %1795
        %1797 = vrot.lane.b32.xlu0 %v1528, 1
        %v1798 = vpop.permute.xlu0 %1797
        %1799 = vrot.lane.b32.xlu0 %v1529, 1
        %v1800 = vpop.permute.xlu0 %1799
        %s1805 = scalar_lea.vmem [#allocation2], 128
        %1806 = vst.msk [vmem:[%s1805] sm:$0xff] %vm1559, %v1794
        %1807 = vst.msk [vmem:[%s1805 + $0x8] sm:$0xff] %vm1559, %v1796
        %1808 = vst.msk [vmem:[%s1805 + $0x10] sm:$0xff] %vm1559, %v1798
        %1809 = vst.msk [vmem:[%s1805 + $0x18] sm:$0xff] %vm1559, %v1800
        %1814 = vrot.lane.b32.xlu0 %v1530, 2
        %v1815 = vpop.permute.xlu0 %1814
        %1816 = vrot.lane.b32.xlu0 %v1531, 2
        %v1817 = vpop.permute.xlu0 %1816
        %1818 = vrot.lane.b32.xlu0 %v1532, 2
        %v1819 = vpop.permute.xlu0 %1818
        %1820 = vrot.lane.b32.xlu0 %v1533, 2
        %v1821 = vpop.permute.xlu0 %1820
        %1826 = vst.msk [vmem:[%s1805] sm:$0xff] %vm1580, %v1815
        %1827 = vst.msk [vmem:[%s1805 + $0x8] sm:$0xff] %vm1580, %v1817
        %1828 = vst.msk [vmem:[%s1805 + $0x10] sm:$0xff] %vm1580, %v1819
        %1829 = vst.msk [vmem:[%s1805 + $0x18] sm:$0xff] %vm1580, %v1821
        %1834 = vrot.lane.b32.xlu0 %v1534, 3
        %v1835 = vpop.permute.xlu0 %1834
        %1836 = vrot.lane.b32.xlu0 %v1535, 3
        %v1837 = vpop.permute.xlu0 %1836
        %1838 = vrot.lane.b32.xlu0 %v1536, 3
        %v1839 = vpop.permute.xlu0 %1838
        %1840 = vrot.lane.b32.xlu0 %v1537, 3
        %v1841 = vpop.permute.xlu0 %1840
        %1846 = vst.msk [vmem:[%s1805] sm:$0xff] %vm1601, %v1835
        %1847 = vst.msk [vmem:[%s1805 + $0x8] sm:$0xff] %vm1601, %v1837
        %1848 = vst.msk [vmem:[%s1805 + $0x10] sm:$0xff] %vm1601, %v1839
        %1849 = vst.msk [vmem:[%s1805 + $0x18] sm:$0xff] %vm1601, %v1841
        %1854 = vrot.lane.b32.xlu0 %v1538, 4
        %v1855 = vpop.permute.xlu0 %1854
        %1856 = vrot.lane.b32.xlu0 %v1539, 4
        %v1857 = vpop.permute.xlu0 %1856
        %1858 = vrot.lane.b32.xlu0 %v1540, 4
        %v1859 = vpop.permute.xlu0 %1858
        %1860 = vrot.lane.b32.xlu0 %v1541, 4
        %v1861 = vpop.permute.xlu0 %1860
        %1866 = vst.msk [vmem:[%s1805] sm:$0xff] %vm1622, %v1855
        %1867 = vst.msk [vmem:[%s1805 + $0x8] sm:$0xff] %vm1622, %v1857
        %1868 = vst.msk [vmem:[%s1805 + $0x10] sm:$0xff] %vm1622, %v1859
        %1869 = vst.msk [vmem:[%s1805 + $0x18] sm:$0xff] %vm1622, %v1861
        %v1870 = vld [vmem:[%s5] sm:$0xff]
        %v1871 = vld [vmem:[%s5 + $0x8] sm:$0xff]
        %v1872 = vld [vmem:[%s6] sm:$0xff]
        %v1873 = vld [vmem:[%s6 + $0x8] sm:$0xff]
        %v1874 = vlaneseq
        %v1875 = vshrl.u32 %v1874, 7
        %v1876 = vlaneseq
        %v1877 = vand.u32 %v1876, 127
        %v1878 = vmul.u32 %v1875, 2
        %vm1879 = vcmp.eq.s32.totalorder %v1877, %v1878
        %v1880 = vsel %vm1879, 1, 0
        %v1881 = vcvt.s32.f32 %v1880
        %v1882 = vadd.s32 %v1878, 1
        %vm1883 = vcmp.eq.s32.totalorder %v1877, %v1882
        %v1884 = vsel %vm1883, 1, 0
        %v1885 = vcvt.s32.f32 %v1884
        loop: start=0, step=1, limit=4
        $region65: #{generator_forward.1} parent=63 // loop_pre_header
          _
        $region66: #{generator_forward.1} parent=63 // loop_header
          %s1887 = sphi 0, %s1891
          %p1888 = scmp.ge.s32.totalorder %s1887, 4
        $region67: #{generator_forward.1} parent=63 // loop_header_branch
          %1890 = sbr.rel (%p1888) target = $region71
        $region68: #{generator_forward.1} parent=63 // loop_body
          %s1892 = smul.u32 %s1887, 32
          %s1893 = scalar_lea.vmem [#allocation2], %s1892
          %v1894 = vld [vmem:[%s1893] sm:$0xff]
          %v1895 = vld [vmem:[%s1893 + $0x8] sm:$0xff]
          %v1896 = vld [vmem:[%s1893 + $0x10] sm:$0xff]
          %v1897 = vld [vmem:[%s1893 + $0x18] sm:$0xff]
          %s1898 = sadd.s32 %s1887, 1
          %s1899 = smul.u32 %s1898, 32
          %s1900 = scalar_lea.vmem [#allocation2], %s1899
          %v1901 = vld [vmem:[%s1900] sm:$0xff]
          %v1902 = vld [vmem:[%s1900 + $0x8] sm:$0xff]
          %v1903 = vld [vmem:[%s1900 + $0x10] sm:$0xff]
          %v1904 = vld [vmem:[%s1900 + $0x18] sm:$0xff]
          %s1905 = sadd.s32 %s1887, 2
          %s1906 = smul.u32 %s1905, 32
          %s1907 = scalar_lea.vmem [#allocation2], %s1906
          %v1908 = vld [vmem:[%s1907] sm:$0xff]
          %v1909 = vld [vmem:[%s1907 + $0x8] sm:$0xff]
          %v1910 = vld [vmem:[%s1907 + $0x10] sm:$0xff]
          %v1911 = vld [vmem:[%s1907 + $0x18] sm:$0xff]
          %1916 = vrot.lane.b32.xlu0 %v1894, 127
          %v1917 = vpop.permute.xlu0 %1916
          %1918 = vrot.lane.b32.xlu0 %v1895, 127
          %v1919 = vpop.permute.xlu0 %1918
          %1920 = vrot.lane.b32.xlu0 %v1896, 127
          %v1921 = vpop.permute.xlu0 %1920
          %1922 = vrot.lane.b32.xlu0 %v1897, 127
          %v1923 = vpop.permute.xlu0 %1922
          %1928 = vrot.lane.b32.xlu0 %v1894, 126
          %v1929 = vpop.permute.xlu0 %1928
          %1930 = vrot.lane.b32.xlu0 %v1895, 126
          %v1931 = vpop.permute.xlu0 %1930
          %1932 = vrot.lane.b32.xlu0 %v1896, 126
          %v1933 = vpop.permute.xlu0 %1932
          %1934 = vrot.lane.b32.xlu0 %v1897, 126
          %v1935 = vpop.permute.xlu0 %1934
          %1944 = vrot.lane.b32.xlu0 %v1901, 127
          %v1945 = vpop.permute.xlu0 %1944
          %1946 = vrot.lane.b32.xlu0 %v1902, 127
          %v1947 = vpop.permute.xlu0 %1946
          %1948 = vrot.lane.b32.xlu0 %v1903, 127
          %v1949 = vpop.permute.xlu0 %1948
          %1950 = vrot.lane.b32.xlu0 %v1904, 127
          %v1951 = vpop.permute.xlu0 %1950
          %1956 = vrot.lane.b32.xlu0 %v1901, 126
          %v1957 = vpop.permute.xlu0 %1956
          %1958 = vrot.lane.b32.xlu0 %v1902, 126
          %v1959 = vpop.permute.xlu0 %1958
          %1960 = vrot.lane.b32.xlu0 %v1903, 126
          %v1961 = vpop.permute.xlu0 %1960
          %1962 = vrot.lane.b32.xlu0 %v1904, 126
          %v1963 = vpop.permute.xlu0 %1962
          %1972 = vrot.lane.b32.xlu0 %v1908, 127
          %v1973 = vpop.permute.xlu0 %1972
          %1974 = vrot.lane.b32.xlu0 %v1909, 127
          %v1975 = vpop.permute.xlu0 %1974
          %1976 = vrot.lane.b32.xlu0 %v1910, 127
          %v1977 = vpop.permute.xlu0 %1976
          %1978 = vrot.lane.b32.xlu0 %v1911, 127
          %v1979 = vpop.permute.xlu0 %1978
          %1984 = vrot.lane.b32.xlu0 %v1908, 126
          %v1985 = vpop.permute.xlu0 %1984
          %1986 = vrot.lane.b32.xlu0 %v1909, 126
          %v1987 = vpop.permute.xlu0 %1986
          %1988 = vrot.lane.b32.xlu0 %v1910, 126
          %v1989 = vpop.permute.xlu0 %1988
          %1990 = vrot.lane.b32.xlu0 %v1911, 126
          %v1991 = vpop.permute.xlu0 %1990
          %v1996 = vld [vmem:[%s4] sm:$0xff]
          %v1997 = vld [vmem:[%s4 + $0x8] sm:$0xf]
          %v1998 = vld [vmem:[%s4 + $0xc] sm:$0xff]
          %v1999 = vld [vmem:[%s4 + $0x14] sm:$0xf]
          %v2000 = vunpack.c.l.bf16 %v1996
          %v2001 = vunpack.c.h.bf16 %v1996
          %v2002 = vunpack.c.l.bf16 %v1997
          %v2003 = vunpack.c.l.bf16 %v1998
          %v2004 = vunpack.c.h.bf16 %v1998
          %v2005 = vunpack.c.l.bf16 %v1999
          %vm2006 = vcmask 261120
          %v2008 = vsel %vm2006, %v2002, 0
          %v2011 = vsel %vm2006, %v2005, 0
          %2013 = vmatprep.subr.mxu0 0.0
          %2014 = vmatpush1.msra.mxu0 %v1894
          %2015 = vmatprep.subr.mxu0 0.0
          %2016 = vmatpush1.msra.mxu0 %v1895
          %2017 = vmatprep.subr.mxu0 0.0
          %2018 = vmatpush1.msra.mxu0 %v1896
          %2019 = vmatprep.subr.mxu0 0.0
          %2020 = vmatpush1.msra.mxu0 %v1897
          %2021 = vmatprep.subr.mxu0 0.0
          %2022 = vmatpush1.msra.mxu0 %v1917
          %2023 = vmatprep.subr.mxu0 0.0
          %2024 = vmatpush1.msra.mxu0 %v1919
          %2025 = vmatprep.subr.mxu0 0.0
          %2026 = vmatpush1.msra.mxu0 %v1921
          %2027 = vmatprep.subr.mxu0 0.0
          %2028 = vmatpush1.msra.mxu0 %v1923
          %2029 = vmatprep.subr.mxu0 0.0
          %2030 = vmatpush1.msra.mxu0 %v1929
          %2031 = vmatprep.subr.mxu0 0.0
          %2032 = vmatpush1.msra.mxu0 %v1931
          %2033 = vmatprep.subr.mxu0 0.0
          %2034 = vmatpush1.msra.mxu0 %v1933
          %2035 = vmatprep.subr.mxu0 0.0
          %2036 = vmatpush1.msra.mxu0 %v1935
          %2037 = vmatprep.subr.mxu0 0.0
          %2038 = vmatpush1.msra.mxu0 %v1901
          %2039 = vmatprep.subr.mxu0 0.0
          %2040 = vmatpush1.msra.mxu0 %v1902
          %2041 = vmatprep.subr.mxu0 0.0
          %2042 = vmatpush1.msra.mxu0 %v1903
          %2043 = vmatprep.subr.mxu0 0.0
          %2044 = vmatpush1.msra.mxu0 %v1904
          %2045 = vmatprep.subr.mxu0 0.0
          %2046 = vmatpush1.msra.mxu0 %v1945
          %2047 = vmatprep.subr.mxu0 0.0
          %2048 = vmatpush1.msra.mxu0 %v1947
          %2049 = vmatprep.subr.mxu0 0.0
          %2050 = vmatpush1.msra.mxu0 %v1949
          %2051 = vmatprep.subr.mxu0 0.0
          %2052 = vmatpush1.msra.mxu0 %v1951
          %2053 = vmatprep.subr.mxu0 0.0
          %2054 = vmatpush1.msra.mxu0 %v1957
          %2055 = vmatprep.subr.mxu0 0.0
          %2056 = vmatpush1.msra.mxu0 %v1959
          %2057 = vmatprep.subr.mxu0 0.0
          %2058 = vmatpush1.msra.mxu0 %v1961
          %2059 = vmatprep.subr.mxu0 0.0
          %2060 = vmatpush1.msra.mxu0 %v1963
          %2061 = vmatprep.subr.mxu0 0.0
          %2062 = vmatpush1.msra.mxu0 %v1908
          %2063 = vmatprep.subr.mxu0 0.0
          %2064 = vmatpush1.msra.mxu0 %v1909
          %2065 = vmatprep.subr.mxu0 0.0
          %2066 = vmatpush1.msra.mxu0 %v1910
          %2067 = vmatprep.subr.mxu0 0.0
          %2068 = vmatpush1.msra.mxu0 %v1911
          %2069 = vmatprep.subr.mxu0 0.0
          %2070 = vmatpush1.msra.mxu0 %v1973
          %2071 = vmatprep.subr.mxu0 0.0
          %2072 = vmatpush1.msra.mxu0 %v1975
          %2073 = vmatprep.subr.mxu0 0.0
          %2074 = vmatpush1.msra.mxu0 %v1977
          %2075 = vmatprep.subr.mxu0 0.0
          %2076 = vmatpush1.msra.mxu0 %v1979
          %2077 = vmatprep.mubr.f32.mxu0 %v2001
          %2078 = vmatmul.mubr.f32.gmra.mrb[0].mxu0 %v2000
          %v2079 = vpop.f32.mrb[0].mxu0
          %v2080 = vadd.f32 0.0, %v2079
          %v2081 = vpop.f32.mrb[0].mxu0
          %2082 = vmatprep.mubr.f32.mxu0 %v2004
          %2083 = vmatmul.mubr.f32.gmra.mrb[0].mxu0 %v2003
          %v2084 = vpop.f32.mrb[0].mxu0
          %v2085 = vadd.f32 0.0, %v2084
          %v2086 = vpop.f32.mrb[0].mxu0
          %2087 = vdwg.mxu0
          %2088 = vmatprep.subr.mxu0 0.0
          %2089 = vmatpush1.msra.mxu0 %v1985
          %2090 = vmatprep.subr.mxu0 0.0
          %2091 = vmatpush1.msra.mxu0 %v1987
          %2092 = vmatprep.subr.mxu0 0.0
          %2093 = vmatpush1.msra.mxu0 %v1989
          %2094 = vmatprep.subr.mxu0 0.0
          %2095 = vmatpush1.msra.mxu0 %v1991
          %2096 = vmatprep.subr.mxu0 0.0
          %2097 = vmatpush1.msra.mxu0 0.0
          %2098 = vmatprep.subr.mxu0 0.0
          %2099 = vmatpush1.msra.mxu0 0.0
          %2100 = vmatprep.subr.mxu0 0.0
          %2101 = vmatpush1.msra.mxu0 0.0
          %2102 = vmatprep.subr.mxu0 0.0
          %2103 = vmatpush1.msra.mxu0 0.0
          %2104 = vmatprep.subr.mxu0 0.0
          %2105 = vmatpush1.msra.mxu0 0.0
          %2106 = vmatprep.subr.mxu0 0.0
          %2107 = vmatpush1.msra.mxu0 0.0
          %2108 = vmatprep.subr.mxu0 0.0
          %2109 = vmatpush1.msra.mxu0 0.0
          %2110 = vmatprep.subr.mxu0 0.0
          %2111 = vmatpush1.msra.mxu0 0.0
          %2112 = vmatprep.subr.mxu0 0.0
          %2113 = vmatpush1.msra.mxu0 0.0
          %2114 = vmatprep.subr.mxu0 0.0
          %2115 = vmatpush1.msra.mxu0 0.0
          %2116 = vmatprep.subr.mxu0 0.0
          %2117 = vmatpush1.msra.mxu0 0.0
          %2118 = vmatprep.subr.mxu0 0.0
          %2119 = vmatpush1.msra.mxu0 0.0
          %2120 = vmatprep.subr.mxu0 0.0
          %2121 = vmatpush1.msra.mxu0 0.0
          %2122 = vmatprep.subr.mxu0 0.0
          %2123 = vmatpush1.msra.mxu0 0.0
          %2124 = vmatprep.subr.mxu0 0.0
          %2125 = vmatpush1.msra.mxu0 0.0
          %2126 = vmatprep.subr.mxu0 0.0
          %2127 = vmatpush1.msra.mxu0 0.0
          %2128 = vmatprep.subr.mxu0 0.0
          %2129 = vmatpush1.msra.mxu0 0.0
          %2130 = vmatprep.subr.mxu0 0.0
          %2131 = vmatpush1.msra.mxu0 0.0
          %2132 = vmatprep.subr.mxu0 0.0
          %2133 = vmatpush1.msra.mxu0 0.0
          %2134 = vmatprep.subr.mxu0 0.0
          %2135 = vmatpush1.msra.mxu0 0.0
          %2136 = vmatprep.subr.mxu0 0.0
          %2137 = vmatpush1.msra.mxu0 0.0
          %2138 = vmatprep.subr.mxu0 0.0
          %2139 = vmatpush1.msra.mxu0 0.0
          %2140 = vmatprep.subr.mxu0 0.0
          %2141 = vmatpush1.msra.mxu0 0.0
          %2142 = vmatprep.subr.mxu0 0.0
          %2143 = vmatpush1.msra.mxu0 0.0
          %2144 = vmatprep.subr.mxu0 0.0
          %2145 = vmatpush1.msra.mxu0 0.0
          %2146 = vmatprep.subr.mxu0 0.0
          %2147 = vmatpush1.msra.mxu0 0.0
          %2148 = vmatprep.subr.mxu0 0.0
          %2149 = vmatpush1.msra.mxu0 0.0
          %2150 = vmatprep.subr.mxu0 0.0
          %2151 = vmatpush1.msra.mxu0 0.0
          %2152 = vmatprep.mubr.f32.mxu0 0.0
          %2153 = vmatmul.mubr.f32.gmra.mrb[0].mxu0 %v2008
          %v2154 = vpop.f32.mrb[0].mxu0
          %v2155 = vadd.f32 %v2080, %v2154
          %v2156 = vpop.f32.mrb[0].mxu0
          %2157 = vmatprep.mubr.f32.mxu0 0.0
          %2158 = vmatmul.mubr.f32.gmra.mrb[0].mxu0 %v2011
          %v2159 = vpop.f32.mrb[0].mxu0
          %v2160 = vadd.f32 %v2085, %v2159
          %v2161 = vpop.f32.mrb[0].mxu0
          %2162 = vdwg.mxu0
          %s2163 = scalar_lea.vmem %s4, 24
          %v2164 = vld [vmem:[%s2163] sm:$0xff]
          %v2165 = vld [vmem:[%s2163 + $0x8] sm:$0xf]
          %v2166 = vld [vmem:[%s2163 + $0xc] sm:$0xff]
          %v2167 = vld [vmem:[%s2163 + $0x14] sm:$0xf]
          %v2168 = vunpack.c.l.bf16 %v2164
          %v2169 = vunpack.c.h.bf16 %v2164
          %v2170 = vunpack.c.l.bf16 %v2165
          %v2171 = vunpack.c.l.bf16 %v2166
          %v2172 = vunpack.c.h.bf16 %v2166
          %v2173 = vunpack.c.l.bf16 %v2167
          %v2175 = vsel %vm2006, %v2170, 0
          %v2178 = vsel %vm2006, %v2173, 0
          %2180 = vmatprep.subr.mxu0 0.0
          %2181 = vmatpush1.msra.mxu0 %v1894
          %2182 = vmatprep.subr.mxu0 0.0
          %2183 = vmatpush1.msra.mxu0 %v1895
          %2184 = vmatprep.subr.mxu0 0.0
          %2185 = vmatpush1.msra.mxu0 %v1896
          %2186 = vmatprep.subr.mxu0 0.0
          %2187 = vmatpush1.msra.mxu0 %v1897
          %2188 = vmatprep.subr.mxu0 0.0
          %2189 = vmatpush1.msra.mxu0 %v1917
          %2190 = vmatprep.subr.mxu0 0.0
          %2191 = vmatpush1.msra.mxu0 %v1919
          %2192 = vmatprep.subr.mxu0 0.0
          %2193 = vmatpush1.msra.mxu0 %v1921
          %2194 = vmatprep.subr.mxu0 0.0
          %2195 = vmatpush1.msra.mxu0 %v1923
          %2196 = vmatprep.subr.mxu0 0.0
          %2197 = vmatpush1.msra.mxu0 %v1929
          %2198 = vmatprep.subr.mxu0 0.0
          %2199 = vmatpush1.msra.mxu0 %v1931
          %2200 = vmatprep.subr.mxu0 0.0
          %2201 = vmatpush1.msra.mxu0 %v1933
          %2202 = vmatprep.subr.mxu0 0.0
          %2203 = vmatpush1.msra.mxu0 %v1935
          %2204 = vmatprep.subr.mxu0 0.0
          %2205 = vmatpush1.msra.mxu0 %v1901
          %2206 = vmatprep.subr.mxu0 0.0
          %2207 = vmatpush1.msra.mxu0 %v1902
          %2208 = vmatprep.subr.mxu0 0.0
          %2209 = vmatpush1.msra.mxu0 %v1903
          %2210 = vmatprep.subr.mxu0 0.0
          %2211 = vmatpush1.msra.mxu0 %v1904
          %2212 = vmatprep.subr.mxu0 0.0
          %2213 = vmatpush1.msra.mxu0 %v1945
          %2214 = vmatprep.subr.mxu0 0.0
          %2215 = vmatpush1.msra.mxu0 %v1947
          %2216 = vmatprep.subr.mxu0 0.0
          %2217 = vmatpush1.msra.mxu0 %v1949
          %2218 = vmatprep.subr.mxu0 0.0
          %2219 = vmatpush1.msra.mxu0 %v1951
          %2220 = vmatprep.subr.mxu0 0.0
          %2221 = vmatpush1.msra.mxu0 %v1957
          %2222 = vmatprep.subr.mxu0 0.0
          %2223 = vmatpush1.msra.mxu0 %v1959
          %2224 = vmatprep.subr.mxu0 0.0
          %2225 = vmatpush1.msra.mxu0 %v1961
          %2226 = vmatprep.subr.mxu0 0.0
          %2227 = vmatpush1.msra.mxu0 %v1963
          %2228 = vmatprep.subr.mxu0 0.0
          %2229 = vmatpush1.msra.mxu0 %v1908
          %2230 = vmatprep.subr.mxu0 0.0
          %2231 = vmatpush1.msra.mxu0 %v1909
          %2232 = vmatprep.subr.mxu0 0.0
          %2233 = vmatpush1.msra.mxu0 %v1910
          %2234 = vmatprep.subr.mxu0 0.0
          %2235 = vmatpush1.msra.mxu0 %v1911
          %2236 = vmatprep.subr.mxu0 0.0
          %2237 = vmatpush1.msra.mxu0 %v1973
          %2238 = vmatprep.subr.mxu0 0.0
          %2239 = vmatpush1.msra.mxu0 %v1975
          %2240 = vmatprep.subr.mxu0 0.0
          %2241 = vmatpush1.msra.mxu0 %v1977
          %2242 = vmatprep.subr.mxu0 0.0
          %2243 = vmatpush1.msra.mxu0 %v1979
          %2244 = vmatprep.mubr.f32.mxu0 %v2169
          %2245 = vmatmul.mubr.f32.gmra.mrb[0].mxu0 %v2168
          %v2246 = vpop.f32.mrb[0].mxu0
          %v2247 = vadd.f32 0.0, %v2246
          %v2248 = vpop.f32.mrb[0].mxu0
          %2249 = vmatprep.mubr.f32.mxu0 %v2172
          %2250 = vmatmul.mubr.f32.gmra.mrb[0].mxu0 %v2171
          %v2251 = vpop.f32.mrb[0].mxu0
          %v2252 = vadd.f32 0.0, %v2251
          %v2253 = vpop.f32.mrb[0].mxu0
          %2254 = vdwg.mxu0
          %2255 = vmatprep.subr.mxu0 0.0
          %2256 = vmatpush1.msra.mxu0 %v1985
          %2257 = vmatprep.subr.mxu0 0.0
          %2258 = vmatpush1.msra.mxu0 %v1987
          %2259 = vmatprep.subr.mxu0 0.0
          %2260 = vmatpush1.msra.mxu0 %v1989
          %2261 = vmatprep.subr.mxu0 0.0
          %2262 = vmatpush1.msra.mxu0 %v1991
          %2263 = vmatprep.subr.mxu0 0.0
          %2264 = vmatpush1.msra.mxu0 0.0
          %2265 = vmatprep.subr.mxu0 0.0
          %2266 = vmatpush1.msra.mxu0 0.0
          %2267 = vmatprep.subr.mxu0 0.0
          %2268 = vmatpush1.msra.mxu0 0.0
          %2269 = vmatprep.subr.mxu0 0.0
          %2270 = vmatpush1.msra.mxu0 0.0
          %2271 = vmatprep.subr.mxu0 0.0
          %2272 = vmatpush1.msra.mxu0 0.0
          %2273 = vmatprep.subr.mxu0 0.0
          %2274 = vmatpush1.msra.mxu0 0.0
          %2275 = vmatprep.subr.mxu0 0.0
          %2276 = vmatpush1.msra.mxu0 0.0
          %2277 = vmatprep.subr.mxu0 0.0
          %2278 = vmatpush1.msra.mxu0 0.0
          %2279 = vmatprep.subr.mxu0 0.0
          %2280 = vmatpush1.msra.mxu0 0.0
          %2281 = vmatprep.subr.mxu0 0.0
          %2282 = vmatpush1.msra.mxu0 0.0
          %2283 = vmatprep.subr.mxu0 0.0
          %2284 = vmatpush1.msra.mxu0 0.0
          %2285 = vmatprep.subr.mxu0 0.0
          %2286 = vmatpush1.msra.mxu0 0.0
          %2287 = vmatprep.subr.mxu0 0.0
          %2288 = vmatpush1.msra.mxu0 0.0
          %2289 = vmatprep.subr.mxu0 0.0
          %2290 = vmatpush1.msra.mxu0 0.0
          %2291 = vmatprep.subr.mxu0 0.0
          %2292 = vmatpush1.msra.mxu0 0.0
          %2293 = vmatprep.subr.mxu0 0.0
          %2294 = vmatpush1.msra.mxu0 0.0
          %2295 = vmatprep.subr.mxu0 0.0
          %2296 = vmatpush1.msra.mxu0 0.0
          %2297 = vmatprep.subr.mxu0 0.0
          %2298 = vmatpush1.msra.mxu0 0.0
          %2299 = vmatprep.subr.mxu0 0.0
          %2300 = vmatpush1.msra.mxu0 0.0
          %2301 = vmatprep.subr.mxu0 0.0
          %2302 = vmatpush1.msra.mxu0 0.0
          %2303 = vmatprep.subr.mxu0 0.0
          %2304 = vmatpush1.msra.mxu0 0.0
          %2305 = vmatprep.subr.mxu0 0.0
          %2306 = vmatpush1.msra.mxu0 0.0
          %2307 = vmatprep.subr.mxu0 0.0
          %2308 = vmatpush1.msra.mxu0 0.0
          %2309 = vmatprep.subr.mxu0 0.0
          %2310 = vmatpush1.msra.mxu0 0.0
          %2311 = vmatprep.subr.mxu0 0.0
          %2312 = vmatpush1.msra.mxu0 0.0
          %2313 = vmatprep.subr.mxu0 0.0
          %2314 = vmatpush1.msra.mxu0 0.0
          %2315 = vmatprep.subr.mxu0 0.0
          %2316 = vmatpush1.msra.mxu0 0.0
          %2317 = vmatprep.subr.mxu0 0.0
          %2318 = vmatpush1.msra.mxu0 0.0
          %2319 = vmatprep.mubr.f32.mxu0 0.0
          %2320 = vmatmul.mubr.f32.gmra.mrb[0].mxu0 %v2175
          %v2321 = vpop.f32.mrb[0].mxu0
          %v2322 = vadd.f32 %v2247, %v2321
          %v2323 = vpop.f32.mrb[0].mxu0
          %2324 = vmatprep.mubr.f32.mxu0 0.0
          %2325 = vmatmul.mubr.f32.gmra.mrb[0].mxu0 %v2178
          %v2326 = vpop.f32.mrb[0].mxu0
          %v2327 = vadd.f32 %v2252, %v2326
          %v2328 = vpop.f32.mrb[0].mxu0
          %2329 = vdwg.mxu0
          %vm2330 = vcmask 31744
          %v2332 = vsel %vm2330, %v2322, 0
          %v2335 = vsel %vm2330, %v2327, 0
          %vm2337 = vcmask 1043456
          %v2339 = vsel %vm2337, %v1885, 0
          %2341 = vmatprep.subr.mxu0 0.0
          %2342 = vmatpush1.msra.mxu0 %v2339
          %2343 = vmatprep.subr.mxu0 0.0
          %2344 = vmatpush1.msra.mxu0 0.0
          %2345 = vmatprep.subr.mxu0 0.0
          %2346 = vmatpush1.msra.mxu0 0.0
          %2347 = vmatprep.subr.mxu0 0.0
          %2348 = vmatpush1.msra.mxu0 0.0
          %2349 = vmatprep.subr.mxu0 0.0
          %2350 = vmatpush1.msra.mxu0 0.0
          %2351 = vmatprep.subr.mxu0 0.0
          %2352 = vmatpush1.msra.mxu0 0.0
          %2353 = vmatprep.subr.mxu0 0.0
          %2354 = vmatpush1.msra.mxu0 0.0
          %2355 = vmatprep.subr.mxu0 0.0
          %2356 = vmatpush1.msra.mxu0 0.0
          %2357 = vmatprep.subr.mxu0 0.0
          %2358 = vmatpush1.msra.mxu0 0.0
          %2359 = vmatprep.subr.mxu0 0.0
          %2360 = vmatpush1.msra.mxu0 0.0
          %2361 = vmatprep.subr.mxu0 0.0
          %2362 = vmatpush1.msra.mxu0 0.0
          %2363 = vmatprep.subr.mxu0 0.0
          %2364 = vmatpush1.msra.mxu0 0.0
          %2365 = vmatprep.subr.mxu0 0.0
          %2366 = vmatpush1.msra.mxu0 0.0
          %2367 = vmatprep.subr.mxu0 0.0
          %2368 = vmatpush1.msra.mxu0 0.0
          %2369 = vmatprep.subr.mxu0 0.0
          %2370 = vmatpush1.msra.mxu0 0.0
          %2371 = vmatprep.subr.mxu0 0.0
          %2372 = vmatpush1.msra.mxu0 0.0
          %2373 = vmatprep.subr.mxu0 0.0
          %2374 = vmatpush1.msra.mxu0 0.0
          %2375 = vmatprep.subr.mxu0 0.0
          %2376 = vmatpush1.msra.mxu0 0.0
          %2377 = vmatprep.subr.mxu0 0.0
          %2378 = vmatpush1.msra.mxu0 0.0
          %2379 = vmatprep.subr.mxu0 0.0
          %2380 = vmatpush1.msra.mxu0 0.0
          %2381 = vmatprep.subr.mxu0 0.0
          %2382 = vmatpush1.msra.mxu0 0.0
          %2383 = vmatprep.subr.mxu0 0.0
          %2384 = vmatpush1.msra.mxu0 0.0
          %2385 = vmatprep.subr.mxu0 0.0
          %2386 = vmatpush1.msra.mxu0 0.0
          %2387 = vmatprep.subr.mxu0 0.0
          %2388 = vmatpush1.msra.mxu0 0.0
          %2389 = vmatprep.subr.mxu0 0.0
          %2390 = vmatpush1.msra.mxu0 0.0
          %2391 = vmatprep.subr.mxu0 0.0
          %2392 = vmatpush1.msra.mxu0 0.0
          %2393 = vmatprep.subr.mxu0 0.0
          %2394 = vmatpush1.msra.mxu0 0.0
          %2395 = vmatprep.subr.mxu0 0.0
          %2396 = vmatpush1.msra.mxu0 0.0
          %2397 = vmatprep.subr.mxu0 0.0
          %2398 = vmatpush1.msra.mxu0 0.0
          %2399 = vmatprep.subr.mxu0 0.0
          %2400 = vmatpush1.msra.mxu0 0.0
          %2401 = vmatprep.subr.mxu0 0.0
          %2402 = vmatpush1.msra.mxu0 0.0
          %2403 = vmatprep.subr.mxu0 0.0
          %2404 = vmatpush1.msra.mxu0 0.0
          %2405 = vmatprep.mubr.f32.mxu0 0.0
          %2406 = vmatmul.mubr.f32.gmra.mrb[0].mxu0 %v2332
          %v2407 = vpop.f32.mrb[0].mxu0
          %v2408 = vadd.f32 0.0, %v2407
          %v2409 = vpop.f32.mrb[0].mxu0
          %2410 = vmatprep.mubr.f32.mxu0 0.0
          %2411 = vmatmul.mubr.f32.gmra.mrb[0].mxu0 %v2335
          %v2412 = vpop.f32.mrb[0].mxu0
          %v2413 = vadd.f32 0.0, %v2412
          %v2414 = vpop.f32.mrb[0].mxu0
          %2415 = vdwg.mxu0
          %v2417 = vsel %vm2330, %v2155, 0
          %v2420 = vsel %vm2330, %v2160, 0
          %v2423 = vsel %vm2337, %v1881, 0
          %2425 = vmatprep.subr.mxu0 0.0
          %2426 = vmatpush1.msra.mxu0 %v2423
          %2427 = vmatprep.subr.mxu0 0.0
          %2428 = vmatpush1.msra.mxu0 0.0
          %2429 = vmatprep.subr.mxu0 0.0
          %2430 = vmatpush1.msra.mxu0 0.0
          %2431 = vmatprep.subr.mxu0 0.0
          %2432 = vmatpush1.msra.mxu0 0.0
          %2433 = vmatprep.subr.mxu0 0.0
          %2434 = vmatpush1.msra.mxu0 0.0
          %2435 = vmatprep.subr.mxu0 0.0
          %2436 = vmatpush1.msra.mxu0 0.0
          %2437 = vmatprep.subr.mxu0 0.0
          %2438 = vmatpush1.msra.mxu0 0.0
          %2439 = vmatprep.subr.mxu0 0.0
          %2440 = vmatpush1.msra.mxu0 0.0
          %2441 = vmatprep.subr.mxu0 0.0
          %2442 = vmatpush1.msra.mxu0 0.0
          %2443 = vmatprep.subr.mxu0 0.0
          %2444 = vmatpush1.msra.mxu0 0.0
          %2445 = vmatprep.subr.mxu0 0.0
          %2446 = vmatpush1.msra.mxu0 0.0
          %2447 = vmatprep.subr.mxu0 0.0
          %2448 = vmatpush1.msra.mxu0 0.0
          %2449 = vmatprep.subr.mxu0 0.0
          %2450 = vmatpush1.msra.mxu0 0.0
          %2451 = vmatprep.subr.mxu0 0.0
          %2452 = vmatpush1.msra.mxu0 0.0
          %2453 = vmatprep.subr.mxu0 0.0
          %2454 = vmatpush1.msra.mxu0 0.0
          %2455 = vmatprep.subr.mxu0 0.0
          %2456 = vmatpush1.msra.mxu0 0.0
          %2457 = vmatprep.subr.mxu0 0.0
          %2458 = vmatpush1.msra.mxu0 0.0
          %2459 = vmatprep.subr.mxu0 0.0
          %2460 = vmatpush1.msra.mxu0 0.0
          %2461 = vmatprep.subr.mxu0 0.0
          %2462 = vmatpush1.msra.mxu0 0.0
          %2463 = vmatprep.subr.mxu0 0.0
          %2464 = vmatpush1.msra.mxu0 0.0
          %2465 = vmatprep.subr.mxu0 0.0
          %2466 = vmatpush1.msra.mxu0 0.0
          %2467 = vmatprep.subr.mxu0 0.0
          %2468 = vmatpush1.msra.mxu0 0.0
          %2469 = vmatprep.subr.mxu0 0.0
          %2470 = vmatpush1.msra.mxu0 0.0
          %2471 = vmatprep.subr.mxu0 0.0
          %2472 = vmatpush1.msra.mxu0 0.0
          %2473 = vmatprep.subr.mxu0 0.0
          %2474 = vmatpush1.msra.mxu0 0.0
          %2475 = vmatprep.subr.mxu0 0.0
          %2476 = vmatpush1.msra.mxu0 0.0
          %2477 = vmatprep.subr.mxu0 0.0
          %2478 = vmatpush1.msra.mxu0 0.0
          %2479 = vmatprep.subr.mxu0 0.0
          %2480 = vmatpush1.msra.mxu0 0.0
          %2481 = vmatprep.subr.mxu0 0.0
          %2482 = vmatpush1.msra.mxu0 0.0
          %2483 = vmatprep.subr.mxu0 0.0
          %2484 = vmatpush1.msra.mxu0 0.0
          %2485 = vmatprep.subr.mxu0 0.0
          %2486 = vmatpush1.msra.mxu0 0.0
          %2487 = vmatprep.subr.mxu0 0.0
          %2488 = vmatpush1.msra.mxu0 0.0
          %2489 = vmatprep.mubr.f32.mxu0 0.0
          %2490 = vmatmul.mubr.f32.gmra.mrb[0].mxu0 %v2417
          %v2491 = vpop.f32.mrb[0].mxu0
          %v2492 = vadd.f32 %v2408, %v2491
          %v2493 = vpop.f32.mrb[0].mxu0
          %2494 = vmatprep.mubr.f32.mxu0 0.0
          %2495 = vmatmul.mubr.f32.gmra.mrb[0].mxu0 %v2420
          %v2496 = vpop.f32.mrb[0].mxu0
          %v2497 = vadd.f32 %v2413, %v2496
          %v2498 = vpop.f32.mrb[0].mxu0
          %2499 = vdwg.mxu0
          %s2500 = smul.u32 %s1887, 2
          %2502 = vset.pattern.permute.xlu0 0
          %2503 = vperm.xlu0 %2502, %v1870
          %v2504 = vpop.permute.xlu0 %2503
          %2507 = vset.pattern.permute.xlu0 0
          %2508 = vperm.xlu0 %2507, %v1871
          %v2509 = vpop.permute.xlu0 %2508
          %v2511 = vmul.f32 %v2492, %v2504
          %v2512 = vmul.f32 %v2497, %v2509
          %2514 = vset.pattern.permute.xlu0 0
          %2515 = vperm.xlu0 %2514, %v1872
          %v2516 = vpop.permute.xlu0 %2515
          %2519 = vset.pattern.permute.xlu0 0
          %2520 = vperm.xlu0 %2519, %v1873
          %v2521 = vpop.permute.xlu0 %2520
          %v2523 = vadd.f32 %v2511, %v2516
          %v2524 = vadd.f32 %v2512, %v2521
          %v2525 = vmul.f32 %v2523, 0.2
          %v2526 = vmul.f32 %v2524, 0.2
          %v2527 = vmax.f32 %v2523, %v2525
          %v2528 = vmax.f32 %v2524, %v2526
          %s2529 = sadd.s32 %s2500, 1
          %2532 = vrot.lane.b32.xlu0 %v2527, 1
          %v2533 = vpop.permute.xlu0 %2532
          %2534 = vrot.lane.b32.xlu0 %v2528, 1
          %v2535 = vpop.permute.xlu0 %2534
          %s2538 = smul.u32 %s2529, 16
          %s2539 = scalar_lea.vmem [#allocation3], %s2538
          %vm2540 = vcmask 72712
          %2541 = vst.msk [vmem:[%s2539] sm:$0xff] %vm2540, %v2533
          %2542 = vst.msk [vmem:[%s2539 + $0x8] sm:$0xff] %vm2540, %v2535
          %s2543 = scalar_lea.vmem %s4, 48
          %v2544 = vld [vmem:[%s2543] sm:$0xff]
          %v2545 = vld [vmem:[%s2543 + $0x8] sm:$0xf]
          %v2546 = vld [vmem:[%s2543 + $0xc] sm:$0xff]
          %v2547 = vld [vmem:[%s2543 + $0x14] sm:$0xf]
          %v2548 = vunpack.c.l.bf16 %v2544
          %v2549 = vunpack.c.h.bf16 %v2544
          %v2550 = vunpack.c.l.bf16 %v2545
          %v2551 = vunpack.c.l.bf16 %v2546
          %v2552 = vunpack.c.h.bf16 %v2546
          %v2553 = vunpack.c.l.bf16 %v2547
          %v2555 = vsel %vm2006, %v2550, 0
          %v2558 = vsel %vm2006, %v2553, 0
          %2560 = vmatprep.subr.mxu0 0.0
          %2561 = vmatpush1.msra.mxu0 %v1894
          %2562 = vmatprep.subr.mxu0 0.0
          %2563 = vmatpush1.msra.mxu0 %v1895
          %2564 = vmatprep.subr.mxu0 0.0
          %2565 = vmatpush1.msra.mxu0 %v1896
          %2566 = vmatprep.subr.mxu0 0.0
          %2567 = vmatpush1.msra.mxu0 %v1897
          %2568 = vmatprep.subr.mxu0 0.0
          %2569 = vmatpush1.msra.mxu0 %v1917
          %2570 = vmatprep.subr.mxu0 0.0
          %2571 = vmatpush1.msra.mxu0 %v1919
          %2572 = vmatprep.subr.mxu0 0.0
          %2573 = vmatpush1.msra.mxu0 %v1921
          %2574 = vmatprep.subr.mxu0 0.0
          %2575 = vmatpush1.msra.mxu0 %v1923
          %2576 = vmatprep.subr.mxu0 0.0
          %2577 = vmatpush1.msra.mxu0 %v1929
          %2578 = vmatprep.subr.mxu0 0.0
          %2579 = vmatpush1.msra.mxu0 %v1931
          %2580 = vmatprep.subr.mxu0 0.0
          %2581 = vmatpush1.msra.mxu0 %v1933
          %2582 = vmatprep.subr.mxu0 0.0
          %2583 = vmatpush1.msra.mxu0 %v1935
          %2584 = vmatprep.subr.mxu0 0.0
          %2585 = vmatpush1.msra.mxu0 %v1901
          %2586 = vmatprep.subr.mxu0 0.0
          %2587 = vmatpush1.msra.mxu0 %v1902
          %2588 = vmatprep.subr.mxu0 0.0
          %2589 = vmatpush1.msra.mxu0 %v1903
          %2590 = vmatprep.subr.mxu0 0.0
          %2591 = vmatpush1.msra.mxu0 %v1904
          %2592 = vmatprep.subr.mxu0 0.0
          %2593 = vmatpush1.msra.mxu0 %v1945
          %2594 = vmatprep.subr.mxu0 0.0
          %2595 = vmatpush1.msra.mxu0 %v1947
          %2596 = vmatprep.subr.mxu0 0.0
          %2597 = vmatpush1.msra.mxu0 %v1949
          %2598 = vmatprep.subr.mxu0 0.0
          %2599 = vmatpush1.msra.mxu0 %v1951
          %2600 = vmatprep.subr.mxu0 0.0
          %2601 = vmatpush1.msra.mxu0 %v1957
          %2602 = vmatprep.subr.mxu0 0.0
          %2603 = vmatpush1.msra.mxu0 %v1959
          %2604 = vmatprep.subr.mxu0 0.0
          %2605 = vmatpush1.msra.mxu0 %v1961
          %2606 = vmatprep.subr.mxu0 0.0
          %2607 = vmatpush1.msra.mxu0 %v1963
          %2608 = vmatprep.subr.mxu0 0.0
          %2609 = vmatpush1.msra.mxu0 %v1908
          %2610 = vmatprep.subr.mxu0 0.0
          %2611 = vmatpush1.msra.mxu0 %v1909
          %2612 = vmatprep.subr.mxu0 0.0
          %2613 = vmatpush1.msra.mxu0 %v1910
          %2614 = vmatprep.subr.mxu0 0.0
          %2615 = vmatpush1.msra.mxu0 %v1911
          %2616 = vmatprep.subr.mxu0 0.0
          %2617 = vmatpush1.msra.mxu0 %v1973
          %2618 = vmatprep.subr.mxu0 0.0
          %2619 = vmatpush1.msra.mxu0 %v1975
          %2620 = vmatprep.subr.mxu0 0.0
          %2621 = vmatpush1.msra.mxu0 %v1977
          %2622 = vmatprep.subr.mxu0 0.0
          %2623 = vmatpush1.msra.mxu0 %v1979
          %2624 = vmatprep.mubr.f32.mxu0 %v2549
          %2625 = vmatmul.mubr.f32.gmra.mrb[0].mxu0 %v2548
          %v2626 = vpop.f32.mrb[0].mxu0
          %v2627 = vadd.f32 0.0, %v2626
          %v2628 = vpop.f32.mrb[0].mxu0
          %2629 = vmatprep.mubr.f32.mxu0 %v2552
          %2630 = vmatmul.mubr.f32.gmra.mrb[0].mxu0 %v2551
          %v2631 = vpop.f32.mrb[0].mxu0
          %v2632 = vadd.f32 0.0, %v2631
          %v2633 = vpop.f32.mrb[0].mxu0
          %2634 = vdwg.mxu0
          %2635 = vmatprep.subr.mxu0 0.0
          %2636 = vmatpush1.msra.mxu0 %v1985
          %2637 = vmatprep.subr.mxu0 0.0
          %2638 = vmatpush1.msra.mxu0 %v1987
          %2639 = vmatprep.subr.mxu0 0.0
          %2640 = vmatpush1.msra.mxu0 %v1989
          %2641 = vmatprep.subr.mxu0 0.0
          %2642 = vmatpush1.msra.mxu0 %v1991
          %2643 = vmatprep.subr.mxu0 0.0
          %2644 = vmatpush1.msra.mxu0 0.0
          %2645 = vmatprep.subr.mxu0 0.0
          %2646 = vmatpush1.msra.mxu0 0.0
          %2647 = vmatprep.subr.mxu0 0.0
          %2648 = vmatpush1.msra.mxu0 0.0
          %2649 = vmatprep.subr.mxu0 0.0
          %2650 = vmatpush1.msra.mxu0 0.0
          %2651 = vmatprep.subr.mxu0 0.0
          %2652 = vmatpush1.msra.mxu0 0.0
          %2653 = vmatprep.subr.mxu0 0.0
          %2654 = vmatpush1.msra.mxu0 0.0
          %2655 = vmatprep.subr.mxu0 0.0
          %2656 = vmatpush1.msra.mxu0 0.0
          %2657 = vmatprep.subr.mxu0 0.0
          %2658 = vmatpush1.msra.mxu0 0.0
          %2659 = vmatprep.subr.mxu0 0.0
          %2660 = vmatpush1.msra.mxu0 0.0
          %2661 = vmatprep.subr.mxu0 0.0
          %2662 = vmatpush1.msra.mxu0 0.0
          %2663 = vmatprep.subr.mxu0 0.0
          %2664 = vmatpush1.msra.mxu0 0.0
          %2665 = vmatprep.subr.mxu0 0.0
          %2666 = vmatpush1.msra.mxu0 0.0
          %2667 = vmatprep.subr.mxu0 0.0
          %2668 = vmatpush1.msra.mxu0 0.0
          %2669 = vmatprep.subr.mxu0 0.0
          %2670 = vmatpush1.msra.mxu0 0.0
          %2671 = vmatprep.subr.mxu0 0.0
          %2672 = vmatpush1.msra.mxu0 0.0
          %2673 = vmatprep.subr.mxu0 0.0
          %2674 = vmatpush1.msra.mxu0 0.0
          %2675 = vmatprep.subr.mxu0 0.0
          %2676 = vmatpush1.msra.mxu0 0.0
          %2677 = vmatprep.subr.mxu0 0.0
          %2678 = vmatpush1.msra.mxu0 0.0
          %2679 = vmatprep.subr.mxu0 0.0
          %2680 = vmatpush1.msra.mxu0 0.0
          %2681 = vmatprep.subr.mxu0 0.0
          %2682 = vmatpush1.msra.mxu0 0.0
          %2683 = vmatprep.subr.mxu0 0.0
          %2684 = vmatpush1.msra.mxu0 0.0
          %2685 = vmatprep.subr.mxu0 0.0
          %2686 = vmatpush1.msra.mxu0 0.0
          %2687 = vmatprep.subr.mxu0 0.0
          %2688 = vmatpush1.msra.mxu0 0.0
          %2689 = vmatprep.subr.mxu0 0.0
          %2690 = vmatpush1.msra.mxu0 0.0
          %2691 = vmatprep.subr.mxu0 0.0
          %2692 = vmatpush1.msra.mxu0 0.0
          %2693 = vmatprep.subr.mxu0 0.0
          %2694 = vmatpush1.msra.mxu0 0.0
          %2695 = vmatprep.subr.mxu0 0.0
          %2696 = vmatpush1.msra.mxu0 0.0
          %2697 = vmatprep.subr.mxu0 0.0
          %2698 = vmatpush1.msra.mxu0 0.0
          %2699 = vmatprep.mubr.f32.mxu0 0.0
          %2700 = vmatmul.mubr.f32.gmra.mrb[0].mxu0 %v2555
          %v2701 = vpop.f32.mrb[0].mxu0
          %v2702 = vadd.f32 %v2627, %v2701
          %v2703 = vpop.f32.mrb[0].mxu0
          %2704 = vmatprep.mubr.f32.mxu0 0.0
          %2705 = vmatmul.mubr.f32.gmra.mrb[0].mxu0 %v2558
          %v2706 = vpop.f32.mrb[0].mxu0
          %v2707 = vadd.f32 %v2632, %v2706
          %v2708 = vpop.f32.mrb[0].mxu0
          %2709 = vdwg.mxu0
          %s2710 = scalar_lea.vmem %s4, 72
          %v2711 = vld [vmem:[%s2710] sm:$0xff]
          %v2712 = vld [vmem:[%s2710 + $0x8] sm:$0xf]
          %v2713 = vld [vmem:[%s2710 + $0xc] sm:$0xff]
          %v2714 = vld [vmem:[%s2710 + $0x14] sm:$0xf]
          %v2715 = vunpack.c.l.bf16 %v2711
          %v2716 = vunpack.c.h.bf16 %v2711
          %v2717 = vunpack.c.l.bf16 %v2712
          %v2718 = vunpack.c.l.bf16 %v2713
          %v2719 = vunpack.c.h.bf16 %v2713
          %v2720 = vunpack.c.l.bf16 %v2714
          %v2722 = vsel %vm2006, %v2717, 0
          %v2725 = vsel %vm2006, %v2720, 0
          %2727 = vmatprep.subr.mxu0 0.0
          %2728 = vmatpush1.msra.mxu0 %v1894
          %2729 = vmatprep.subr.mxu0 0.0
          %2730 = vmatpush1.msra.mxu0 %v1895
          %2731 = vmatprep.subr.mxu0 0.0
          %2732 = vmatpush1.msra.mxu0 %v1896
          %2733 = vmatprep.subr.mxu0 0.0
          %2734 = vmatpush1.msra.mxu0 %v1897
          %2735 = vmatprep.subr.mxu0 0.0
          %2736 = vmatpush1.msra.mxu0 %v1917
          %2737 = vmatprep.subr.mxu0 0.0
          %2738 = vmatpush1.msra.mxu0 %v1919
          %2739 = vmatprep.subr.mxu0 0.0
          %2740 = vmatpush1.msra.mxu0 %v1921
          %2741 = vmatprep.subr.mxu0 0.0
          %2742 = vmatpush1.msra.mxu0 %v1923
          %2743 = vmatprep.subr.mxu0 0.0
          %2744 = vmatpush1.msra.mxu0 %v1929
          %2745 = vmatprep.subr.mxu0 0.0
          %2746 = vmatpush1.msra.mxu0 %v1931
          %2747 = vmatprep.subr.mxu0 0.0
          %2748 = vmatpush1.msra.mxu0 %v1933
          %2749 = vmatprep.subr.mxu0 0.0
          %2750 = vmatpush1.msra.mxu0 %v1935
          %2751 = vmatprep.subr.mxu0 0.0
          %2752 = vmatpush1.msra.mxu0 %v1901
          %2753 = vmatprep.subr.mxu0 0.0
          %2754 = vmatpush1.msra.mxu0 %v1902
          %2755 = vmatprep.subr.mxu0 0.0
          %2756 = vmatpush1.msra.mxu0 %v1903
          %2757 = vmatprep.subr.mxu0 0.0
          %2758 = vmatpush1.msra.mxu0 %v1904
          %2759 = vmatprep.subr.mxu0 0.0
          %2760 = vmatpush1.msra.mxu0 %v1945
          %2761 = vmatprep.subr.mxu0 0.0
          %2762 = vmatpush1.msra.mxu0 %v1947
          %2763 = vmatprep.subr.mxu0 0.0
          %2764 = vmatpush1.msra.mxu0 %v1949
          %2765 = vmatprep.subr.mxu0 0.0
          %2766 = vmatpush1.msra.mxu0 %v1951
          %2767 = vmatprep.subr.mxu0 0.0
          %2768 = vmatpush1.msra.mxu0 %v1957
          %2769 = vmatprep.subr.mxu0 0.0
          %2770 = vmatpush1.msra.mxu0 %v1959
          %2771 = vmatprep.subr.mxu0 0.0
          %2772 = vmatpush1.msra.mxu0 %v1961
          %2773 = vmatprep.subr.mxu0 0.0
          %2774 = vmatpush1.msra.mxu0 %v1963
          %2775 = vmatprep.subr.mxu0 0.0
          %2776 = vmatpush1.msra.mxu0 %v1908
          %2777 = vmatprep.subr.mxu0 0.0
          %2778 = vmatpush1.msra.mxu0 %v1909
          %2779 = vmatprep.subr.mxu0 0.0
          %2780 = vmatpush1.msra.mxu0 %v1910
          %2781 = vmatprep.subr.mxu0 0.0
          %2782 = vmatpush1.msra.mxu0 %v1911
          %2783 = vmatprep.subr.mxu0 0.0
          %2784 = vmatpush1.msra.mxu0 %v1973
          %2785 = vmatprep.subr.mxu0 0.0
          %2786 = vmatpush1.msra.mxu0 %v1975
          %2787 = vmatprep.subr.mxu0 0.0
          %2788 = vmatpush1.msra.mxu0 %v1977
          %2789 = vmatprep.subr.mxu0 0.0
          %2790 = vmatpush1.msra.mxu0 %v1979
          %2791 = vmatprep.mubr.f32.mxu0 %v2716
          %2792 = vmatmul.mubr.f32.gmra.mrb[0].mxu0 %v2715
          %v2793 = vpop.f32.mrb[0].mxu0
          %v2794 = vadd.f32 0.0, %v2793
          %v2795 = vpop.f32.mrb[0].mxu0
          %2796 = vmatprep.mubr.f32.mxu0 %v2719
          %2797 = vmatmul.mubr.f32.gmra.mrb[0].mxu0 %v2718
          %v2798 = vpop.f32.mrb[0].mxu0
          %v2799 = vadd.f32 0.0, %v2798
          %v2800 = vpop.f32.mrb[0].mxu0
          %2801 = vdwg.mxu0
          %2802 = vmatprep.subr.mxu0 0.0
          %2803 = vmatpush1.msra.mxu0 %v1985
          %2804 = vmatprep.subr.mxu0 0.0
          %2805 = vmatpush1.msra.mxu0 %v1987
          %2806 = vmatprep.subr.mxu0 0.0
          %2807 = vmatpush1.msra.mxu0 %v1989
          %2808 = vmatprep.subr.mxu0 0.0
          %2809 = vmatpush1.msra.mxu0 %v1991
          %2810 = vmatprep.subr.mxu0 0.0
          %2811 = vmatpush1.msra.mxu0 0.0
          %2812 = vmatprep.subr.mxu0 0.0
          %2813 = vmatpush1.msra.mxu0 0.0
          %2814 = vmatprep.subr.mxu0 0.0
          %2815 = vmatpush1.msra.mxu0 0.0
          %2816 = vmatprep.subr.mxu0 0.0
          %2817 = vmatpush1.msra.mxu0 0.0
          %2818 = vmatprep.subr.mxu0 0.0
          %2819 = vmatpush1.msra.mxu0 0.0
          %2820 = vmatprep.subr.mxu0 0.0
          %2821 = vmatpush1.msra.mxu0 0.0
          %2822 = vmatprep.subr.mxu0 0.0
          %2823 = vmatpush1.msra.mxu0 0.0
          %2824 = vmatprep.subr.mxu0 0.0
          %2825 = vmatpush1.msra.mxu0 0.0
          %2826 = vmatprep.subr.mxu0 0.0
          %2827 = vmatpush1.msra.mxu0 0.0
          %2828 = vmatprep.subr.mxu0 0.0
          %2829 = vmatpush1.msra.mxu0 0.0
          %2830 = vmatprep.subr.mxu0 0.0
          %2831 = vmatpush1.msra.mxu0 0.0
          %2832 = vmatprep.subr.mxu0 0.0
          %2833 = vmatpush1.msra.mxu0 0.0
          %2834 = vmatprep.subr.mxu0 0.0
          %2835 = vmatpush1.msra.mxu0 0.0
          %2836 = vmatprep.subr.mxu0 0.0
          %2837 = vmatpush1.msra.mxu0 0.0
          %2838 = vmatprep.subr.mxu0 0.0
          %2839 = vmatpush1.msra.mxu0 0.0
          %2840 = vmatprep.subr.mxu0 0.0
          %2841 = vmatpush1.msra.mxu0 0.0
          %2842 = vmatprep.subr.mxu0 0.0
          %2843 = vmatpush1.msra.mxu0 0.0
          %2844 = vmatprep.subr.mxu0 0.0
          %2845 = vmatpush1.msra.mxu0 0.0
          %2846 = vmatprep.subr.mxu0 0.0
          %2847 = vmatpush1.msra.mxu0 0.0
          %2848 = vmatprep.subr.mxu0 0.0
          %2849 = vmatpush1.msra.mxu0 0.0
          %2850 = vmatprep.subr.mxu0 0.0
          %2851 = vmatpush1.msra.mxu0 0.0
          %2852 = vmatprep.subr.mxu0 0.0
          %2853 = vmatpush1.msra.mxu0 0.0
          %2854 = vmatprep.subr.mxu0 0.0
          %2855 = vmatpush1.msra.mxu0 0.0
          %2856 = vmatprep.subr.mxu0 0.0
          %2857 = vmatpush1.msra.mxu0 0.0
          %2858 = vmatprep.subr.mxu0 0.0
          %2859 = vmatpush1.msra.mxu0 0.0
          %2860 = vmatprep.subr.mxu0 0.0
          %2861 = vmatpush1.msra.mxu0 0.0
          %2862 = vmatprep.subr.mxu0 0.0
          %2863 = vmatpush1.msra.mxu0 0.0
          %2864 = vmatprep.subr.mxu0 0.0
          %2865 = vmatpush1.msra.mxu0 0.0
          %2866 = vmatprep.mubr.f32.mxu0 0.0
          %2867 = vmatmul.mubr.f32.gmra.mrb[0].mxu0 %v2722
          %v2868 = vpop.f32.mrb[0].mxu0
          %v2869 = vadd.f32 %v2794, %v2868
          %v2870 = vpop.f32.mrb[0].mxu0
          %2871 = vmatprep.mubr.f32.mxu0 0.0
          %2872 = vmatmul.mubr.f32.gmra.mrb[0].mxu0 %v2725
          %v2873 = vpop.f32.mrb[0].mxu0
          %v2874 = vadd.f32 %v2799, %v2873
          %v2875 = vpop.f32.mrb[0].mxu0
          %2876 = vdwg.mxu0
          %v2878 = vsel %vm2330, %v2869, 0
          %v2881 = vsel %vm2330, %v2874, 0
          %2883 = vmatprep.subr.mxu0 0.0
          %2884 = vmatpush1.msra.mxu0 %v2339
          %2885 = vmatprep.subr.mxu0 0.0
          %2886 = vmatpush1.msra.mxu0 0.0
          %2887 = vmatprep.subr.mxu0 0.0
          %2888 = vmatpush1.msra.mxu0 0.0
          %2889 = vmatprep.subr.mxu0 0.0
          %2890 = vmatpush1.msra.mxu0 0.0
          %2891 = vmatprep.subr.mxu0 0.0
          %2892 = vmatpush1.msra.mxu0 0.0
          %2893 = vmatprep.subr.mxu0 0.0
          %2894 = vmatpush1.msra.mxu0 0.0
          %2895 = vmatprep.subr.mxu0 0.0
          %2896 = vmatpush1.msra.mxu0 0.0
          %2897 = vmatprep.subr.mxu0 0.0
          %2898 = vmatpush1.msra.mxu0 0.0
          %2899 = vmatprep.subr.mxu0 0.0
          %2900 = vmatpush1.msra.mxu0 0.0
          %2901 = vmatprep.subr.mxu0 0.0
          %2902 = vmatpush1.msra.mxu0 0.0
          %2903 = vmatprep.subr.mxu0 0.0
          %2904 = vmatpush1.msra.mxu0 0.0
          %2905 = vmatprep.subr.mxu0 0.0
          %2906 = vmatpush1.msra.mxu0 0.0
          %2907 = vmatprep.subr.mxu0 0.0
          %2908 = vmatpush1.msra.mxu0 0.0
          %2909 = vmatprep.subr.mxu0 0.0
          %2910 = vmatpush1.msra.mxu0 0.0
          %2911 = vmatprep.subr.mxu0 0.0
          %2912 = vmatpush1.msra.mxu0 0.0
          %2913 = vmatprep.subr.mxu0 0.0
          %2914 = vmatpush1.msra.mxu0 0.0
          %2915 = vmatprep.subr.mxu0 0.0
          %2916 = vmatpush1.msra.mxu0 0.0
          %2917 = vmatprep.subr.mxu0 0.0
          %2918 = vmatpush1.msra.mxu0 0.0
          %2919 = vmatprep.subr.mxu0 0.0
          %2920 = vmatpush1.msra.mxu0 0.0
          %2921 = vmatprep.subr.mxu0 0.0
          %2922 = vmatpush1.msra.mxu0 0.0
          %2923 = vmatprep.subr.mxu0 0.0
          %2924 = vmatpush1.msra.mxu0 0.0
          %2925 = vmatprep.subr.mxu0 0.0
          %2926 = vmatpush1.msra.mxu0 0.0
          %2927 = vmatprep.subr.mxu0 0.0
          %2928 = vmatpush1.msra.mxu0 0.0
          %2929 = vmatprep.subr.mxu0 0.0
          %2930 = vmatpush1.msra.mxu0 0.0
          %2931 = vmatprep.subr.mxu0 0.0
          %2932 = vmatpush1.msra.mxu0 0.0
          %2933 = vmatprep.subr.mxu0 0.0
          %2934 = vmatpush1.msra.mxu0 0.0
          %2935 = vmatprep.subr.mxu0 0.0
          %2936 = vmatpush1.msra.mxu0 0.0
          %2937 = vmatprep.subr.mxu0 0.0
          %2938 = vmatpush1.msra.mxu0 0.0
          %2939 = vmatprep.subr.mxu0 0.0
          %2940 = vmatpush1.msra.mxu0 0.0
          %2941 = vmatprep.subr.mxu0 0.0
          %2942 = vmatpush1.msra.mxu0 0.0
          %2943 = vmatprep.subr.mxu0 0.0
          %2944 = vmatpush1.msra.mxu0 0.0
          %2945 = vmatprep.subr.mxu0 0.0
          %2946 = vmatpush1.msra.mxu0 0.0
          %2947 = vmatprep.mubr.f32.mxu0 0.0
          %2948 = vmatmul.mubr.f32.gmra.mrb[0].mxu0 %v2878
          %v2949 = vpop.f32.mrb[0].mxu0
          %v2950 = vadd.f32 0.0, %v2949
          %v2951 = vpop.f32.mrb[0].mxu0
          %2952 = vmatprep.mubr.f32.mxu0 0.0
          %2953 = vmatmul.mubr.f32.gmra.mrb[0].mxu0 %v2881
          %v2954 = vpop.f32.mrb[0].mxu0
          %v2955 = vadd.f32 0.0, %v2954
          %v2956 = vpop.f32.mrb[0].mxu0
          %2957 = vdwg.mxu0
          %v2959 = vsel %vm2330, %v2702, 0
          %v2962 = vsel %vm2330, %v2707, 0
          %2964 = vmatprep.subr.mxu0 0.0
          %2965 = vmatpush1.msra.mxu0 %v2423
          %2966 = vmatprep.subr.mxu0 0.0
          %2967 = vmatpush1.msra.mxu0 0.0
          %2968 = vmatprep.subr.mxu0 0.0
          %2969 = vmatpush1.msra.mxu0 0.0
          %2970 = vmatprep.subr.mxu0 0.0
          %2971 = vmatpush1.msra.mxu0 0.0
          %2972 = vmatprep.subr.mxu0 0.0
          %2973 = vmatpush1.msra.mxu0 0.0
          %2974 = vmatprep.subr.mxu0 0.0
          %2975 = vmatpush1.msra.mxu0 0.0
          %2976 = vmatprep.subr.mxu0 0.0
          %2977 = vmatpush1.msra.mxu0 0.0
          %2978 = vmatprep.subr.mxu0 0.0
          %2979 = vmatpush1.msra.mxu0 0.0
          %2980 = vmatprep.subr.mxu0 0.0
          %2981 = vmatpush1.msra.mxu0 0.0
          %2982 = vmatprep.subr.mxu0 0.0
          %2983 = vmatpush1.msra.mxu0 0.0
          %2984 = vmatprep.subr.mxu0 0.0
          %2985 = vmatpush1.msra.mxu0 0.0
          %2986 = vmatprep.subr.mxu0 0.0
          %2987 = vmatpush1.msra.mxu0 0.0
          %2988 = vmatprep.subr.mxu0 0.0
          %2989 = vmatpush1.msra.mxu0 0.0
          %2990 = vmatprep.subr.mxu0 0.0
          %2991 = vmatpush1.msra.mxu0 0.0
          %2992 = vmatprep.subr.mxu0 0.0
          %2993 = vmatpush1.msra.mxu0 0.0
          %2994 = vmatprep.subr.mxu0 0.0
          %2995 = vmatpush1.msra.mxu0 0.0
          %2996 = vmatprep.subr.mxu0 0.0
          %2997 = vmatpush1.msra.mxu0 0.0
          %2998 = vmatprep.subr.mxu0 0.0
          %2999 = vmatpush1.msra.mxu0 0.0
          %3000 = vmatprep.subr.mxu0 0.0
          %3001 = vmatpush1.msra.mxu0 0.0
          %3002 = vmatprep.subr.mxu0 0.0
          %3003 = vmatpush1.msra.mxu0 0.0
          %3004 = vmatprep.subr.mxu0 0.0
          %3005 = vmatpush1.msra.mxu0 0.0
          %3006 = vmatprep.subr.mxu0 0.0
          %3007 = vmatpush1.msra.mxu0 0.0
          %3008 = vmatprep.subr.mxu0 0.0
          %3009 = vmatpush1.msra.mxu0 0.0
          %3010 = vmatprep.subr.mxu0 0.0
          %3011 = vmatpush1.msra.mxu0 0.0
          %3012 = vmatprep.subr.mxu0 0.0
          %3013 = vmatpush1.msra.mxu0 0.0
          %3014 = vmatprep.subr.mxu0 0.0
          %3015 = vmatpush1.msra.mxu0 0.0
          %3016 = vmatprep.subr.mxu0 0.0
          %3017 = vmatpush1.msra.mxu0 0.0
          %3018 = vmatprep.subr.mxu0 0.0
          %3019 = vmatpush1.msra.mxu0 0.0
          %3020 = vmatprep.subr.mxu0 0.0
          %3021 = vmatpush1.msra.mxu0 0.0
          %3022 = vmatprep.subr.mxu0 0.0
          %3023 = vmatpush1.msra.mxu0 0.0
          %3024 = vmatprep.subr.mxu0 0.0
          %3025 = vmatpush1.msra.mxu0 0.0
          %3026 = vmatprep.subr.mxu0 0.0
          %3027 = vmatpush1.msra.mxu0 0.0
          %3028 = vmatprep.mubr.f32.mxu0 0.0
          %3029 = vmatmul.mubr.f32.gmra.mrb[0].mxu0 %v2959
          %v3030 = vpop.f32.mrb[0].mxu0
          %v3031 = vadd.f32 %v2950, %v3030
          %v3032 = vpop.f32.mrb[0].mxu0
          %3033 = vmatprep.mubr.f32.mxu0 0.0
          %3034 = vmatmul.mubr.f32.gmra.mrb[0].mxu0 %v2962
          %v3035 = vpop.f32.mrb[0].mxu0
          %v3036 = vadd.f32 %v2955, %v3035
          %v3037 = vpop.f32.mrb[0].mxu0
          %3038 = vdwg.mxu0
          %v3039 = vmul.f32 %v3031, %v2504
          %v3040 = vmul.f32 %v3036, %v2509
          %v3041 = vadd.f32 %v3039, %v2516
          %v3042 = vadd.f32 %v3040, %v2521
          %v3043 = vmul.f32 %v3041, 0.2
          %v3044 = vmul.f32 %v3042, 0.2
          %v3045 = vmax.f32 %v3041, %v3043
          %v3046 = vmax.f32 %v3042, %v3044
          %s3047 = sadd.s32 %s2500, 2
          %3050 = vrot.lane.b32.xlu0 %v3045, 1
          %v3051 = vpop.permute.xlu0 %3050
          %3052 = vrot.lane.b32.xlu0 %v3046, 1
          %v3053 = vpop.permute.xlu0 %3052
          %s3056 = smul.u32 %s3047, 16
          %s3057 = scalar_lea.vmem [#allocation3], %s3056
          %3058 = vst.msk [vmem:[%s3057] sm:$0xff] %vm2540, %v3051
          %3059 = vst.msk [vmem:[%s3057 + $0x8] sm:$0xff] %vm2540, %v3053
        $region69: #{generator_forward.1} parent=63 // loop_footer
          %s1891 = sadd.s32 1, %s1887
        $region70: #{generator_forward.1} parent=63 // loop_footer_branch
          %1886 = sbr.rel target = $region66
        $region71: #{generator_forward.1} parent=63 // loop_exit
          _
        %v3060 = vld [vmem:[%s8] sm:$0xff]
        %v3061 = vld [vmem:[%s9] sm:$0xff]
        loop: start=0, step=1, limit=8
        $region72: #{generator_forward.1} parent=63 // loop_pre_header
          _
        $region73: #{generator_forward.1} parent=63 // loop_header
          %s3063 = sphi 0, %s3067
          %p3064 = scmp.ge.s32.totalorder %s3063, 8
        $region74: #{generator_forward.1} parent=63 // loop_header_branch
          %3066 = sbr.rel (%p3064) target = $region78
        $region75: #{generator_forward.1} parent=63 // loop_body
          %s3068 = smul.u32 %s3063, 16
          %s3069 = scalar_lea.vmem [#allocation3], %s3068
          %v3070 = vld [vmem:[%s3069] sm:$0xff]
          %v3071 = vld [vmem:[%s3069 + $0x8] sm:$0xff]
          %s3072 = sadd.s32 %s3063, 1
          %s3073 = smul.u32 %s3072, 16
          %s3074 = scalar_lea.vmem [#allocation3], %s3073
          %v3075 = vld [vmem:[%s3074] sm:$0xff]
          %v3076 = vld [vmem:[%s3074 + $0x8] sm:$0xff]
          %s3077 = sadd.s32 %s3063, 2
          %s3078 = smul.u32 %s3077, 16
          %s3079 = scalar_lea.vmem [#allocation3], %s3078
          %v3080 = vld [vmem:[%s3079] sm:$0xff]
          %v3081 = vld [vmem:[%s3079 + $0x8] sm:$0xff]
          %3084 = vrot.lane.b32.xlu0 %v3070, 127
          %v3085 = vpop.permute.xlu0 %3084
          %3086 = vrot.lane.b32.xlu0 %v3071, 127
          %v3087 = vpop.permute.xlu0 %3086
          %3090 = vrot.lane.b32.xlu0 %v3070, 126
          %v3091 = vpop.permute.xlu0 %3090
          %3092 = vrot.lane.b32.xlu0 %v3071, 126
          %v3093 = vpop.permute.xlu0 %3092
          %3098 = vrot.lane.b32.xlu0 %v3075, 127
          %v3099 = vpop.permute.xlu0 %3098
          %3100 = vrot.lane.b32.xlu0 %v3076, 127
          %v3101 = vpop.permute.xlu0 %3100
          %3104 = vrot.lane.b32.xlu0 %v3075, 126
          %v3105 = vpop.permute.xlu0 %3104
          %3106 = vrot.lane.b32.xlu0 %v3076, 126
          %v3107 = vpop.permute.xlu0 %3106
          %3112 = vrot.lane.b32.xlu0 %v3080, 127
          %v3113 = vpop.permute.xlu0 %3112
          %3114 = vrot.lane.b32.xlu0 %v3081, 127
          %v3115 = vpop.permute.xlu0 %3114
          %3118 = vrot.lane.b32.xlu0 %v3080, 126
          %v3119 = vpop.permute.xlu0 %3118
          %3120 = vrot.lane.b32.xlu0 %v3081, 126
          %v3121 = vpop.permute.xlu0 %3120
          %v3124 = vld [vmem:[%s7] sm:$0xff]
          %v3125 = vunpack.c.l.bf16 %v3124
          %v3126 = vunpack.c.h.bf16 %v3124
          %v3128 = vsel %vm580, %v3126, 0
          %3130 = vmatprep.subr.mxu0 0.0
          %3131 = vmatpush1.msra.mxu0 %v3070
          %3132 = vmatprep.subr.mxu0 0.0
          %3133 = vmatpush1.msra.mxu0 %v3071
          %3134 = vmatprep.subr.mxu0 0.0
          %3135 = vmatpush1.msra.mxu0 %v3085
          %3136 = vmatprep.subr.mxu0 0.0
          %3137 = vmatpush1.msra.mxu0 %v3087
          %3138 = vmatprep.subr.mxu0 0.0
          %3139 = vmatpush1.msra.mxu0 %v3091
          %3140 = vmatprep.subr.mxu0 0.0
          %3141 = vmatpush1.msra.mxu0 %v3093
          %3142 = vmatprep.subr.mxu0 0.0
          %3143 = vmatpush1.msra.mxu0 %v3075
          %3144 = vmatprep.subr.mxu0 0.0
          %3145 = vmatpush1.msra.mxu0 %v3076
          %3146 = vmatprep.subr.mxu0 0.0
          %3147 = vmatpush1.msra.mxu0 %v3099
          %3148 = vmatprep.subr.mxu0 0.0
          %3149 = vmatpush1.msra.mxu0 %v3101
          %3150 = vmatprep.subr.mxu0 0.0
          %3151 = vmatpush1.msra.mxu0 %v3105
          %3152 = vmatprep.subr.mxu0 0.0
          %3153 = vmatpush1.msra.mxu0 %v3107
          %3154 = vmatprep.subr.mxu0 0.0
          %3155 = vmatpush1.msra.mxu0 %v3080
          %3156 = vmatprep.subr.mxu0 0.0
          %3157 = vmatpush1.msra.mxu0 %v3081
          %3158 = vmatprep.subr.mxu0 0.0
          %3159 = vmatpush1.msra.mxu0 %v3113
          %3160 = vmatprep.subr.mxu0 0.0
          %3161 = vmatpush1.msra.mxu0 %v3115
          %3162 = vmatprep.subr.mxu0 0.0
          %3163 = vmatpush1.msra.mxu0 %v3119
          %3164 = vmatprep.subr.mxu0 0.0
          %3165 = vmatpush1.msra.mxu0 %v3121
          %3166 = vmatprep.subr.mxu0 0.0
          %3167 = vmatpush1.msra.mxu0 0.0
          %3168 = vmatprep.subr.mxu0 0.0
          %3169 = vmatpush1.msra.mxu0 0.0
          %3170 = vmatprep.subr.mxu0 0.0
          %3171 = vmatpush1.msra.mxu0 0.0
          %3172 = vmatprep.subr.mxu0 0.0
          %3173 = vmatpush1.msra.mxu0 0.0
          %3174 = vmatprep.subr.mxu0 0.0
          %3175 = vmatpush1.msra.mxu0 0.0
          %3176 = vmatprep.subr.mxu0 0.0
          %3177 = vmatpush1.msra.mxu0 0.0
          %3178 = vmatprep.subr.mxu0 0.0
          %3179 = vmatpush1.msra.mxu0 0.0
          %3180 = vmatprep.subr.mxu0 0.0
          %3181 = vmatpush1.msra.mxu0 0.0
          %3182 = vmatprep.subr.mxu0 0.0
          %3183 = vmatpush1.msra.mxu0 0.0
          %3184 = vmatprep.subr.mxu0 0.0
          %3185 = vmatpush1.msra.mxu0 0.0
          %3186 = vmatprep.subr.mxu0 0.0
          %3187 = vmatpush1.msra.mxu0 0.0
          %3188 = vmatprep.subr.mxu0 0.0
          %3189 = vmatpush1.msra.mxu0 0.0
          %3190 = vmatprep.subr.mxu0 0.0
          %3191 = vmatpush1.msra.mxu0 0.0
          %3192 = vmatprep.subr.mxu0 0.0
          %3193 = vmatpush1.msra.mxu0 0.0
          %3194 = vmatprep.mubr.f32.mxu0 %v3128
          %3195 = vmatmul.mubr.f32.gmra.mrb[0].mxu0 %v3125
          %v3196 = vpop.f32.mrb[0].mxu0
          %v3197 = vadd.f32 0.0, %v3196
          %v3198 = vpop.f32.mrb[0].mxu0
          %3199 = vdwg.mxu0
          %s3200 = scalar_lea.vmem %s7, 8
          %v3201 = vld [vmem:[%s3200] sm:$0xff]
          %v3202 = vunpack.c.l.bf16 %v3201
          %v3203 = vunpack.c.h.bf16 %v3201
          %v3205 = vsel %vm580, %v3203, 0
          %3207 = vmatprep.subr.mxu0 0.0
          %3208 = vmatpush1.msra.mxu0 %v3070
          %3209 = vmatprep.subr.mxu0 0.0
          %3210 = vmatpush1.msra.mxu0 %v3071
          %3211 = vmatprep.subr.mxu0 0.0
          %3212 = vmatpush1.msra.mxu0 %v3085
          %3213 = vmatprep.subr.mxu0 0.0
          %3214 = vmatpush1.msra.mxu0 %v3087
          %3215 = vmatprep.subr.mxu0 0.0
          %3216 = vmatpush1.msra.mxu0 %v3091
          %3217 = vmatprep.subr.mxu0 0.0
          %3218 = vmatpush1.msra.mxu0 %v3093
          %3219 = vmatprep.subr.mxu0 0.0
          %3220 = vmatpush1.msra.mxu0 %v3075
          %3221 = vmatprep.subr.mxu0 0.0
          %3222 = vmatpush1.msra.mxu0 %v3076
          %3223 = vmatprep.subr.mxu0 0.0
          %3224 = vmatpush1.msra.mxu0 %v3099
          %3225 = vmatprep.subr.mxu0 0.0
          %3226 = vmatpush1.msra.mxu0 %v3101
          %3227 = vmatprep.subr.mxu0 0.0
          %3228 = vmatpush1.msra.mxu0 %v3105
          %3229 = vmatprep.subr.mxu0 0.0
          %3230 = vmatpush1.msra.mxu0 %v3107
          %3231 = vmatprep.subr.mxu0 0.0
          %3232 = vmatpush1.msra.mxu0 %v3080
          %3233 = vmatprep.subr.mxu0 0.0
          %3234 = vmatpush1.msra.mxu0 %v3081
          %3235 = vmatprep.subr.mxu0 0.0
          %3236 = vmatpush1.msra.mxu0 %v3113
          %3237 = vmatprep.subr.mxu0 0.0
          %3238 = vmatpush1.msra.mxu0 %v3115
          %3239 = vmatprep.subr.mxu0 0.0
          %3240 = vmatpush1.msra.mxu0 %v3119
          %3241 = vmatprep.subr.mxu0 0.0
          %3242 = vmatpush1.msra.mxu0 %v3121
          %3243 = vmatprep.subr.mxu0 0.0
          %3244 = vmatpush1.msra.mxu0 0.0
          %3245 = vmatprep.subr.mxu0 0.0
          %3246 = vmatpush1.msra.mxu0 0.0
          %3247 = vmatprep.subr.mxu0 0.0
          %3248 = vmatpush1.msra.mxu0 0.0
          %3249 = vmatprep.subr.mxu0 0.0
          %3250 = vmatpush1.msra.mxu0 0.0
          %3251 = vmatprep.subr.mxu0 0.0
          %3252 = vmatpush1.msra.mxu0 0.0
          %3253 = vmatprep.subr.mxu0 0.0
          %3254 = vmatpush1.msra.mxu0 0.0
          %3255 = vmatprep.subr.mxu0 0.0
          %3256 = vmatpush1.msra.mxu0 0.0
          %3257 = vmatprep.subr.mxu0 0.0
          %3258 = vmatpush1.msra.mxu0 0.0
          %3259 = vmatprep.subr.mxu0 0.0
          %3260 = vmatpush1.msra.mxu0 0.0
          %3261 = vmatprep.subr.mxu0 0.0
          %3262 = vmatpush1.msra.mxu0 0.0
          %3263 = vmatprep.subr.mxu0 0.0
          %3264 = vmatpush1.msra.mxu0 0.0
          %3265 = vmatprep.subr.mxu0 0.0
          %3266 = vmatpush1.msra.mxu0 0.0
          %3267 = vmatprep.subr.mxu0 0.0
          %3268 = vmatpush1.msra.mxu0 0.0
          %3269 = vmatprep.subr.mxu0 0.0
          %3270 = vmatpush1.msra.mxu0 0.0
          %3271 = vmatprep.mubr.f32.mxu0 %v3205
          %3272 = vmatmul.mubr.f32.gmra.mrb[0].mxu0 %v3202
          %v3273 = vpop.f32.mrb[0].mxu0
          %v3274 = vadd.f32 0.0, %v3273
          %v3275 = vpop.f32.mrb[0].mxu0
          %3276 = vdwg.mxu0
          %vm3277 = vcmask 64512
          %v3279 = vsel %vm3277, %v3274, 0
          %3281 = vmatprep.subr.mxu0 0.0
          %3282 = vmatpush1.msra.mxu0 %v1885
          %3283 = vmatprep.subr.mxu0 0.0
          %3284 = vmatpush1.msra.mxu0 0.0
          %3285 = vmatprep.subr.mxu0 0.0
          %3286 = vmatpush1.msra.mxu0 0.0
          %3287 = vmatprep.subr.mxu0 0.0
          %3288 = vmatpush1.msra.mxu0 0.0
          %3289 = vmatprep.subr.mxu0 0.0
          %3290 = vmatpush1.msra.mxu0 0.0
          %3291 = vmatprep.subr.mxu0 0.0
          %3292 = vmatpush1.msra.mxu0 0.0
          %3293 = vmatprep.subr.mxu0 0.0
          %3294 = vmatpush1.msra.mxu0 0.0
          %3295 = vmatprep.subr.mxu0 0.0
          %3296 = vmatpush1.msra.mxu0 0.0
          %3297 = vmatprep.subr.mxu0 0.0
          %3298 = vmatpush1.msra.mxu0 0.0
          %3299 = vmatprep.subr.mxu0 0.0
          %3300 = vmatpush1.msra.mxu0 0.0
          %3301 = vmatprep.subr.mxu0 0.0
          %3302 = vmatpush1.msra.mxu0 0.0
          %3303 = vmatprep.subr.mxu0 0.0
          %3304 = vmatpush1.msra.mxu0 0.0
          %3305 = vmatprep.subr.mxu0 0.0
          %3306 = vmatpush1.msra.mxu0 0.0
          %3307 = vmatprep.subr.mxu0 0.0
          %3308 = vmatpush1.msra.mxu0 0.0
          %3309 = vmatprep.subr.mxu0 0.0
          %3310 = vmatpush1.msra.mxu0 0.0
          %3311 = vmatprep.subr.mxu0 0.0
          %3312 = vmatpush1.msra.mxu0 0.0
          %3313 = vmatprep.subr.mxu0 0.0
          %3314 = vmatpush1.msra.mxu0 0.0
          %3315 = vmatprep.subr.mxu0 0.0
          %3316 = vmatpush1.msra.mxu0 0.0
          %3317 = vmatprep.subr.mxu0 0.0
          %3318 = vmatpush1.msra.mxu0 0.0
          %3319 = vmatprep.subr.mxu0 0.0
          %3320 = vmatpush1.msra.mxu0 0.0
          %3321 = vmatprep.subr.mxu0 0.0
          %3322 = vmatpush1.msra.mxu0 0.0
          %3323 = vmatprep.subr.mxu0 0.0
          %3324 = vmatpush1.msra.mxu0 0.0
          %3325 = vmatprep.subr.mxu0 0.0
          %3326 = vmatpush1.msra.mxu0 0.0
          %3327 = vmatprep.subr.mxu0 0.0
          %3328 = vmatpush1.msra.mxu0 0.0
          %3329 = vmatprep.subr.mxu0 0.0
          %3330 = vmatpush1.msra.mxu0 0.0
          %3331 = vmatprep.subr.mxu0 0.0
          %3332 = vmatpush1.msra.mxu0 0.0
          %3333 = vmatprep.subr.mxu0 0.0
          %3334 = vmatpush1.msra.mxu0 0.0
          %3335 = vmatprep.subr.mxu0 0.0
          %3336 = vmatpush1.msra.mxu0 0.0
          %3337 = vmatprep.subr.mxu0 0.0
          %3338 = vmatpush1.msra.mxu0 0.0
          %3339 = vmatprep.subr.mxu0 0.0
          %3340 = vmatpush1.msra.mxu0 0.0
          %3341 = vmatprep.subr.mxu0 0.0
          %3342 = vmatpush1.msra.mxu0 0.0
          %3343 = vmatprep.subr.mxu0 0.0
          %3344 = vmatpush1.msra.mxu0 0.0
          %3345 = vmatprep.mubr.f32.mxu0 0.0
          %3346 = vmatmul.mubr.f32.gmra.mrb[0].mxu0 %v3279
          %v3347 = vpop.f32.mrb[0].mxu0
          %v3348 = vadd.f32 0.0, %v3347
          %v3349 = vpop.f32.mrb[0].mxu0
          %3350 = vdwg.mxu0
          %v3352 = vsel %vm3277, %v3197, 0
          %3354 = vmatprep.subr.mxu0 0.0
          %3355 = vmatpush1.msra.mxu0 %v1881
          %3356 = vmatprep.subr.mxu0 0.0
          %3357 = vmatpush1.msra.mxu0 0.0
          %3358 = vmatprep.subr.mxu0 0.0
          %3359 = vmatpush1.msra.mxu0 0.0
          %3360 = vmatprep.subr.mxu0 0.0
          %3361 = vmatpush1.msra.mxu0 0.0
          %3362 = vmatprep.subr.mxu0 0.0
          %3363 = vmatpush1.msra.mxu0 0.0
          %3364 = vmatprep.subr.mxu0 0.0
          %3365 = vmatpush1.msra.mxu0 0.0
          %3366 = vmatprep.subr.mxu0 0.0
          %3367 = vmatpush1.msra.mxu0 0.0
          %3368 = vmatprep.subr.mxu0 0.0
          %3369 = vmatpush1.msra.mxu0 0.0
          %3370 = vmatprep.subr.mxu0 0.0
          %3371 = vmatpush1.msra.mxu0 0.0
          %3372 = vmatprep.subr.mxu0 0.0
          %3373 = vmatpush1.msra.mxu0 0.0
          %3374 = vmatprep.subr.mxu0 0.0
          %3375 = vmatpush1.msra.mxu0 0.0
          %3376 = vmatprep.subr.mxu0 0.0
          %3377 = vmatpush1.msra.mxu0 0.0
          %3378 = vmatprep.subr.mxu0 0.0
          %3379 = vmatpush1.msra.mxu0 0.0
          %3380 = vmatprep.subr.mxu0 0.0
          %3381 = vmatpush1.msra.mxu0 0.0
          %3382 = vmatprep.subr.mxu0 0.0
          %3383 = vmatpush1.msra.mxu0 0.0
          %3384 = vmatprep.subr.mxu0 0.0
          %3385 = vmatpush1.msra.mxu0 0.0
          %3386 = vmatprep.subr.mxu0 0.0
          %3387 = vmatpush1.msra.mxu0 0.0
          %3388 = vmatprep.subr.mxu0 0.0
          %3389 = vmatpush1.msra.mxu0 0.0
          %3390 = vmatprep.subr.mxu0 0.0
          %3391 = vmatpush1.msra.mxu0 0.0
          %3392 = vmatprep.subr.mxu0 0.0
          %3393 = vmatpush1.msra.mxu0 0.0
          %3394 = vmatprep.subr.mxu0 0.0
          %3395 = vmatpush1.msra.mxu0 0.0
          %3396 = vmatprep.subr.mxu0 0.0
          %3397 = vmatpush1.msra.mxu0 0.0
          %3398 = vmatprep.subr.mxu0 0.0
          %3399 = vmatpush1.msra.mxu0 0.0
          %3400 = vmatprep.subr.mxu0 0.0
          %3401 = vmatpush1.msra.mxu0 0.0
          %3402 = vmatprep.subr.mxu0 0.0
          %3403 = vmatpush1.msra.mxu0 0.0
          %3404 = vmatprep.subr.mxu0 0.0
          %3405 = vmatpush1.msra.mxu0 0.0
          %3406 = vmatprep.subr.mxu0 0.0
          %3407 = vmatpush1.msra.mxu0 0.0
          %3408 = vmatprep.subr.mxu0 0.0
          %3409 = vmatpush1.msra.mxu0 0.0
          %3410 = vmatprep.subr.mxu0 0.0
          %3411 = vmatpush1.msra.mxu0 0.0
          %3412 = vmatprep.subr.mxu0 0.0
          %3413 = vmatpush1.msra.mxu0 0.0
          %3414 = vmatprep.subr.mxu0 0.0
          %3415 = vmatpush1.msra.mxu0 0.0
          %3416 = vmatprep.subr.mxu0 0.0
          %3417 = vmatpush1.msra.mxu0 0.0
          %3418 = vmatprep.mubr.f32.mxu0 0.0
          %3419 = vmatmul.mubr.f32.gmra.mrb[0].mxu0 %v3352
          %v3420 = vpop.f32.mrb[0].mxu0
          %v3421 = vadd.f32 %v3348, %v3420
          %v3422 = vpop.f32.mrb[0].mxu0
          %3423 = vdwg.mxu0
          %s3424 = smul.u32 %s3063, 2
          %3426 = vset.pattern.permute.xlu0 0
          %3427 = vperm.xlu0 %3426, %v3060
          %v3428 = vpop.permute.xlu0 %3427
          %v3430 = vmul.f32 %v3421, %v3428
          %3432 = vset.pattern.permute.xlu0 0
          %3433 = vperm.xlu0 %3432, %v3061
          %v3434 = vpop.permute.xlu0 %3433
          %v3436 = vadd.f32 %v3430, %v3434
          %v3437 = vmul.f32 %v3436, 0.2
          %v3438 = vmax.f32 %v3436, %v3437
          %s3439 = sadd.s32 %s3424, 1
          %3441 = vrot.lane.b32.xlu0 %v3438, 1
          %v3442 = vpop.permute.xlu0 %3441
          %s3444 = smul.u32 %s3439, 8
          %s3445 = scalar_lea.vmem [#allocation4], %s3444
          %vm3446 = vcmask 138248
          %3447 = vst.msk [vmem:[%s3445] sm:$0xff] %vm3446, %v3442
          %s3448 = scalar_lea.vmem %s7, 16
          %v3449 = vld [vmem:[%s3448] sm:$0xff]
          %v3450 = vunpack.c.l.bf16 %v3449
          %v3451 = vunpack.c.h.bf16 %v3449
          %v3453 = vsel %vm580, %v3451, 0
          %3455 = vmatprep.subr.mxu0 0.0
          %3456 = vmatpush1.msra.mxu0 %v3070
          %3457 = vmatprep.subr.mxu0 0.0
          %3458 = vmatpush1.msra.mxu0 %v3071
          %3459 = vmatprep.subr.mxu0 0.0
          %3460 = vmatpush1.msra.mxu0 %v3085
          %3461 = vmatprep.subr.mxu0 0.0
          %3462 = vmatpush1.msra.mxu0 %v3087
          %3463 = vmatprep.subr.mxu0 0.0
          %3464 = vmatpush1.msra.mxu0 %v3091
          %3465 = vmatprep.subr.mxu0 0.0
          %3466 = vmatpush1.msra.mxu0 %v3093
          %3467 = vmatprep.subr.mxu0 0.0
          %3468 = vmatpush1.msra.mxu0 %v3075
          %3469 = vmatprep.subr.mxu0 0.0
          %3470 = vmatpush1.msra.mxu0 %v3076
          %3471 = vmatprep.subr.mxu0 0.0
          %3472 = vmatpush1.msra.mxu0 %v3099
          %3473 = vmatprep.subr.mxu0 0.0
          %3474 = vmatpush1.msra.mxu0 %v3101
          %3475 = vmatprep.subr.mxu0 0.0
          %3476 = vmatpush1.msra.mxu0 %v3105
          %3477 = vmatprep.subr.mxu0 0.0
          %3478 = vmatpush1.msra.mxu0 %v3107
          %3479 = vmatprep.subr.mxu0 0.0
          %3480 = vmatpush1.msra.mxu0 %v3080
          %3481 = vmatprep.subr.mxu0 0.0
          %3482 = vmatpush1.msra.mxu0 %v3081
          %3483 = vmatprep.subr.mxu0 0.0
          %3484 = vmatpush1.msra.mxu0 %v3113
          %3485 = vmatprep.subr.mxu0 0.0
          %3486 = vmatpush1.msra.mxu0 %v3115
          %3487 = vmatprep.subr.mxu0 0.0
          %3488 = vmatpush1.msra.mxu0 %v3119
          %3489 = vmatprep.subr.mxu0 0.0
          %3490 = vmatpush1.msra.mxu0 %v3121
          %3491 = vmatprep.subr.mxu0 0.0
          %3492 = vmatpush1.msra.mxu0 0.0
          %3493 = vmatprep.subr.mxu0 0.0
          %3494 = vmatpush1.msra.mxu0 0.0
          %3495 = vmatprep.subr.mxu0 0.0
          %3496 = vmatpush1.msra.mxu0 0.0
          %3497 = vmatprep.subr.mxu0 0.0
          %3498 = vmatpush1.msra.mxu0 0.0
          %3499 = vmatprep.subr.mxu0 0.0
          %3500 = vmatpush1.msra.mxu0 0.0
          %3501 = vmatprep.subr.mxu0 0.0
          %3502 = vmatpush1.msra.mxu0 0.0
          %3503 = vmatprep.subr.mxu0 0.0
          %3504 = vmatpush1.msra.mxu0 0.0
          %3505 = vmatprep.subr.mxu0 0.0
          %3506 = vmatpush1.msra.mxu0 0.0
          %3507 = vmatprep.subr.mxu0 0.0
          %3508 = vmatpush1.msra.mxu0 0.0
          %3509 = vmatprep.subr.mxu0 0.0
          %3510 = vmatpush1.msra.mxu0 0.0
          %3511 = vmatprep.subr.mxu0 0.0
          %3512 = vmatpush1.msra.mxu0 0.0
          %3513 = vmatprep.subr.mxu0 0.0
          %3514 = vmatpush1.msra.mxu0 0.0
          %3515 = vmatprep.subr.mxu0 0.0
          %3516 = vmatpush1.msra.mxu0 0.0
          %3517 = vmatprep.subr.mxu0 0.0
          %3518 = vmatpush1.msra.mxu0 0.0
          %3519 = vmatprep.mubr.f32.mxu0 %v3453
          %3520 = vmatmul.mubr.f32.gmra.mrb[0].mxu0 %v3450
          %v3521 = vpop.f32.mrb[0].mxu0
          %v3522 = vadd.f32 0.0, %v3521
          %v3523 = vpop.f32.mrb[0].mxu0
          %3524 = vdwg.mxu0
          %s3525 = scalar_lea.vmem %s7, 24
          %v3526 = vld [vmem:[%s3525] sm:$0xff]
          %v3527 = vunpack.c.l.bf16 %v3526
          %v3528 = vunpack.c.h.bf16 %v3526
          %v3530 = vsel %vm580, %v3528, 0
          %3532 = vmatprep.subr.mxu0 0.0
          %3533 = vmatpush1.msra.mxu0 %v3070
          %3534 = vmatprep.subr.mxu0 0.0
          %3535 = vmatpush1.msra.mxu0 %v3071
          %3536 = vmatprep.subr.mxu0 0.0
          %3537 = vmatpush1.msra.mxu0 %v3085
          %3538 = vmatprep.subr.mxu0 0.0
          %3539 = vmatpush1.msra.mxu0 %v3087
          %3540 = vmatprep.subr.mxu0 0.0
          %3541 = vmatpush1.msra.mxu0 %v3091
          %3542 = vmatprep.subr.mxu0 0.0
          %3543 = vmatpush1.msra.mxu0 %v3093
          %3544 = vmatprep.subr.mxu0 0.0
          %3545 = vmatpush1.msra.mxu0 %v3075
          %3546 = vmatprep.subr.mxu0 0.0
          %3547 = vmatpush1.msra.mxu0 %v3076
          %3548 = vmatprep.subr.mxu0 0.0
          %3549 = vmatpush1.msra.mxu0 %v3099
          %3550 = vmatprep.subr.mxu0 0.0
          %3551 = vmatpush1.msra.mxu0 %v3101
          %3552 = vmatprep.subr.mxu0 0.0
          %3553 = vmatpush1.msra.mxu0 %v3105
          %3554 = vmatprep.subr.mxu0 0.0
          %3555 = vmatpush1.msra.mxu0 %v3107
          %3556 = vmatprep.subr.mxu0 0.0
          %3557 = vmatpush1.msra.mxu0 %v3080
          %3558 = vmatprep.subr.mxu0 0.0
          %3559 = vmatpush1.msra.mxu0 %v3081
          %3560 = vmatprep.subr.mxu0 0.0
          %3561 = vmatpush1.msra.mxu0 %v3113
          %3562 = vmatprep.subr.mxu0 0.0
          %3563 = vmatpush1.msra.mxu0 %v3115
          %3564 = vmatprep.subr.mxu0 0.0
          %3565 = vmatpush1.msra.mxu0 %v3119
          %3566 = vmatprep.subr.mxu0 0.0
          %3567 = vmatpush1.msra.mxu0 %v3121
          %3568 = vmatprep.subr.mxu0 0.0
          %3569 = vmatpush1.msra.mxu0 0.0
          %3570 = vmatprep.subr.mxu0 0.0
          %3571 = vmatpush1.msra.mxu0 0.0
          %3572 = vmatprep.subr.mxu0 0.0
          %3573 = vmatpush1.msra.mxu0 0.0
          %3574 = vmatprep.subr.mxu0 0.0
          %3575 = vmatpush1.msra.mxu0 0.0
          %3576 = vmatprep.subr.mxu0 0.0
          %3577 = vmatpush1.msra.mxu0 0.0
          %3578 = vmatprep.subr.mxu0 0.0
          %3579 = vmatpush1.msra.mxu0 0.0
          %3580 = vmatprep.subr.mxu0 0.0
          %3581 = vmatpush1.msra.mxu0 0.0
          %3582 = vmatprep.subr.mxu0 0.0
          %3583 = vmatpush1.msra.mxu0 0.0
          %3584 = vmatprep.subr.mxu0 0.0
          %3585 = vmatpush1.msra.mxu0 0.0
          %3586 = vmatprep.subr.mxu0 0.0
          %3587 = vmatpush1.msra.mxu0 0.0
          %3588 = vmatprep.subr.mxu0 0.0
          %3589 = vmatpush1.msra.mxu0 0.0
          %3590 = vmatprep.subr.mxu0 0.0
          %3591 = vmatpush1.msra.mxu0 0.0
          %3592 = vmatprep.subr.mxu0 0.0
          %3593 = vmatpush1.msra.mxu0 0.0
          %3594 = vmatprep.subr.mxu0 0.0
          %3595 = vmatpush1.msra.mxu0 0.0
          %3596 = vmatprep.mubr.f32.mxu0 %v3530
          %3597 = vmatmul.mubr.f32.gmra.mrb[0].mxu0 %v3527
          %v3598 = vpop.f32.mrb[0].mxu0
          %v3599 = vadd.f32 0.0, %v3598
          %v3600 = vpop.f32.mrb[0].mxu0
          %3601 = vdwg.mxu0
          %v3603 = vsel %vm3277, %v3599, 0
          %3605 = vmatprep.subr.mxu0 0.0
          %3606 = vmatpush1.msra.mxu0 %v1885
          %3607 = vmatprep.subr.mxu0 0.0
          %3608 = vmatpush1.msra.mxu0 0.0
          %3609 = vmatprep.subr.mxu0 0.0
          %3610 = vmatpush1.msra.mxu0 0.0
          %3611 = vmatprep.subr.mxu0 0.0
          %3612 = vmatpush1.msra.mxu0 0.0
          %3613 = vmatprep.subr.mxu0 0.0
          %3614 = vmatpush1.msra.mxu0 0.0
          %3615 = vmatprep.subr.mxu0 0.0
          %3616 = vmatpush1.msra.mxu0 0.0
          %3617 = vmatprep.subr.mxu0 0.0
          %3618 = vmatpush1.msra.mxu0 0.0
          %3619 = vmatprep.subr.mxu0 0.0
          %3620 = vmatpush1.msra.mxu0 0.0
          %3621 = vmatprep.subr.mxu0 0.0
          %3622 = vmatpush1.msra.mxu0 0.0
          %3623 = vmatprep.subr.mxu0 0.0
          %3624 = vmatpush1.msra.mxu0 0.0
          %3625 = vmatprep.subr.mxu0 0.0
          %3626 = vmatpush1.msra.mxu0 0.0
          %3627 = vmatprep.subr.mxu0 0.0
          %3628 = vmatpush1.msra.mxu0 0.0
          %3629 = vmatprep.subr.mxu0 0.0
          %3630 = vmatpush1.msra.mxu0 0.0
          %3631 = vmatprep.subr.mxu0 0.0
          %3632 = vmatpush1.msra.mxu0 0.0
          %3633 = vmatprep.subr.mxu0 0.0
          %3634 = vmatpush1.msra.mxu0 0.0
          %3635 = vmatprep.subr.mxu0 0.0
          %3636 = vmatpush1.msra.mxu0 0.0
          %3637 = vmatprep.subr.mxu0 0.0
          %3638 = vmatpush1.msra.mxu0 0.0
          %3639 = vmatprep.subr.mxu0 0.0
          %3640 = vmatpush1.msra.mxu0 0.0
          %3641 = vmatprep.subr.mxu0 0.0
          %3642 = vmatpush1.msra.mxu0 0.0
          %3643 = vmatprep.subr.mxu0 0.0
          %3644 = vmatpush1.msra.mxu0 0.0
          %3645 = vmatprep.subr.mxu0 0.0
          %3646 = vmatpush1.msra.mxu0 0.0
          %3647 = vmatprep.subr.mxu0 0.0
          %3648 = vmatpush1.msra.mxu0 0.0
          %3649 = vmatprep.subr.mxu0 0.0
          %3650 = vmatpush1.msra.mxu0 0.0
          %3651 = vmatprep.subr.mxu0 0.0
          %3652 = vmatpush1.msra.mxu0 0.0
          %3653 = vmatprep.subr.mxu0 0.0
          %3654 = vmatpush1.msra.mxu0 0.0
          %3655 = vmatprep.subr.mxu0 0.0
          %3656 = vmatpush1.msra.mxu0 0.0
          %3657 = vmatprep.subr.mxu0 0.0
          %3658 = vmatpush1.msra.mxu0 0.0
          %3659 = vmatprep.subr.mxu0 0.0
          %3660 = vmatpush1.msra.mxu0 0.0
          %3661 = vmatprep.subr.mxu0 0.0
          %3662 = vmatpush1.msra.mxu0 0.0
          %3663 = vmatprep.subr.mxu0 0.0
          %3664 = vmatpush1.msra.mxu0 0.0
          %3665 = vmatprep.subr.mxu0 0.0
          %3666 = vmatpush1.msra.mxu0 0.0
          %3667 = vmatprep.subr.mxu0 0.0
          %3668 = vmatpush1.msra.mxu0 0.0
          %3669 = vmatprep.mubr.f32.mxu0 0.0
          %3670 = vmatmul.mubr.f32.gmra.mrb[0].mxu0 %v3603
          %v3671 = vpop.f32.mrb[0].mxu0
          %v3672 = vadd.f32 0.0, %v3671
          %v3673 = vpop.f32.mrb[0].mxu0
          %3674 = vdwg.mxu0
          %v3676 = vsel %vm3277, %v3522, 0
          %3678 = vmatprep.subr.mxu0 0.0
          %3679 = vmatpush1.msra.mxu0 %v1881
          %3680 = vmatprep.subr.mxu0 0.0
          %3681 = vmatpush1.msra.mxu0 0.0
          %3682 = vmatprep.subr.mxu0 0.0
          %3683 = vmatpush1.msra.mxu0 0.0
          %3684 = vmatprep.subr.mxu0 0.0
          %3685 = vmatpush1.msra.mxu0 0.0
          %3686 = vmatprep.subr.mxu0 0.0
          %3687 = vmatpush1.msra.mxu0 0.0
          %3688 = vmatprep.subr.mxu0 0.0
          %3689 = vmatpush1.msra.mxu0 0.0
          %3690 = vmatprep.subr.mxu0 0.0
          %3691 = vmatpush1.msra.mxu0 0.0
          %3692 = vmatprep.subr.mxu0 0.0
          %3693 = vmatpush1.msra.mxu0 0.0
          %3694 = vmatprep.subr.mxu0 0.0
          %3695 = vmatpush1.msra.mxu0 0.0
          %3696 = vmatprep.subr.mxu0 0.0
          %3697 = vmatpush1.msra.mxu0 0.0
          %3698 = vmatprep.subr.mxu0 0.0
          %3699 = vmatpush1.msra.mxu0 0.0
          %3700 = vmatprep.subr.mxu0 0.0
          %3701 = vmatpush1.msra.mxu0 0.0
          %3702 = vmatprep.subr.mxu0 0.0
          %3703 = vmatpush1.msra.mxu0 0.0
          %3704 = vmatprep.subr.mxu0 0.0
          %3705 = vmatpush1.msra.mxu0 0.0
          %3706 = vmatprep.subr.mxu0 0.0
          %3707 = vmatpush1.msra.mxu0 0.0
          %3708 = vmatprep.subr.mxu0 0.0
          %3709 = vmatpush1.msra.mxu0 0.0
          %3710 = vmatprep.subr.mxu0 0.0
          %3711 = vmatpush1.msra.mxu0 0.0
          %3712 = vmatprep.subr.mxu0 0.0
          %3713 = vmatpush1.msra.mxu0 0.0
          %3714 = vmatprep.subr.mxu0 0.0
          %3715 = vmatpush1.msra.mxu0 0.0
          %3716 = vmatprep.subr.mxu0 0.0
          %3717 = vmatpush1.msra.mxu0 0.0
          %3718 = vmatprep.subr.mxu0 0.0
          %3719 = vmatpush1.msra.mxu0 0.0
          %3720 = vmatprep.subr.mxu0 0.0
          %3721 = vmatpush1.msra.mxu0 0.0
          %3722 = vmatprep.subr.mxu0 0.0
          %3723 = vmatpush1.msra.mxu0 0.0
          %3724 = vmatprep.subr.mxu0 0.0
          %3725 = vmatpush1.msra.mxu0 0.0
          %3726 = vmatprep.subr.mxu0 0.0
          %3727 = vmatpush1.msra.mxu0 0.0
          %3728 = vmatprep.subr.mxu0 0.0
          %3729 = vmatpush1.msra.mxu0 0.0
          %3730 = vmatprep.subr.mxu0 0.0
          %3731 = vmatpush1.msra.mxu0 0.0
          %3732 = vmatprep.subr.mxu0 0.0
          %3733 = vmatpush1.msra.mxu0 0.0
          %3734 = vmatprep.subr.mxu0 0.0
          %3735 = vmatpush1.msra.mxu0 0.0
          %3736 = vmatprep.subr.mxu0 0.0
          %3737 = vmatpush1.msra.mxu0 0.0
          %3738 = vmatprep.subr.mxu0 0.0
          %3739 = vmatpush1.msra.mxu0 0.0
          %3740 = vmatprep.subr.mxu0 0.0
          %3741 = vmatpush1.msra.mxu0 0.0
          %3742 = vmatprep.mubr.f32.mxu0 0.0
          %3743 = vmatmul.mubr.f32.gmra.mrb[0].mxu0 %v3676
          %v3744 = vpop.f32.mrb[0].mxu0
          %v3745 = vadd.f32 %v3672, %v3744
          %v3746 = vpop.f32.mrb[0].mxu0
          %3747 = vdwg.mxu0
          %v3748 = vmul.f32 %v3745, %v3428
          %v3749 = vadd.f32 %v3748, %v3434
          %v3750 = vmul.f32 %v3749, 0.2
          %v3751 = vmax.f32 %v3749, %v3750
          %s3752 = sadd.s32 %s3424, 2
          %3754 = vrot.lane.b32.xlu0 %v3751, 1
          %v3755 = vpop.permute.xlu0 %3754
          %s3757 = smul.u32 %s3752, 8
          %s3758 = scalar_lea.vmem [#allocation4], %s3757
          %3759 = vst.msk [vmem:[%s3758] sm:$0xff] %vm3446, %v3755
        $region76: #{generator_forward.1} parent=63 // loop_footer
          %s3067 = sadd.s32 1, %s3063
        $region77: #{generator_forward.1} parent=63 // loop_footer_branch
          %3062 = sbr.rel target = $region73
        $region78: #{generator_forward.1} parent=63 // loop_exit
          _
        %v3760 = vadd.s32 %v1875, 8
        %v3761 = vmul.u32 %v3760, 2
        %vm3762 = vcmp.eq.s32.totalorder %v1877, %v3761
        %v3763 = vsel %vm3762, 1, 0
        %v3764 = vcvt.s32.f32 %v3763
        %v3765 = vadd.s32 %v3761, 1
        %vm3766 = vcmp.eq.s32.totalorder %v1877, %v3765
        %v3767 = vsel %vm3766, 1, 0
        %v3768 = vcvt.s32.f32 %v3767
        loop: start=0, step=1, limit=16
        $region79: #{generator_forward.1} parent=63 // loop_pre_header
          _
        $region80: #{generator_forward.1} parent=63 // loop_header
          %s3770 = sphi 0, %s3774
          %p3771 = scmp.ge.s32.totalorder %s3770, 16
        $region81: #{generator_forward.1} parent=63 // loop_header_branch
          %3773 = sbr.rel (%p3771) target = $region85
        $region82: #{generator_forward.1} parent=63 // loop_body
          %s3775 = smul.u32 %s3770, 8
          %s3776 = scalar_lea.vmem [#allocation4], %s3775
          %v3777 = vld [vmem:[%s3776] sm:$0xff]
          %s3778 = sadd.s32 %s3770, 1
          %s3779 = smul.u32 %s3778, 8
          %s3780 = scalar_lea.vmem [#allocation4], %s3779
          %v3781 = vld [vmem:[%s3780] sm:$0xff]
          %s3782 = sadd.s32 %s3770, 2
          %s3783 = smul.u32 %s3782, 8
          %s3784 = scalar_lea.vmem [#allocation4], %s3783
          %v3785 = vld [vmem:[%s3784] sm:$0xff]
          %3787 = vrot.lane.b32.xlu0 %v3777, 127
          %v3788 = vpop.permute.xlu0 %3787
          %3790 = vrot.lane.b32.xlu0 %v3777, 126
          %v3791 = vpop.permute.xlu0 %3790
          %3794 = vrot.lane.b32.xlu0 %v3781, 127
          %v3795 = vpop.permute.xlu0 %3794
          %3797 = vrot.lane.b32.xlu0 %v3781, 126
          %v3798 = vpop.permute.xlu0 %3797
          %3801 = vrot.lane.b32.xlu0 %v3785, 127
          %v3802 = vpop.permute.xlu0 %3801
          %3804 = vrot.lane.b32.xlu0 %v3785, 126
          %v3805 = vpop.permute.xlu0 %3804
          %v3807 = vld [vmem:[%s10] sm:$0x1]
          %v3808 = vunpack.c.l.bf16 %v3807
          %vm3809 = vcmask 588800
          %v3811 = vsel %vm3809, %v3808, 0
          %3813 = vmatprep.subr.mxu0 0.0
          %3814 = vmatpush1.msra.mxu0 %v3777
          %3815 = vmatprep.subr.mxu0 0.0
          %3816 = vmatpush1.msra.mxu0 %v3788
          %3817 = vmatprep.subr.mxu0 0.0
          %3818 = vmatpush1.msra.mxu0 %v3791
          %3819 = vmatprep.subr.mxu0 0.0
          %3820 = vmatpush1.msra.mxu0 %v3781
          %3821 = vmatprep.subr.mxu0 0.0
          %3822 = vmatpush1.msra.mxu0 %v3795
          %3823 = vmatprep.subr.mxu0 0.0
          %3824 = vmatpush1.msra.mxu0 %v3798
          %3825 = vmatprep.subr.mxu0 0.0
          %3826 = vmatpush1.msra.mxu0 %v3785
          %3827 = vmatprep.subr.mxu0 0.0
          %3828 = vmatpush1.msra.mxu0 %v3802
          %3829 = vmatprep.subr.mxu0 0.0
          %3830 = vmatpush1.msra.mxu0 %v3805
          %3831 = vmatprep.subr.mxu0 0.0
          %3832 = vmatpush1.msra.mxu0 0.0
          %3833 = vmatprep.subr.mxu0 0.0
          %3834 = vmatpush1.msra.mxu0 0.0
          %3835 = vmatprep.subr.mxu0 0.0
          %3836 = vmatpush1.msra.mxu0 0.0
          %3837 = vmatprep.subr.mxu0 0.0
          %3838 = vmatpush1.msra.mxu0 0.0
          %3839 = vmatprep.subr.mxu0 0.0
          %3840 = vmatpush1.msra.mxu0 0.0
          %3841 = vmatprep.subr.mxu0 0.0
          %3842 = vmatpush1.msra.mxu0 0.0
          %3843 = vmatprep.subr.mxu0 0.0
          %3844 = vmatpush1.msra.mxu0 0.0
          %3845 = vmatprep.subr.mxu0 0.0
          %3846 = vmatpush1.msra.mxu0 0.0
          %3847 = vmatprep.subr.mxu0 0.0
          %3848 = vmatpush1.msra.mxu0 0.0
          %3849 = vmatprep.subr.mxu0 0.0
          %3850 = vmatpush1.msra.mxu0 0.0
          %3851 = vmatprep.subr.mxu0 0.0
          %3852 = vmatpush1.msra.mxu0 0.0
          %3853 = vmatprep.subr.mxu0 0.0
          %3854 = vmatpush1.msra.mxu0 0.0
          %3855 = vmatprep.subr.mxu0 0.0
          %3856 = vmatpush1.msra.mxu0 0.0
          %3857 = vmatprep.subr.mxu0 0.0
          %3858 = vmatpush1.msra.mxu0 0.0
          %3859 = vmatprep.subr.mxu0 0.0
          %3860 = vmatpush1.msra.mxu0 0.0
          %3861 = vmatprep.subr.mxu0 0.0
          %3862 = vmatpush1.msra.mxu0 0.0
          %3863 = vmatprep.subr.mxu0 0.0
          %3864 = vmatpush1.msra.mxu0 0.0
          %3865 = vmatprep.subr.mxu0 0.0
          %3866 = vmatpush1.msra.mxu0 0.0
          %3867 = vmatprep.subr.mxu0 0.0
          %3868 = vmatpush1.msra.mxu0 0.0
          %3869 = vmatprep.subr.mxu0 0.0
          %3870 = vmatpush1.msra.mxu0 0.0
          %3871 = vmatprep.subr.mxu0 0.0
          %3872 = vmatpush1.msra.mxu0 0.0
          %3873 = vmatprep.subr.mxu0 0.0
          %3874 = vmatpush1.msra.mxu0 0.0
          %3875 = vmatprep.subr.mxu0 0.0
          %3876 = vmatpush1.msra.mxu0 0.0
          %3877 = vmatprep.mubr.f32.mxu0 0.0
          %3878 = vmatmul.mubr.f32.gmra.mrb[0].mxu0 %v3811
          %v3879 = vpop.f32.mrb[0].mxu0
          %v3880 = vadd.f32 0.0, %v3879
          %v3881 = vpop.f32.mrb[0].mxu0
          %3882 = vdwg.mxu0
          %s3883 = scalar_lea.vmem %s10, 1
          %v3884 = vld [vmem:[%s3883] sm:$0x1]
          %v3885 = vunpack.c.l.bf16 %v3884
          %v3887 = vsel %vm3809, %v3885, 0
          %3889 = vmatprep.subr.mxu0 0.0
          %3890 = vmatpush1.msra.mxu0 %v3777
          %3891 = vmatprep.subr.mxu0 0.0
          %3892 = vmatpush1.msra.mxu0 %v3788
          %3893 = vmatprep.subr.mxu0 0.0
          %3894 = vmatpush1.msra.mxu0 %v3791
          %3895 = vmatprep.subr.mxu0 0.0
          %3896 = vmatpush1.msra.mxu0 %v3781
          %3897 = vmatprep.subr.mxu0 0.0
          %3898 = vmatpush1.msra.mxu0 %v3795
          %3899 = vmatprep.subr.mxu0 0.0
          %3900 = vmatpush1.msra.mxu0 %v3798
          %3901 = vmatprep.subr.mxu0 0.0
          %3902 = vmatpush1.msra.mxu0 %v3785
          %3903 = vmatprep.subr.mxu0 0.0
          %3904 = vmatpush1.msra.mxu0 %v3802
          %3905 = vmatprep.subr.mxu0 0.0
          %3906 = vmatpush1.msra.mxu0 %v3805
          %3907 = vmatprep.subr.mxu0 0.0
          %3908 = vmatpush1.msra.mxu0 0.0
          %3909 = vmatprep.subr.mxu0 0.0
          %3910 = vmatpush1.msra.mxu0 0.0
          %3911 = vmatprep.subr.mxu0 0.0
          %3912 = vmatpush1.msra.mxu0 0.0
          %3913 = vmatprep.subr.mxu0 0.0
          %3914 = vmatpush1.msra.mxu0 0.0
          %3915 = vmatprep.subr.mxu0 0.0
          %3916 = vmatpush1.msra.mxu0 0.0
          %3917 = vmatprep.subr.mxu0 0.0
          %3918 = vmatpush1.msra.mxu0 0.0
          %3919 = vmatprep.subr.mxu0 0.0
          %3920 = vmatpush1.msra.mxu0 0.0
          %3921 = vmatprep.subr.mxu0 0.0
          %3922 = vmatpush1.msra.mxu0 0.0
          %3923 = vmatprep.subr.mxu0 0.0
          %3924 = vmatpush1.msra.mxu0 0.0
          %3925 = vmatprep.subr.mxu0 0.0
          %3926 = vmatpush1.msra.mxu0 0.0
          %3927 = vmatprep.subr.mxu0 0.0
          %3928 = vmatpush1.msra.mxu0 0.0
          %3929 = vmatprep.subr.mxu0 0.0
          %3930 = vmatpush1.msra.mxu0 0.0
          %3931 = vmatprep.subr.mxu0 0.0
          %3932 = vmatpush1.msra.mxu0 0.0
          %3933 = vmatprep.subr.mxu0 0.0
          %3934 = vmatpush1.msra.mxu0 0.0
          %3935 = vmatprep.subr.mxu0 0.0
          %3936 = vmatpush1.msra.mxu0 0.0
          %3937 = vmatprep.subr.mxu0 0.0
          %3938 = vmatpush1.msra.mxu0 0.0
          %3939 = vmatprep.subr.mxu0 0.0
          %3940 = vmatpush1.msra.mxu0 0.0
          %3941 = vmatprep.subr.mxu0 0.0
          %3942 = vmatpush1.msra.mxu0 0.0
          %3943 = vmatprep.subr.mxu0 0.0
          %3944 = vmatpush1.msra.mxu0 0.0
          %3945 = vmatprep.subr.mxu0 0.0
          %3946 = vmatpush1.msra.mxu0 0.0
          %3947 = vmatprep.subr.mxu0 0.0
          %3948 = vmatpush1.msra.mxu0 0.0
          %3949 = vmatprep.subr.mxu0 0.0
          %3950 = vmatpush1.msra.mxu0 0.0
          %3951 = vmatprep.subr.mxu0 0.0
          %3952 = vmatpush1.msra.mxu0 0.0
          %3953 = vmatprep.mubr.f32.mxu0 0.0
          %3954 = vmatmul.mubr.f32.gmra.mrb[0].mxu0 %v3887
          %v3955 = vpop.f32.mrb[0].mxu0
          %v3956 = vadd.f32 0.0, %v3955
          %v3957 = vpop.f32.mrb[0].mxu0
          %3958 = vdwg.mxu0
          %v3960 = vsel %vm580, %v3956, 0
          %3962 = vmatprep.subr.mxu0 0.0
          %3963 = vmatpush1.msra.mxu0 %v1885
          %3964 = vmatprep.subr.mxu0 0.0
          %3965 = vmatpush1.msra.mxu0 %v3768
          %3966 = vmatprep.subr.mxu0 0.0
          %3967 = vmatpush1.msra.mxu0 0.0
          %3968 = vmatprep.subr.mxu0 0.0
          %3969 = vmatpush1.msra.mxu0 0.0
          %3970 = vmatprep.subr.mxu0 0.0
          %3971 = vmatpush1.msra.mxu0 0.0
          %3972 = vmatprep.subr.mxu0 0.0
          %3973 = vmatpush1.msra.mxu0 0.0
          %3974 = vmatprep.subr.mxu0 0.0
          %3975 = vmatpush1.msra.mxu0 0.0
          %3976 = vmatprep.subr.mxu0 0.0
          %3977 = vmatpush1.msra.mxu0 0.0
          %3978 = vmatprep.subr.mxu0 0.0
          %3979 = vmatpush1.msra.mxu0 0.0
          %3980 = vmatprep.subr.mxu0 0.0
          %3981 = vmatpush1.msra.mxu0 0.0
          %3982 = vmatprep.subr.mxu0 0.0
          %3983 = vmatpush1.msra.mxu0 0.0
          %3984 = vmatprep.subr.mxu0 0.0
          %3985 = vmatpush1.msra.mxu0 0.0
          %3986 = vmatprep.subr.mxu0 0.0
          %3987 = vmatpush1.msra.mxu0 0.0
          %3988 = vmatprep.subr.mxu0 0.0
          %3989 = vmatpush1.msra.mxu0 0.0
          %3990 = vmatprep.subr.mxu0 0.0
          %3991 = vmatpush1.msra.mxu0 0.0
          %3992 = vmatprep.subr.mxu0 0.0
          %3993 = vmatpush1.msra.mxu0 0.0
          %3994 = vmatprep.subr.mxu0 0.0
          %3995 = vmatpush1.msra.mxu0 0.0
          %3996 = vmatprep.subr.mxu0 0.0
          %3997 = vmatpush1.msra.mxu0 0.0
          %3998 = vmatprep.subr.mxu0 0.0
          %3999 = vmatpush1.msra.mxu0 0.0
          %4000 = vmatprep.subr.mxu0 0.0
          %4001 = vmatpush1.msra.mxu0 0.0
          %4002 = vmatprep.subr.mxu0 0.0
          %4003 = vmatpush1.msra.mxu0 0.0
          %4004 = vmatprep.subr.mxu0 0.0
          %4005 = vmatpush1.msra.mxu0 0.0
          %4006 = vmatprep.subr.mxu0 0.0
          %4007 = vmatpush1.msra.mxu0 0.0
          %4008 = vmatprep.subr.mxu0 0.0
          %4009 = vmatpush1.msra.mxu0 0.0
          %4010 = vmatprep.subr.mxu0 0.0
          %4011 = vmatpush1.msra.mxu0 0.0
          %4012 = vmatprep.subr.mxu0 0.0
          %4013 = vmatpush1.msra.mxu0 0.0
          %4014 = vmatprep.subr.mxu0 0.0
          %4015 = vmatpush1.msra.mxu0 0.0
          %4016 = vmatprep.subr.mxu0 0.0
          %4017 = vmatpush1.msra.mxu0 0.0
          %4018 = vmatprep.subr.mxu0 0.0
          %4019 = vmatpush1.msra.mxu0 0.0
          %4020 = vmatprep.subr.mxu0 0.0
          %4021 = vmatpush1.msra.mxu0 0.0
          %4022 = vmatprep.subr.mxu0 0.0
          %4023 = vmatpush1.msra.mxu0 0.0
          %4024 = vmatprep.subr.mxu0 0.0
          %4025 = vmatpush1.msra.mxu0 0.0
          %4026 = vmatprep.mubr.f32.mxu0 0.0
          %4027 = vmatmul.mubr.f32.gmra.mrb[0].mxu0 %v3960
          %v4028 = vpop.f32.mrb[0].mxu0
          %v4029 = vadd.f32 0.0, %v4028
          %v4030 = vpop.f32.mrb[0].mxu0
          %4031 = vdwg.mxu0
          %v4033 = vsel %vm580, %v3880, 0
          %4035 = vmatprep.subr.mxu0 0.0
          %4036 = vmatpush1.msra.mxu0 %v1881
          %4037 = vmatprep.subr.mxu0 0.0
          %4038 = vmatpush1.msra.mxu0 %v3764
          %4039 = vmatprep.subr.mxu0 0.0
          %4040 = vmatpush1.msra.mxu0 0.0
          %4041 = vmatprep.subr.mxu0 0.0
          %4042 = vmatpush1.msra.mxu0 0.0
          %4043 = vmatprep.subr.mxu0 0.0
          %4044 = vmatpush1.msra.mxu0 0.0
          %4045 = vmatprep.subr.mxu0 0.0
          %4046 = vmatpush1.msra.mxu0 0.0
          %4047 = vmatprep.subr.mxu0 0.0
          %4048 = vmatpush1.msra.mxu0 0.0
          %4049 = vmatprep.subr.mxu0 0.0
          %4050 = vmatpush1.msra.mxu0 0.0
          %4051 = vmatprep.subr.mxu0 0.0
          %4052 = vmatpush1.msra.mxu0 0.0
          %4053 = vmatprep.subr.mxu0 0.0
          %4054 = vmatpush1.msra.mxu0 0.0
          %4055 = vmatprep.subr.mxu0 0.0
          %4056 = vmatpush1.msra.mxu0 0.0
          %4057 = vmatprep.subr.mxu0 0.0
          %4058 = vmatpush1.msra.mxu0 0.0
          %4059 = vmatprep.subr.mxu0 0.0
          %4060 = vmatpush1.msra.mxu0 0.0
          %4061 = vmatprep.subr.mxu0 0.0
          %4062 = vmatpush1.msra.mxu0 0.0
          %4063 = vmatprep.subr.mxu0 0.0
          %4064 = vmatpush1.msra.mxu0 0.0
          %4065 = vmatprep.subr.mxu0 0.0
          %4066 = vmatpush1.msra.mxu0 0.0
          %4067 = vmatprep.subr.mxu0 0.0
          %4068 = vmatpush1.msra.mxu0 0.0
          %4069 = vmatprep.subr.mxu0 0.0
          %4070 = vmatpush1.msra.mxu0 0.0
          %4071 = vmatprep.subr.mxu0 0.0
          %4072 = vmatpush1.msra.mxu0 0.0
          %4073 = vmatprep.subr.mxu0 0.0
          %4074 = vmatpush1.msra.mxu0 0.0
          %4075 = vmatprep.subr.mxu0 0.0
          %4076 = vmatpush1.msra.mxu0 0.0
          %4077 = vmatprep.subr.mxu0 0.0
          %4078 = vmatpush1.msra.mxu0 0.0
          %4079 = vmatprep.subr.mxu0 0.0
          %4080 = vmatpush1.msra.mxu0 0.0
          %4081 = vmatprep.subr.mxu0 0.0
          %4082 = vmatpush1.msra.mxu0 0.0
          %4083 = vmatprep.subr.mxu0 0.0
          %4084 = vmatpush1.msra.mxu0 0.0
          %4085 = vmatprep.subr.mxu0 0.0
          %4086 = vmatpush1.msra.mxu0 0.0
          %4087 = vmatprep.subr.mxu0 0.0
          %4088 = vmatpush1.msra.mxu0 0.0
          %4089 = vmatprep.subr.mxu0 0.0
          %4090 = vmatpush1.msra.mxu0 0.0
          %4091 = vmatprep.subr.mxu0 0.0
          %4092 = vmatpush1.msra.mxu0 0.0
          %4093 = vmatprep.subr.mxu0 0.0
          %4094 = vmatpush1.msra.mxu0 0.0
          %4095 = vmatprep.subr.mxu0 0.0
          %4096 = vmatpush1.msra.mxu0 0.0
          %4097 = vmatprep.subr.mxu0 0.0
          %4098 = vmatpush1.msra.mxu0 0.0
          %4099 = vmatprep.mubr.f32.mxu0 0.0
          %4100 = vmatmul.mubr.f32.gmra.mrb[0].mxu0 %v4033
          %v4101 = vpop.f32.mrb[0].mxu0
          %v4102 = vadd.f32 %v4029, %v4101
          %v4103 = vpop.f32.mrb[0].mxu0
          %4104 = vdwg.mxu0
          %s4105 = smul.u32 %s3770, 2
          %v4106 = vtanh.pop %v4102
          %s4107 = scalar_lea.vmem %s379, %s4105 [#allocation5]
          %vm4108 = vcmask 253952
          %4109 = vst.msk [vmem:[%s4107] sm:$0x1] %vm4108, %v4106
          %s4110 = scalar_lea.vmem %s10, 2
          %v4111 = vld [vmem:[%s4110] sm:$0x1]
          %v4112 = vunpack.c.l.bf16 %v4111
          %v4114 = vsel %vm3809, %v4112, 0
          %4116 = vmatprep.subr.mxu0 0.0
          %4117 = vmatpush1.msra.mxu0 %v3777
          %4118 = vmatprep.subr.mxu0 0.0
          %4119 = vmatpush1.msra.mxu0 %v3788
          %4120 = vmatprep.subr.mxu0 0.0
          %4121 = vmatpush1.msra.mxu0 %v3791
          %4122 = vmatprep.subr.mxu0 0.0
          %4123 = vmatpush1.msra.mxu0 %v3781
          %4124 = vmatprep.subr.mxu0 0.0
          %4125 = vmatpush1.msra.mxu0 %v3795
          %4126 = vmatprep.subr.mxu0 0.0
          %4127 = vmatpush1.msra.mxu0 %v3798
          %4128 = vmatprep.subr.mxu0 0.0
          %4129 = vmatpush1.msra.mxu0 %v3785
          %4130 = vmatprep.subr.mxu0 0.0
          %4131 = vmatpush1.msra.mxu0 %v3802
          %4132 = vmatprep.subr.mxu0 0.0
          %4133 = vmatpush1.msra.mxu0 %v3805
          %4134 = vmatprep.subr.mxu0 0.0
          %4135 = vmatpush1.msra.mxu0 0.0
          %4136 = vmatprep.subr.mxu0 0.0
          %4137 = vmatpush1.msra.mxu0 0.0
          %4138 = vmatprep.subr.mxu0 0.0
          %4139 = vmatpush1.msra.mxu0 0.0
          %4140 = vmatprep.subr.mxu0 0.0
          %4141 = vmatpush1.msra.mxu0 0.0
          %4142 = vmatprep.subr.mxu0 0.0
          %4143 = vmatpush1.msra.mxu0 0.0
          %4144 = vmatprep.subr.mxu0 0.0
          %4145 = vmatpush1.msra.mxu0 0.0
          %4146 = vmatprep.subr.mxu0 0.0
          %4147 = vmatpush1.msra.mxu0 0.0
          %4148 = vmatprep.subr.mxu0 0.0
          %4149 = vmatpush1.msra.mxu0 0.0
          %4150 = vmatprep.subr.mxu0 0.0
          %4151 = vmatpush1.msra.mxu0 0.0
          %4152 = vmatprep.subr.mxu0 0.0
          %4153 = vmatpush1.msra.mxu0 0.0
          %4154 = vmatprep.subr.mxu0 0.0
          %4155 = vmatpush1.msra.mxu0 0.0
          %4156 = vmatprep.subr.mxu0 0.0
          %4157 = vmatpush1.msra.mxu0 0.0
          %4158 = vmatprep.subr.mxu0 0.0
          %4159 = vmatpush1.msra.mxu0 0.0
          %4160 = vmatprep.subr.mxu0 0.0
          %4161 = vmatpush1.msra.mxu0 0.0
          %4162 = vmatprep.subr.mxu0 0.0
          %4163 = vmatpush1.msra.mxu0 0.0
          %4164 = vmatprep.subr.mxu0 0.0
          %4165 = vmatpush1.msra.mxu0 0.0
          %4166 = vmatprep.subr.mxu0 0.0
          %4167 = vmatpush1.msra.mxu0 0.0
          %4168 = vmatprep.subr.mxu0 0.0
          %4169 = vmatpush1.msra.mxu0 0.0
          %4170 = vmatprep.subr.mxu0 0.0
          %4171 = vmatpush1.msra.mxu0 0.0
          %4172 = vmatprep.subr.mxu0 0.0
          %4173 = vmatpush1.msra.mxu0 0.0
          %4174 = vmatprep.subr.mxu0 0.0
          %4175 = vmatpush1.msra.mxu0 0.0
          %4176 = vmatprep.subr.mxu0 0.0
          %4177 = vmatpush1.msra.mxu0 0.0
          %4178 = vmatprep.subr.mxu0 0.0
          %4179 = vmatpush1.msra.mxu0 0.0
          %4180 = vmatprep.mubr.f32.mxu0 0.0
          %4181 = vmatmul.mubr.f32.gmra.mrb[0].mxu0 %v4114
          %v4182 = vpop.f32.mrb[0].mxu0
          %v4183 = vadd.f32 0.0, %v4182
          %v4184 = vpop.f32.mrb[0].mxu0
          %4185 = vdwg.mxu0
          %s4186 = scalar_lea.vmem %s10, 3
          %v4187 = vld [vmem:[%s4186] sm:$0x1]
          %v4188 = vunpack.c.l.bf16 %v4187
          %v4190 = vsel %vm3809, %v4188, 0
          %4192 = vmatprep.subr.mxu0 0.0
          %4193 = vmatpush1.msra.mxu0 %v3777
          %4194 = vmatprep.subr.mxu0 0.0
          %4195 = vmatpush1.msra.mxu0 %v3788
          %4196 = vmatprep.subr.mxu0 0.0
          %4197 = vmatpush1.msra.mxu0 %v3791
          %4198 = vmatprep.subr.mxu0 0.0
          %4199 = vmatpush1.msra.mxu0 %v3781
          %4200 = vmatprep.subr.mxu0 0.0
          %4201 = vmatpush1.msra.mxu0 %v3795
          %4202 = vmatprep.subr.mxu0 0.0
          %4203 = vmatpush1.msra.mxu0 %v3798
          %4204 = vmatprep.subr.mxu0 0.0
          %4205 = vmatpush1.msra.mxu0 %v3785
          %4206 = vmatprep.subr.mxu0 0.0
          %4207 = vmatpush1.msra.mxu0 %v3802
          %4208 = vmatprep.subr.mxu0 0.0
          %4209 = vmatpush1.msra.mxu0 %v3805
          %4210 = vmatprep.subr.mxu0 0.0
          %4211 = vmatpush1.msra.mxu0 0.0
          %4212 = vmatprep.subr.mxu0 0.0
          %4213 = vmatpush1.msra.mxu0 0.0
          %4214 = vmatprep.subr.mxu0 0.0
          %4215 = vmatpush1.msra.mxu0 0.0
          %4216 = vmatprep.subr.mxu0 0.0
          %4217 = vmatpush1.msra.mxu0 0.0
          %4218 = vmatprep.subr.mxu0 0.0
          %4219 = vmatpush1.msra.mxu0 0.0
          %4220 = vmatprep.subr.mxu0 0.0
          %4221 = vmatpush1.msra.mxu0 0.0
          %4222 = vmatprep.subr.mxu0 0.0
          %4223 = vmatpush1.msra.mxu0 0.0
          %4224 = vmatprep.subr.mxu0 0.0
          %4225 = vmatpush1.msra.mxu0 0.0
          %4226 = vmatprep.subr.mxu0 0.0
          %4227 = vmatpush1.msra.mxu0 0.0
          %4228 = vmatprep.subr.mxu0 0.0
          %4229 = vmatpush1.msra.mxu0 0.0
          %4230 = vmatprep.subr.mxu0 0.0
          %4231 = vmatpush1.msra.mxu0 0.0
          %4232 = vmatprep.subr.mxu0 0.0
          %4233 = vmatpush1.msra.mxu0 0.0
          %4234 = vmatprep.subr.mxu0 0.0
          %4235 = vmatpush1.msra.mxu0 0.0
          %4236 = vmatprep.subr.mxu0 0.0
          %4237 = vmatpush1.msra.mxu0 0.0
          %4238 = vmatprep.subr.mxu0 0.0
          %4239 = vmatpush1.msra.mxu0 0.0
          %4240 = vmatprep.subr.mxu0 0.0
          %4241 = vmatpush1.msra.mxu0 0.0
          %4242 = vmatprep.subr.mxu0 0.0
          %4243 = vmatpush1.msra.mxu0 0.0
          %4244 = vmatprep.subr.mxu0 0.0
          %4245 = vmatpush1.msra.mxu0 0.0
          %4246 = vmatprep.subr.mxu0 0.0
          %4247 = vmatpush1.msra.mxu0 0.0
          %4248 = vmatprep.subr.mxu0 0.0
          %4249 = vmatpush1.msra.mxu0 0.0
          %4250 = vmatprep.subr.mxu0 0.0
          %4251 = vmatpush1.msra.mxu0 0.0
          %4252 = vmatprep.subr.mxu0 0.0
          %4253 = vmatpush1.msra.mxu0 0.0
          %4254 = vmatprep.subr.mxu0 0.0
          %4255 = vmatpush1.msra.mxu0 0.0
          %4256 = vmatprep.mubr.f32.mxu0 0.0
          %4257 = vmatmul.mubr.f32.gmra.mrb[0].mxu0 %v4190
          %v4258 = vpop.f32.mrb[0].mxu0
          %v4259 = vadd.f32 0.0, %v4258
          %v4260 = vpop.f32.mrb[0].mxu0
          %4261 = vdwg.mxu0
          %v4263 = vsel %vm580, %v4259, 0
          %4265 = vmatprep.subr.mxu0 0.0
          %4266 = vmatpush1.msra.mxu0 %v1885
          %4267 = vmatprep.subr.mxu0 0.0
          %4268 = vmatpush1.msra.mxu0 %v3768
          %4269 = vmatprep.subr.mxu0 0.0
          %4270 = vmatpush1.msra.mxu0 0.0
          %4271 = vmatprep.subr.mxu0 0.0
          %4272 = vmatpush1.msra.mxu0 0.0
          %4273 = vmatprep.subr.mxu0 0.0
          %4274 = vmatpush1.msra.mxu0 0.0
          %4275 = vmatprep.subr.mxu0 0.0
          %4276 = vmatpush1.msra.mxu0 0.0
          %4277 = vmatprep.subr.mxu0 0.0
          %4278 = vmatpush1.msra.mxu0 0.0
          %4279 = vmatprep.subr.mxu0 0.0
          %4280 = vmatpush1.msra.mxu0 0.0
          %4281 = vmatprep.subr.mxu0 0.0
          %4282 = vmatpush1.msra.mxu0 0.0
          %4283 = vmatprep.subr.mxu0 0.0
          %4284 = vmatpush1.msra.mxu0 0.0
          %4285 = vmatprep.subr.mxu0 0.0
          %4286 = vmatpush1.msra.mxu0 0.0
          %4287 = vmatprep.subr.mxu0 0.0
          %4288 = vmatpush1.msra.mxu0 0.0
          %4289 = vmatprep.subr.mxu0 0.0
          %4290 = vmatpush1.msra.mxu0 0.0
          %4291 = vmatprep.subr.mxu0 0.0
          %4292 = vmatpush1.msra.mxu0 0.0
          %4293 = vmatprep.subr.mxu0 0.0
          %4294 = vmatpush1.msra.mxu0 0.0
          %4295 = vmatprep.subr.mxu0 0.0
          %4296 = vmatpush1.msra.mxu0 0.0
          %4297 = vmatprep.subr.mxu0 0.0
          %4298 = vmatpush1.msra.mxu0 0.0
          %4299 = vmatprep.subr.mxu0 0.0
          %4300 = vmatpush1.msra.mxu0 0.0
          %4301 = vmatprep.subr.mxu0 0.0
          %4302 = vmatpush1.msra.mxu0 0.0
          %4303 = vmatprep.subr.mxu0 0.0
          %4304 = vmatpush1.msra.mxu0 0.0
          %4305 = vmatprep.subr.mxu0 0.0
          %4306 = vmatpush1.msra.mxu0 0.0
          %4307 = vmatprep.subr.mxu0 0.0
          %4308 = vmatpush1.msra.mxu0 0.0
          %4309 = vmatprep.subr.mxu0 0.0
          %4310 = vmatpush1.msra.mxu0 0.0
          %4311 = vmatprep.subr.mxu0 0.0
          %4312 = vmatpush1.msra.mxu0 0.0
          %4313 = vmatprep.subr.mxu0 0.0
          %4314 = vmatpush1.msra.mxu0 0.0
          %4315 = vmatprep.subr.mxu0 0.0
          %4316 = vmatpush1.msra.mxu0 0.0
          %4317 = vmatprep.subr.mxu0 0.0
          %4318 = vmatpush1.msra.mxu0 0.0
          %4319 = vmatprep.subr.mxu0 0.0
          %4320 = vmatpush1.msra.mxu0 0.0
          %4321 = vmatprep.subr.mxu0 0.0
          %4322 = vmatpush1.msra.mxu0 0.0
          %4323 = vmatprep.subr.mxu0 0.0
          %4324 = vmatpush1.msra.mxu0 0.0
          %4325 = vmatprep.subr.mxu0 0.0
          %4326 = vmatpush1.msra.mxu0 0.0
          %4327 = vmatprep.subr.mxu0 0.0
          %4328 = vmatpush1.msra.mxu0 0.0
          %4329 = vmatprep.mubr.f32.mxu0 0.0
          %4330 = vmatmul.mubr.f32.gmra.mrb[0].mxu0 %v4263
          %v4331 = vpop.f32.mrb[0].mxu0
          %v4332 = vadd.f32 0.0, %v4331
          %v4333 = vpop.f32.mrb[0].mxu0
          %4334 = vdwg.mxu0
          %v4336 = vsel %vm580, %v4183, 0
          %4338 = vmatprep.subr.mxu0 0.0
          %4339 = vmatpush1.msra.mxu0 %v1881
          %4340 = vmatprep.subr.mxu0 0.0
          %4341 = vmatpush1.msra.mxu0 %v3764
          %4342 = vmatprep.subr.mxu0 0.0
          %4343 = vmatpush1.msra.mxu0 0.0
          %4344 = vmatprep.subr.mxu0 0.0
          %4345 = vmatpush1.msra.mxu0 0.0
          %4346 = vmatprep.subr.mxu0 0.0
          %4347 = vmatpush1.msra.mxu0 0.0
          %4348 = vmatprep.subr.mxu0 0.0
          %4349 = vmatpush1.msra.mxu0 0.0
          %4350 = vmatprep.subr.mxu0 0.0
          %4351 = vmatpush1.msra.mxu0 0.0
          %4352 = vmatprep.subr.mxu0 0.0
          %4353 = vmatpush1.msra.mxu0 0.0
          %4354 = vmatprep.subr.mxu0 0.0
          %4355 = vmatpush1.msra.mxu0 0.0
          %4356 = vmatprep.subr.mxu0 0.0
          %4357 = vmatpush1.msra.mxu0 0.0
          %4358 = vmatprep.subr.mxu0 0.0
          %4359 = vmatpush1.msra.mxu0 0.0
          %4360 = vmatprep.subr.mxu0 0.0
          %4361 = vmatpush1.msra.mxu0 0.0
          %4362 = vmatprep.subr.mxu0 0.0
          %4363 = vmatpush1.msra.mxu0 0.0
          %4364 = vmatprep.subr.mxu0 0.0
          %4365 = vmatpush1.msra.mxu0 0.0
          %4366 = vmatprep.subr.mxu0 0.0
          %4367 = vmatpush1.msra.mxu0 0.0
          %4368 = vmatprep.subr.mxu0 0.0
          %4369 = vmatpush1.msra.mxu0 0.0
          %4370 = vmatprep.subr.mxu0 0.0
          %4371 = vmatpush1.msra.mxu0 0.0
          %4372 = vmatprep.subr.mxu0 0.0
          %4373 = vmatpush1.msra.mxu0 0.0
          %4374 = vmatprep.subr.mxu0 0.0
          %4375 = vmatpush1.msra.mxu0 0.0
          %4376 = vmatprep.subr.mxu0 0.0
          %4377 = vmatpush1.msra.mxu0 0.0
          %4378 = vmatprep.subr.mxu0 0.0
          %4379 = vmatpush1.msra.mxu0 0.0
          %4380 = vmatprep.subr.mxu0 0.0
          %4381 = vmatpush1.msra.mxu0 0.0
          %4382 = vmatprep.subr.mxu0 0.0
          %4383 = vmatpush1.msra.mxu0 0.0
          %4384 = vmatprep.subr.mxu0 0.0
          %4385 = vmatpush1.msra.mxu0 0.0
          %4386 = vmatprep.subr.mxu0 0.0
          %4387 = vmatpush1.msra.mxu0 0.0
          %4388 = vmatprep.subr.mxu0 0.0
          %4389 = vmatpush1.msra.mxu0 0.0
          %4390 = vmatprep.subr.mxu0 0.0
          %4391 = vmatpush1.msra.mxu0 0.0
          %4392 = vmatprep.subr.mxu0 0.0
          %4393 = vmatpush1.msra.mxu0 0.0
          %4394 = vmatprep.subr.mxu0 0.0
          %4395 = vmatpush1.msra.mxu0 0.0
          %4396 = vmatprep.subr.mxu0 0.0
          %4397 = vmatpush1.msra.mxu0 0.0
          %4398 = vmatprep.subr.mxu0 0.0
          %4399 = vmatpush1.msra.mxu0 0.0
          %4400 = vmatprep.subr.mxu0 0.0
          %4401 = vmatpush1.msra.mxu0 0.0
          %4402 = vmatprep.mubr.f32.mxu0 0.0
          %4403 = vmatmul.mubr.f32.gmra.mrb[0].mxu0 %v4336
          %v4404 = vpop.f32.mrb[0].mxu0
          %v4405 = vadd.f32 %v4332, %v4404
          %v4406 = vpop.f32.mrb[0].mxu0
          %4407 = vdwg.mxu0
          %s4408 = sadd.s32 %s4105, 1
          %v4409 = vtanh.pop %v4405
          %s4410 = scalar_lea.vmem %s379, %s4408 [#allocation5]
          %4411 = vst.msk [vmem:[%s4410] sm:$0x1] %vm4108, %v4409
        $region83: #{generator_forward.1} parent=63 // loop_footer
          %s3774 = sadd.s32 1, %s3770
        $region84: #{generator_forward.1} parent=63 // loop_footer_branch
          %3769 = sbr.rel target = $region80
        $region85: #{generator_forward.1} parent=63 // loop_exit
          _
        %s4412 = sand.u32 %s269, 1
        %s4413 = scalar_lea.sflag [#allocation6], %s4412
        %s4414 = sand.u32 %s269, 1
        %s4415 = smul.addr %s4414, 32
        %s4416 = scalar_lea.vmem [#allocation5], %s4415
        // Predicated region
        $region86: #{generator_forward.1} parent=63 // pred_check
          %p4417 = pneg %p279
        $region87: #{generator_forward.1} parent=63 // pred_check_branch
          %4419 = sbr.rel (%p4417) target = $region89
        $region88: #{generator_forward.1} parent=63 // pred_region
          %s4421 = ssub.s32 512, 512
          %4422 = vsyncadd %s4413, %s4421
          %s4423 = smul.addr %s25, 32
          %s4424 = smul.addr %s4423, 16
          %s4425 = scalar_lea.hbm %s11, %s4424
          %s4426 = sshll.u32 %s4416, 4
          %s4427 = int_to_ptr.vmem [resolvable:$true] %s4426
          %4432 = dma.vmem_to_hbm [thread:$0]  %s4427, 512, %s4425, %s4413, 16, 16, 1
        $region89: #{generator_forward.1} parent=63 // pred_fallthru
          _
      $region64: #{generator_forward.1} parent=5 // pred_fallthru
        _
      %p4433 = scmp.le.s32.totalorder 2, %s20
      // Predicated region
      $region90: #{generator_forward.1} parent=5 // pred_check
        %p4434 = pneg %p4433
      $region91: #{generator_forward.1} parent=5 // pred_check_branch
        %4436 = sbr.rel (%p4434) target = $region93
      $region92: #{generator_forward.1} parent=5 // pred_region
        %s4437 = ssub.s32 %s20, 2
        // Predicated region
        $region94: #{generator_forward.1} parent=92 // pred_check
          %p4438 = pneg %p285
        $region95: #{generator_forward.1} parent=92 // pred_check_branch
          %4440 = sbr.rel (%p4438) target = $region97
        $region96: #{generator_forward.1} parent=92 // pred_region
          %s4441 = sand.u32 %s270, 1
          %s4442 = scalar_lea.sflag [#allocation6], %s4441
          %s4443 = sand.u32 %s270, 1
          %s4444 = smul.addr %s4443, 32
          %s4445 = scalar_lea.vmem [#allocation5], %s4444
          %4446 = dma.done %s4442, 512
        $region97: #{generator_forward.1} parent=92 // pred_fallthru
          _
      $region93: #{generator_forward.1} parent=5 // pred_fallthru
        _
    $region6: #{generator_forward.1} parent=1 // loop_footer
      %s24 = sadd.s32 1, %s20
    $region7: #{generator_forward.1} parent=1 // loop_footer_branch
      %19 = sbr.rel target = $region3
    $region8: #{generator_forward.1} parent=1 // loop_exit
      _
    %4447 = vsyncpa [#allocation6], 1
    %s4448 = scalar_lea.sflag [#allocation6], 1
    %4449 = vsyncpa %s4448, 1

</llo_original>
